<compile_context>
chip_gen: v7x
topology: tpu7x:2x2x1
jax: 0.10.0
libtpu: 0.0.40
codegen_flags: <defaults>
</compile_context>

<pallas_src>
import functools
import math

import jax
import jax.numpy as jnp
from jax.experimental import pallas as pl
from jax.experimental.pallas import tpu as pltpu


def calc_same_padding(kernel_size):
    pad = kernel_size // 2
    return (pad, pad - (kernel_size + 1) % 2)


def _round_up(v, m):
    return ((v + m - 1) // m) * m


def _pick_tile_n(N, HL, HR, target=512):
    """Largest time tile <= target that divides N and is a multiple of HL, HR."""
    m = (HL * HR) // math.gcd(HL, HR)
    m = max(m, 8)
    cands = [t for t in range(m, N + 1, m) if N % t == 0]
    if not cands:
        raise ValueError(f"no valid time tile for N={N}, HL={HL}, HR={HR}")
    under = [t for t in cands if t <= target]
    return max(under) if under else min(cands)


def _conformer_conv_kernel(
    xc_ref,     # (1, TN, D)   center time tile, f32
    xl_ref,     # (1, HL, D)   left-halo rows (clamped copy at t == 0)
    xr_ref,     # (1, HR, D)   right-halo rows (clamped copy at t == T-1)
    w1_ref,     # (D, 2*inner) bf16, LN-gamma folded (merged GLU weight)
    b1_ref,     # (1, 2*inner) f32, LN-beta folded
    wexp_ref,   # (M, H, inner) f32, depthwise taps expanded per out-sublane, BN folded
    bdw_ref,    # (1, inner)   f32, BN-folded depthwise bias
    w2_ref,     # (inner, D)   bf16
    b2_ref,     # (1, D)       f32
    o_ref,      # (1, TN, D)   f32
    g_scr,      # (W, inner)   f32 scratch (post-GLU activations, halo incl.)
    h_scr,      # (TN, inner)  f32 scratch (post-depthwise, post-Swish)
    *,
    kernel_size,
    pad_left,
    halo_left,
    halo_right,
    tile_n,
    chunk_h,
):
    t = pl.program_id(1)
    last_t = pl.num_programs(1) - 1
    TN, HL, HR = tile_n, halo_left, halo_right
    K, H = kernel_size, chunk_h
    M = H + K - 1                      # input rows feeding one H-row output chunk
    base = HL - pad_left               # window row of tap 0 for output row 0
    inner = w2_ref.shape[0]

    # --- time window (left halo | center | right halo), channels-last ---
    xw = jnp.concatenate([xl_ref[0], xc_ref[0], xr_ref[0]], axis=0)     # (W, D)

    # --- LayerNorm (eps=1e-5); gamma/beta folded into w1/b1 on the host ---
    mean = jnp.mean(xw, axis=-1, keepdims=True)
    var = jnp.mean((xw - mean) ** 2, axis=-1, keepdims=True)
    xn = ((xw - mean) * jax.lax.rsqrt(var + 1e-5)).astype(jnp.bfloat16)  # MXU operand

    # --- merged pointwise Conv1d(dim -> 2*inner) + GLU (one MXU pass) ---
    y1 = jnp.dot(xn, w1_ref[...], preferred_element_type=jnp.float32) + b1_ref[...]
    gate = y1[:, inner:]                         # lane-aligned slice (inner % 128 == 0)
    sig = 0.5 * (jnp.tanh(0.5 * gate) + 1.0)     # sigmoid via a single EUP tanh
    g_scr[...] = y1[:, :inner] * sig             # (W, inner) f32

    # --- zero out-of-sequence halo rows (the F.pad zeros), boundary tiles only ---
    @pl.when(t == 0)
    def _():
        g_scr[pl.ds(0, HL), :] = jnp.zeros((HL, inner), jnp.float32)

    @pl.when(t == last_t)
    def _():
        g_scr[pl.ds(HL + TN, HR), :] = jnp.zeros((HR, inner), jnp.float32)

    # --- depthwise Conv1d along time (+ folded BN, + Swish) ---
    # H-row output chunks: the (H, inner) accumulators stay in vregs across all
    # taps; shifts live in the host-expanded weights, so every access is a
    # single-row load or an (8,128)-aligned block (no misaligned sublane slices).
    bdw_b = jnp.broadcast_to(bdw_ref[...], (H, inner))          # hoisted once
    zeros_b = jnp.zeros((H, inner), jnp.float32)                 # hoisted once

    @pl.loop(0, TN // H)
    def _(c):
        row0 = c * H + base
        acc0 = bdw_b                     # two accumulators -> shorter add chain
        acc1 = zeros_b
        for m in range(M):               # static, fully unrolled (LLO visibility)
            grow = g_scr[pl.ds(row0 + m, 1), :]          # (1, inner) row
            term = grow * wexp_ref[m]                    # bcast across H sublanes
            if m % 2 == 0:
                acc0 = acc0 + term
            else:
                acc1 = acc1 + term
        acc = acc0 + acc1
        # Swish: x * sigmoid(x); BatchNorm(eval) already folded into wexp/bdw.
        hs = acc * (0.5 * (jnp.tanh(0.5 * acc) + 1.0))
        h_scr[pl.ds(pl.multiple_of(c * H, H), H), :] = hs

    # --- pointwise Conv1d(inner -> dim) ---
    y2 = jnp.dot(h_scr[...].astype(jnp.bfloat16), w2_ref[...],
                 preferred_element_type=jnp.float32) + b2_ref[...]
    o_ref[0] = y2.astype(o_ref.dtype)    # Dropout(p=0.0) is identity


def conformer_conv_module(x, params, *, kernel_size, tile_n=None, chunk_h=8):
    """x: (B, N, D) float32. Returns (B, N, D) float32."""
    B, N, D = x.shape
    inner = params["w2"].shape[0]
    pad_left, pad_right = calc_same_padding(kernel_size)
    assert pad_left + pad_right == kernel_size - 1

    # 8-aligned halo block sizes covering the conv padding.
    HL = _round_up(max(pad_left, 1), 8)
    HR = _round_up(max(pad_right, 1), 8)
    if tile_n is None:
        tile_n = _pick_tile_n(N, HL, HR)
    assert N % tile_n == 0, "N must be a multiple of tile_n"
    assert tile_n % HL == 0 and tile_n % HR == 0
    assert chunk_h % 8 == 0 and tile_n % chunk_h == 0

    T = N // tile_n
    lpb = tile_n // HL          # left-halo blocks per time tile
    rpb = tile_n // HR          # right-halo blocks per time tile
    n_rblk = N // HR
    W = HL + tile_n + HR
    H = chunk_h
    M = H + kernel_size - 1

    # ---- host-side constant folding (free at runtime) ----
    ln_g, ln_b = params["ln_g"], params["ln_b"]
    w1, b1 = params["w1"], params["b1"]
    w1f = (w1 * ln_g[0][:, None]).astype(jnp.bfloat16)   # fold LN gamma, bf16 for MXU
    b1f = (b1 + ln_b @ w1).astype(jnp.float32)           # fold LN beta
    wdw = params["w_dw"] * params["bn_scale"]            # fold BN scale into taps
    bdw = (params["b_dw"] * params["bn_scale"] + params["bn_shift"]).astype(jnp.float32)
    w2 = params["w2"].astype(jnp.bfloat16)
    b2 = params["b2"]

    # Expanded depthwise taps: wexp[m, s, :] = wdw[m - s, :] for 0 <= m - s < K else 0.
    m_idx = jnp.arange(M)[:, None]
    s_idx = jnp.arange(H)[None, :]
    k_idx = m_idx - s_idx
    valid = (k_idx >= 0) & (k_idx < kernel_size)
    wexp = jnp.where(valid[:, :, None],
                     wdw[jnp.clip(k_idx, 0, kernel_size - 1)],
                     0.0).astype(jnp.float32)             # (M, H, inner)

    def rep(shape):
        # replicated (full-array) block, same tile for every grid step
        return pl.BlockSpec(shape, lambda b, t: tuple(0 for _ in shape))

    kernel = functools.partial(
        _conformer_conv_kernel,
        kernel_size=kernel_size, pad_left=pad_left,
        halo_left=HL, halo_right=HR, tile_n=tile_n, chunk_h=H)

    # Advisory cost estimate for XLA's scheduler.
    rows_eff = B * (N + T * (HL + HR))                     # incl. halo recompute
    flops = (2 * rows_eff * D * (2 * inner)                # merged GLU matmul
             + 2 * B * N * inner * D                       # final projection
             + 2 * B * N * inner * M)                      # depthwise (chunked)
    transcendentals = rows_eff * inner + B * N * inner     # gate tanh + swish tanh
    bytes_weights = (2 * (w1f.size + w2.size)
                     + 4 * (b1f.size + wexp.size + bdw.size + b2.size))
    bytes_accessed = int(4 * x.size * (1 + (HL + HR) / tile_n)   # x + halos
                         + 4 * x.size                            # output
                         + bytes_weights)

    # ---- explicit VMEM budget (review: v7x 64 MiB physical / v5e 16 MiB scoped) ----
    bytes_io = (tile_n + HL + HR) * D * 4 + tile_n * D * 4          # one copy of in/out
    bytes_scr = W * inner * 4 + tile_n * inner * 4                  # g_scr + h_scr
    bytes_live = W * (2 * inner) * 4 * 2                            # y1/g value temps
    est = 2 * (bytes_io + bytes_weights) + bytes_scr + bytes_live   # x2 = double buffering
    vmem_limit = int(min(max(2 * est, 32 << 20), 64 << 20))

    grid_spec = pltpu.PrefetchScalarGridSpec(
        num_scalar_prefetch=0,
        grid=(B, T),
        in_specs=[
            # center tile
            pl.BlockSpec((1, tile_n, D), lambda b, t: (b, t, 0)),
            # left halo rows [t*TN - HL, t*TN); clamped (and later zeroed) at t == 0
            pl.BlockSpec((1, HL, D),
                         lambda b, t: (b, jnp.maximum(t * lpb - 1, 0), 0)),
            # right halo rows [(t+1)*TN, (t+1)*TN + HR); clamped at t == T-1
            pl.BlockSpec((1, HR, D),
                         lambda b, t: (b, jnp.minimum((t + 1) * rpb, n_rblk - 1), 0)),
            rep((D, 2 * inner)),        # merged GLU weight, bf16
            rep((1, 2 * inner)),        # merged GLU bias
            rep((M, H, inner)),         # expanded depthwise taps (BN folded)
            rep((1, inner)),            # depthwise bias (BN folded)
            rep((inner, D)),            # w2, bf16
            rep((1, D)),                # b2
        ],
        out_specs=pl.BlockSpec((1, tile_n, D), lambda b, t: (b, t, 0)),
        scratch_shapes=[
            pltpu.VMEM((W, inner), jnp.float32),        # g (post-GLU, with halo)
            pltpu.VMEM((tile_n, inner), jnp.float32),   # h (post-depthwise/Swish)
        ],
    )

    return pl.pallas_call(
        kernel,
        out_shape=jax.ShapeDtypeStruct((B, N, D), jnp.float32),
        grid_spec=grid_spec,
        compiler_params=pltpu.CompilerParams(
            dimension_semantics=("parallel", "parallel"),
            vmem_limit_bytes=vmem_limit),
        cost_estimate=pl.CostEstimate(
            flops=int(flops),
            transcendentals=int(transcendentals),
            bytes_accessed=int(bytes_accessed)),
    )(x, x, x, w1f, b1f, wexp, bdw, w2, b2)


def reference_jax(x, params, *, kernel_size):
    """Pure-JAX f32 reference mirroring the PyTorch forward (channels-last)."""
    inner = params["w2"].shape[0]
    pad_left, pad_right = calc_same_padding(kernel_size)

    mean = jnp.mean(x, axis=-1, keepdims=True)
    var = jnp.mean((x - mean) ** 2, axis=-1, keepdims=True)
    xn = (x - mean) / jnp.sqrt(var + 1e-5)
    xn = xn * params["ln_g"][0] + params["ln_b"][0]

    y1 = xn @ params["w1"] + params["b1"][0]
    g = y1[..., :inner] * jax.nn.sigmoid(y1[..., inner:])

    gp = jnp.pad(g, ((0, 0), (pad_left, pad_right), (0, 0)))
    N = x.shape[1]
    h = jnp.zeros_like(g)
    for k in range(kernel_size):
        h = h + gp[:, k:k + N, :] * params["w_dw"][k]
    h = h + params["b_dw"][0]

    h = h * params["bn_scale"][0] + params["bn_shift"][0]
    h = h * jax.nn.sigmoid(h)
    return h @ params["w2"] + params["b2"][0]


def make_params(key, dim, inner, kernel_size):
    ks = jax.random.split(key, 10)
    p = {}
    p["ln_g"] = (1.0 + 0.1 * jax.random.normal(ks[0], (1, dim))).astype(jnp.float32)
    p["ln_b"] = (0.1 * jax.random.normal(ks[1], (1, dim))).astype(jnp.float32)
    # Conv1d(dim, 2*inner, 1): torch weight (2*inner, dim, 1) -> matmul (dim, 2*inner)
    p["w1"] = (0.1 * jax.random.normal(ks[2], (dim, 2 * inner))).astype(jnp.float32)
    p["b1"] = (0.05 * jax.random.normal(ks[3], (1, 2 * inner))).astype(jnp.float32)
    # Depthwise Conv1d: torch weight (inner, 1, K) -> (K, inner) channels-last taps
    p["w_dw"] = (0.2 * jax.random.normal(ks[4], (kernel_size, inner))).astype(jnp.float32)
    p["b_dw"] = (0.05 * jax.random.normal(ks[5], (1, inner))).astype(jnp.float32)
    # BatchNorm1d (eval): fold (gamma, beta, running_mean, running_var) into scale/shift
    gamma = (1.0 + 0.1 * jax.random.normal(ks[6], (1, inner))).astype(jnp.float32)
    beta = (0.1 * jax.random.normal(ks[7], (1, inner))).astype(jnp.float32)
    run_mean = (0.05 * jax.random.normal(ks[8], (1, inner))).astype(jnp.float32)
    run_var = (1.0 + 0.1 * jax.random.uniform(ks[9], (1, inner))).astype(jnp.float32)
    scale = gamma / jnp.sqrt(run_var + 1e-5)
    p["bn_scale"] = scale
    p["bn_shift"] = beta - run_mean * scale
    # Conv1d(inner, dim, 1): torch weight (dim, inner, 1) -> matmul (inner, dim)
    k2a, k2b = jax.random.split(ks[0])
    p["w2"] = (0.1 * jax.random.normal(k2a, (inner, dim))).astype(jnp.float32)
    p["b2"] = (0.05 * jax.random.normal(k2b, (1, dim))).astype(jnp.float32)
    return p


if __name__ == "__main__":
    # Small but TPU-aligned shapes: lanes = 128, time tiled at 256 -> grid (2, 2)
    # (>= 4 steps so both v7x TensorCores get work and the pipeline can overlap).
    B, N, DIM = 2, 512, 128
    EXPANSION = 2
    KERNEL_SIZE = 31
    INNER = DIM * EXPANSION

    key = jax.random.PRNGKey(0)
    kx, kp = jax.random.split(key)
    x = jax.random.normal(kx, (B, N, DIM), dtype=jnp.float32)
    params = make_params(kp, DIM, INNER, KERNEL_SIZE)

    out = conformer_conv_module(x, params, kernel_size=KERNEL_SIZE, tile_n=256)
    out = jax.block_until_ready(out)

    ref = reference_jax(x, params, kernel_size=KERNEL_SIZE)
    assert out.shape == (B, N, DIM)
    max_err = float(jnp.max(jnp.abs(out - ref)))
    # bf16 MXU operands -> compare against the f32 reference with a loose tolerance.
    assert jnp.allclose(out, ref, atol=5e-2, rtol=5e-2), max_err
    print("KERNEL_OK")
</pallas_src>

<mosaic_0001>
module attributes {stable_mosaic.version = 11 : i64} {
  func.func @_conformer_conv_kernel(%arg0: i32, %arg1: i32, %arg2: memref<1x256x128xf32, #tpu.memory_space<vmem>>, %arg3: memref<1x16x128xf32, #tpu.memory_space<vmem>>, %arg4: memref<1x16x128xf32, #tpu.memory_space<vmem>>, %arg5: memref<128x512xbf16, #tpu.memory_space<vmem>>, %arg6: memref<1x512xf32, #tpu.memory_space<vmem>>, %arg7: memref<38x8x256xf32, #tpu.memory_space<vmem>>, %arg8: memref<1x256xf32, #tpu.memory_space<vmem>>, %arg9: memref<256x128xbf16, #tpu.memory_space<vmem>>, %arg10: memref<1x128xf32, #tpu.memory_space<vmem>>, %arg11: memref<1x256x128xf32, #tpu.memory_space<vmem>>, %arg12: memref<288x256xf32, #tpu.memory_space<vmem>>, %arg13: memref<256x256xf32, #tpu.memory_space<vmem>>) attributes {dimension_semantics = [#tpu.dimension_semantics<parallel>, #tpu.dimension_semantics<parallel>], iteration_bounds = array<i64: 2, 2>, scalar_prefetch = 0 : i64, scratch_operands = 2 : i64, tpu.core_type = #tpu.core_type<tc>, window_params = [{transform_indices = @transform_0, window_bounds = array<i64: 1, 256, 128>}, {transform_indices = @transform_1, window_bounds = array<i64: 1, 16, 128>}, {transform_indices = @transform_2, window_bounds = array<i64: 1, 16, 128>}, {pipeline_mode = #tpu.pipeline_mode<synchronous>, transform_indices = @transform_3, window_bounds = array<i64: 128, 512>}, {pipeline_mode = #tpu.pipeline_mode<synchronous>, transform_indices = @transform_4, window_bounds = array<i64: 1, 512>}, {pipeline_mode = #tpu.pipeline_mode<synchronous>, transform_indices = @transform_5, window_bounds = array<i64: 38, 8, 256>}, {pipeline_mode = #tpu.pipeline_mode<synchronous>, transform_indices = @transform_6, window_bounds = array<i64: 1, 256>}, {pipeline_mode = #tpu.pipeline_mode<synchronous>, transform_indices = @transform_7, window_bounds = array<i64: 256, 128>}, {pipeline_mode = #tpu.pipeline_mode<synchronous>, transform_indices = @transform_8, window_bounds = array<i64: 1, 128>}, {transform_indices = @transform_9, window_bounds = array<i64: 1, 256, 128>}]} {
    %c0 = arith.constant 0 : index
    %c0_0 = arith.constant 0 : index
    %c0_1 = arith.constant 0 : index
    %0 = vector.load %arg3[%c0, %c0_0, %c0_1] : memref<1x16x128xf32, #tpu.memory_space<vmem>>, vector<1x16x128xf32>
    %1 = vector.shape_cast %0 : vector<1x16x128xf32> to vector<16x128xf32>
    %c0_2 = arith.constant 0 : index
    %c0_3 = arith.constant 0 : index
    %c0_4 = arith.constant 0 : index
    %2 = vector.load %arg2[%c0_2, %c0_3, %c0_4] : memref<1x256x128xf32, #tpu.memory_space<vmem>>, vector<1x256x128xf32>
    %3 = vector.shape_cast %2 : vector<1x256x128xf32> to vector<256x128xf32>
    %c0_5 = arith.constant 0 : index
    %c0_6 = arith.constant 0 : index
    %c0_7 = arith.constant 0 : index
    %4 = vector.load %arg4[%c0_5, %c0_6, %c0_7] : memref<1x16x128xf32, #tpu.memory_space<vmem>>, vector<1x16x128xf32>
    %5 = vector.shape_cast %4 : vector<1x16x128xf32> to vector<16x128xf32>
    %6 = tpu.concatenate %1, %3, %5 in 0 : vector<16x128xf32>, vector<256x128xf32>, vector<16x128xf32> -> vector<288x128xf32>
    %cst = arith.constant dense<0.000000e+00> : vector<288xf32>
    %7 = vector.multi_reduction <add>, %6, %cst [1] : vector<288x128xf32> to vector<288xf32>
    %8 = vector.shape_cast %7 : vector<288xf32> to vector<288x1xf32>
    %cst_8 = arith.constant 1.280000e+02 : f32
    %9 = vector.broadcast %cst_8 : f32 to vector<288x1xf32>
    %10 = arith.divf %8, %9 : vector<288x1xf32>
    %11 = vector.broadcast %10 : vector<288x1xf32> to vector<288x128xf32>
    %12 = arith.subf %6, %11 : vector<288x128xf32>
    %13 = arith.mulf %12, %12 : vector<288x128xf32>
    %cst_9 = arith.constant dense<0.000000e+00> : vector<288xf32>
    %14 = vector.multi_reduction <add>, %13, %cst_9 [1] : vector<288x128xf32> to vector<288xf32>
    %15 = vector.shape_cast %14 : vector<288xf32> to vector<288x1xf32>
    %cst_10 = arith.constant 1.280000e+02 : f32
    %16 = vector.broadcast %cst_10 : f32 to vector<288x1xf32>
    %17 = arith.divf %15, %16 : vector<288x1xf32>
    %18 = vector.broadcast %10 : vector<288x1xf32> to vector<288x128xf32>
    %19 = arith.subf %6, %18 : vector<288x128xf32>
    %cst_11 = arith.constant 9.99999974E-6 : f32
    %20 = vector.broadcast %cst_11 : f32 to vector<288x1xf32>
    %21 = arith.addf %17, %20 : vector<288x1xf32>
    %22 = math.rsqrt %21 : vector<288x1xf32>
    %23 = vector.broadcast %22 : vector<288x1xf32> to vector<288x128xf32>
    %24 = arith.mulf %19, %23 : vector<288x128xf32>
    %25 = arith.truncf %24 : vector<288x128xf32> to vector<288x128xbf16>
    %c0_12 = arith.constant 0 : index
    %c0_13 = arith.constant 0 : index
    %26 = vector.load %arg5[%c0_12, %c0_13] : memref<128x512xbf16, #tpu.memory_space<vmem>>, vector<128x512xbf16>
    %cst_14 = arith.constant dense<0.000000e+00> : vector<288x512xf32>
    %27 = tpu.matmul %25, %26, %cst_14 {dimension_numbers = #tpu.dot_dimension_numbers<[1], [0], [0], [1], [0, 0, 1, 1], [], []>} : vector<288x128xbf16>, vector<128x512xbf16>, vector<288x512xf32> -> vector<288x512xf32>
    %c0_15 = arith.constant 0 : index
    %c0_16 = arith.constant 0 : index
    %28 = vector.load %arg6[%c0_15, %c0_16] : memref<1x512xf32, #tpu.memory_space<vmem>>, vector<1x512xf32>
    %29 = vector.broadcast %28 : vector<1x512xf32> to vector<288x512xf32>
    %30 = arith.addf %27, %29 : vector<288x512xf32>
    %31 = vector.extract_strided_slice %30 {offsets = [0, 256], sizes = [288, 256], strides = [1, 1]} : vector<288x512xf32> to vector<288x256xf32>
    %cst_17 = arith.constant 5.000000e-01 : f32
    %32 = vector.broadcast %cst_17 : f32 to vector<288x256xf32>
    %33 = arith.mulf %32, %31 : vector<288x256xf32>
    %34 = math.tanh %33 : vector<288x256xf32>
    %cst_18 = arith.constant 1.000000e+00 : f32
    %35 = vector.broadcast %cst_18 : f32 to vector<288x256xf32>
    %36 = arith.addf %34, %35 : vector<288x256xf32>
    %cst_19 = arith.constant 5.000000e-01 : f32
    %37 = vector.broadcast %cst_19 : f32 to vector<288x256xf32>
    %38 = arith.mulf %37, %36 : vector<288x256xf32>
    %39 = vector.extract_strided_slice %30 {offsets = [0, 0], sizes = [288, 256], strides = [1, 1]} : vector<288x512xf32> to vector<288x256xf32>
    %40 = arith.mulf %39, %38 : vector<288x256xf32>
    %c0_20 = arith.constant 0 : index
    %c0_21 = arith.constant 0 : index
    %41 = vector.load %arg12[%c0_20, %c0_21] : memref<288x256xf32, #tpu.memory_space<vmem>>, vector<288x256xf32>
    tpu.vector_store %arg12[%c0_20, %c0_21], %40 {strides = array<i32>} : memref<288x256xf32, #tpu.memory_space<vmem>>, vector<288x256xf32>,
    %c0_i32 = arith.constant 0 : i32
    %42 = arith.cmpi eq, %arg1, %c0_i32 : i32
    %43 = arith.extui %42 : i1 to i32
    %c0_i32_22 = arith.constant 0 : i32
    %44 = arith.cmpi ne, %43, %c0_i32_22 : i32
    scf.if %44 {
      %cst_40 = arith.constant 0.000000e+00 : f32
      %63 = vector.broadcast %cst_40 : f32 to vector<16x256xf32>
      %c0_41 = arith.constant 0 : index
      %c0_42 = arith.constant 0 : index
      %64 = vector.load %arg12[%c0_41, %c0_42] : memref<288x256xf32, #tpu.memory_space<vmem>>, vector<16x256xf32>
      tpu.vector_store %arg12[%c0_41, %c0_42], %63 {strides = array<i32>} : memref<288x256xf32, #tpu.memory_space<vmem>>, vector<16x256xf32>,
    } else {
    }
    %c1_i32 = arith.constant 1 : i32
    %45 = arith.cmpi eq, %arg1, %c1_i32 : i32
    %46 = arith.extui %45 : i1 to i32
    %c0_i32_23 = arith.constant 0 : i32
    %47 = arith.cmpi ne, %46, %c0_i32_23 : i32
    scf.if %47 {
      %cst_40 = arith.constant 0.000000e+00 : f32
      %63 = vector.broadcast %cst_40 : f32 to vector<16x256xf32>
      %c272 = arith.constant 272 : index
      %c0_41 = arith.constant 0 : index
      %64 = vector.load %arg12[%c272, %c0_41] : memref<288x256xf32, #tpu.memory_space<vmem>>, vector<16x256xf32>
      tpu.vector_store %arg12[%c272, %c0_41], %63 {strides = array<i32>} : memref<288x256xf32, #tpu.memory_space<vmem>>, vector<16x256xf32>,
    } else {
    }
    %c0_24 = arith.constant 0 : index
    %c0_25 = arith.constant 0 : index
    %48 = vector.load %arg8[%c0_24, %c0_25] : memref<1x256xf32, #tpu.memory_space<vmem>>, vector<1x256xf32>
    %49 = vector.shape_cast %48 : vector<1x256xf32> to vector<1x256xf32>
    %50 = vector.broadcast %49 : vector<1x256xf32> to vector<8x256xf32>
    %cst_26 = arith.constant 0.000000e+00 : f32
    %51 = vector.broadcast %cst_26 : f32 to vector<8x256xf32>
    %c0_i32_27 = arith.constant 0 : i32
    %c32_i32 = arith.constant 32 : i32
    %52 = arith.addi %c0_i32_27, %c32_i32 : i32
    %c1_i32_28 = arith.constant 1 : i32
    scf.for %arg14 = %c0_i32_27 to %52 step %c1_i32_28  : i32 {
      %c1_i32_40 = arith.constant 1 : i32
      %63 = arith.muli %arg14, %c1_i32_40 : i32
      %c0_i32_41 = arith.constant 0 : i32
      %64 = arith.addi %c0_i32_41, %63 : i32
      %c8_i32 = arith.constant 8 : i32
      %65 = arith.muli %64, %c8_i32 : i32
      %c1_i32_42 = arith.constant 1 : i32
      %66 = arith.addi %65, %c1_i32_42 : i32
      %c0_i32_43 = arith.constant 0 : i32
      %67 = arith.addi %66, %c0_i32_43 : i32
      %68 = arith.index_cast %67 : i32 to index
      %c0_44 = arith.constant 0 : index
      %69 = vector.load %arg12[%68, %c0_44] : memref<288x256xf32, #tpu.memory_space<vmem>>, vector<1x256xf32>
      %c0_45 = arith.constant 0 : index
      %c0_46 = arith.constant 0 : index
      %c0_47 = arith.constant 0 : index
      %70 = vector.load %arg7[%c0_45, %c0_46, %c0_47] : memref<38x8x256xf32, #tpu.memory_space<vmem>>, vector<1x8x256xf32>
      %71 = vector.shape_cast %70 : vector<1x8x256xf32> to vector<8x256xf32>
      %72 = vector.broadcast %69 : vector<1x256xf32> to vector<8x256xf32>
      %73 = arith.mulf %72, %71 : vector<8x256xf32>
      %74 = arith.addf %50, %73 : vector<8x256xf32>
      %c1_i32_48 = arith.constant 1 : i32
      %75 = arith.addi %66, %c1_i32_48 : i32
      %76 = arith.index_cast %75 : i32 to index
      %c0_49 = arith.constant 0 : index
      %77 = vector.load %arg12[%76, %c0_49] : memref<288x256xf32, #tpu.memory_space<vmem>>, vector<1x256xf32>
      %c1 = arith.constant 1 : index
      %c0_50 = arith.constant 0 : index
      %c0_51 = arith.constant 0 : index
      %78 = vector.load %arg7[%c1, %c0_50, %c0_51] : memref<38x8x256xf32, #tpu.memory_space<vmem>>, vector<1x8x256xf32>
      %79 = vector.shape_cast %78 : vector<1x8x256xf32> to vector<8x256xf32>
      %80 = vector.broadcast %77 : vector<1x256xf32> to vector<8x256xf32>
      %81 = arith.mulf %80, %79 : vector<8x256xf32>
      %82 = arith.addf %51, %81 : vector<8x256xf32>
      %c2_i32 = arith.constant 2 : i32
      %83 = arith.addi %66, %c2_i32 : i32
      %84 = arith.index_cast %83 : i32 to index
      %c0_52 = arith.constant 0 : index
      %85 = vector.load %arg12[%84, %c0_52] : memref<288x256xf32, #tpu.memory_space<vmem>>, vector<1x256xf32>
      %c2 = arith.constant 2 : index
      %c0_53 = arith.constant 0 : index
      %c0_54 = arith.constant 0 : index
      %86 = vector.load %arg7[%c2, %c0_53, %c0_54] : memref<38x8x256xf32, #tpu.memory_space<vmem>>, vector<1x8x256xf32>
      %87 = vector.shape_cast %86 : vector<1x8x256xf32> to vector<8x256xf32>
      %88 = vector.broadcast %85 : vector<1x256xf32> to vector<8x256xf32>
      %89 = arith.mulf %88, %87 : vector<8x256xf32>
      %90 = arith.addf %74, %89 : vector<8x256xf32>
      %c3_i32 = arith.constant 3 : i32
      %91 = arith.addi %66, %c3_i32 : i32
      %92 = arith.index_cast %91 : i32 to index
      %c0_55 = arith.constant 0 : index
      %93 = vector.load %arg12[%92, %c0_55] : memref<288x256xf32, #tpu.memory_space<vmem>>, vector<1x256xf32>
      %c3 = arith.constant 3 : index
      %c0_56 = arith.constant 0 : index
      %c0_57 = arith.constant 0 : index
      %94 = vector.load %arg7[%c3, %c0_56, %c0_57] : memref<38x8x256xf32, #tpu.memory_space<vmem>>, vector<1x8x256xf32>
      %95 = vector.shape_cast %94 : vector<1x8x256xf32> to vector<8x256xf32>
      %96 = vector.broadcast %93 : vector<1x256xf32> to vector<8x256xf32>
      %97 = arith.mulf %96, %95 : vector<8x256xf32>
      %98 = arith.addf %82, %97 : vector<8x256xf32>
      %c4_i32 = arith.constant 4 : i32
      %99 = arith.addi %66, %c4_i32 : i32
      %100 = arith.index_cast %99 : i32 to index
      %c0_58 = arith.constant 0 : index
      %101 = vector.load %arg12[%100, %c0_58] : memref<288x256xf32, #tpu.memory_space<vmem>>, vector<1x256xf32>
      %c4 = arith.constant 4 : index
      %c0_59 = arith.constant 0 : index
      %c0_60 = arith.constant 0 : index
      %102 = vector.load %arg7[%c4, %c0_59, %c0_60] : memref<38x8x256xf32, #tpu.memory_space<vmem>>, vector<1x8x256xf32>
      %103 = vector.shape_cast %102 : vector<1x8x256xf32> to vector<8x256xf32>
      %104 = vector.broadcast %101 : vector<1x256xf32> to vector<8x256xf32>
      %105 = arith.mulf %104, %103 : vector<8x256xf32>
      %106 = arith.addf %90, %105 : vector<8x256xf32>
      %c5_i32 = arith.constant 5 : i32
      %107 = arith.addi %66, %c5_i32 : i32
      %108 = arith.index_cast %107 : i32 to index
      %c0_61 = arith.constant 0 : index
      %109 = vector.load %arg12[%108, %c0_61] : memref<288x256xf32, #tpu.memory_space<vmem>>, vector<1x256xf32>
      %c5 = arith.constant 5 : index
      %c0_62 = arith.constant 0 : index
      %c0_63 = arith.constant 0 : index
      %110 = vector.load %arg7[%c5, %c0_62, %c0_63] : memref<38x8x256xf32, #tpu.memory_space<vmem>>, vector<1x8x256xf32>
      %111 = vector.shape_cast %110 : vector<1x8x256xf32> to vector<8x256xf32>
      %112 = vector.broadcast %109 : vector<1x256xf32> to vector<8x256xf32>
      %113 = arith.mulf %112, %111 : vector<8x256xf32>
      %114 = arith.addf %98, %113 : vector<8x256xf32>
      %c6_i32 = arith.constant 6 : i32
      %115 = arith.addi %66, %c6_i32 : i32
      %116 = arith.index_cast %115 : i32 to index
      %c0_64 = arith.constant 0 : index
      %117 = vector.load %arg12[%116, %c0_64] : memref<288x256xf32, #tpu.memory_space<vmem>>, vector<1x256xf32>
      %c6 = arith.constant 6 : index
      %c0_65 = arith.constant 0 : index
      %c0_66 = arith.constant 0 : index
      %118 = vector.load %arg7[%c6, %c0_65, %c0_66] : memref<38x8x256xf32, #tpu.memory_space<vmem>>, vector<1x8x256xf32>
      %119 = vector.shape_cast %118 : vector<1x8x256xf32> to vector<8x256xf32>
      %120 = vector.broadcast %117 : vector<1x256xf32> to vector<8x256xf32>
      %121 = arith.mulf %120, %119 : vector<8x256xf32>
      %122 = arith.addf %106, %121 : vector<8x256xf32>
      %c7_i32 = arith.constant 7 : i32
      %123 = arith.addi %66, %c7_i32 : i32
      %124 = arith.index_cast %123 : i32 to index
      %c0_67 = arith.constant 0 : index
      %125 = vector.load %arg12[%124, %c0_67] : memref<288x256xf32, #tpu.memory_space<vmem>>, vector<1x256xf32>
      %c7 = arith.constant 7 : index
      %c0_68 = arith.constant 0 : index
      %c0_69 = arith.constant 0 : index
      %126 = vector.load %arg7[%c7, %c0_68, %c0_69] : memref<38x8x256xf32, #tpu.memory_space<vmem>>, vector<1x8x256xf32>
      %127 = vector.shape_cast %126 : vector<1x8x256xf32> to vector<8x256xf32>
      %128 = vector.broadcast %125 : vector<1x256xf32> to vector<8x256xf32>
      %129 = arith.mulf %128, %127 : vector<8x256xf32>
      %130 = arith.addf %114, %129 : vector<8x256xf32>
      %c8_i32_70 = arith.constant 8 : i32
      %131 = arith.addi %66, %c8_i32_70 : i32
      %132 = arith.index_cast %131 : i32 to index
      %c0_71 = arith.constant 0 : index
      %133 = vector.load %arg12[%132, %c0_71] : memref<288x256xf32, #tpu.memory_space<vmem>>, vector<1x256xf32>
      %c8 = arith.constant 8 : index
      %c0_72 = arith.constant 0 : index
      %c0_73 = arith.constant 0 : index
      %134 = vector.load %arg7[%c8, %c0_72, %c0_73] : memref<38x8x256xf32, #tpu.memory_space<vmem>>, vector<1x8x256xf32>
      %135 = vector.shape_cast %134 : vector<1x8x256xf32> to vector<8x256xf32>
      %136 = vector.broadcast %133 : vector<1x256xf32> to vector<8x256xf32>
      %137 = arith.mulf %136, %135 : vector<8x256xf32>
      %138 = arith.addf %122, %137 : vector<8x256xf32>
      %c9_i32 = arith.constant 9 : i32
      %139 = arith.addi %66, %c9_i32 : i32
      %140 = arith.index_cast %139 : i32 to index
      %c0_74 = arith.constant 0 : index
      %141 = vector.load %arg12[%140, %c0_74] : memref<288x256xf32, #tpu.memory_space<vmem>>, vector<1x256xf32>
      %c9 = arith.constant 9 : index
      %c0_75 = arith.constant 0 : index
      %c0_76 = arith.constant 0 : index
      %142 = vector.load %arg7[%c9, %c0_75, %c0_76] : memref<38x8x256xf32, #tpu.memory_space<vmem>>, vector<1x8x256xf32>
      %143 = vector.shape_cast %142 : vector<1x8x256xf32> to vector<8x256xf32>
      %144 = vector.broadcast %141 : vector<1x256xf32> to vector<8x256xf32>
      %145 = arith.mulf %144, %143 : vector<8x256xf32>
      %146 = arith.addf %130, %145 : vector<8x256xf32>
      %c10_i32 = arith.constant 10 : i32
      %147 = arith.addi %66, %c10_i32 : i32
      %148 = arith.index_cast %147 : i32 to index
      %c0_77 = arith.constant 0 : index
      %149 = vector.load %arg12[%148, %c0_77] : memref<288x256xf32, #tpu.memory_space<vmem>>, vector<1x256xf32>
      %c10 = arith.constant 10 : index
      %c0_78 = arith.constant 0 : index
      %c0_79 = arith.constant 0 : index
      %150 = vector.load %arg7[%c10, %c0_78, %c0_79] : memref<38x8x256xf32, #tpu.memory_space<vmem>>, vector<1x8x256xf32>
      %151 = vector.shape_cast %150 : vector<1x8x256xf32> to vector<8x256xf32>
      %152 = vector.broadcast %149 : vector<1x256xf32> to vector<8x256xf32>
      %153 = arith.mulf %152, %151 : vector<8x256xf32>
      %154 = arith.addf %138, %153 : vector<8x256xf32>
      %c11_i32 = arith.constant 11 : i32
      %155 = arith.addi %66, %c11_i32 : i32
      %156 = arith.index_cast %155 : i32 to index
      %c0_80 = arith.constant 0 : index
      %157 = vector.load %arg12[%156, %c0_80] : memref<288x256xf32, #tpu.memory_space<vmem>>, vector<1x256xf32>
      %c11 = arith.constant 11 : index
      %c0_81 = arith.constant 0 : index
      %c0_82 = arith.constant 0 : index
      %158 = vector.load %arg7[%c11, %c0_81, %c0_82] : memref<38x8x256xf32, #tpu.memory_space<vmem>>, vector<1x8x256xf32>
      %159 = vector.shape_cast %158 : vector<1x8x256xf32> to vector<8x256xf32>
      %160 = vector.broadcast %157 : vector<1x256xf32> to vector<8x256xf32>
      %161 = arith.mulf %160, %159 : vector<8x256xf32>
      %162 = arith.addf %146, %161 : vector<8x256xf32>
      %c12_i32 = arith.constant 12 : i32
      %163 = arith.addi %66, %c12_i32 : i32
      %164 = arith.index_cast %163 : i32 to index
      %c0_83 = arith.constant 0 : index
      %165 = vector.load %arg12[%164, %c0_83] : memref<288x256xf32, #tpu.memory_space<vmem>>, vector<1x256xf32>
      %c12 = arith.constant 12 : index
      %c0_84 = arith.constant 0 : index
      %c0_85 = arith.constant 0 : index
      %166 = vector.load %arg7[%c12, %c0_84, %c0_85] : memref<38x8x256xf32, #tpu.memory_space<vmem>>, vector<1x8x256xf32>
      %167 = vector.shape_cast %166 : vector<1x8x256xf32> to vector<8x256xf32>
      %168 = vector.broadcast %165 : vector<1x256xf32> to vector<8x256xf32>
      %169 = arith.mulf %168, %167 : vector<8x256xf32>
      %170 = arith.addf %154, %169 : vector<8x256xf32>
      %c13_i32 = arith.constant 13 : i32
      %171 = arith.addi %66, %c13_i32 : i32
      %172 = arith.index_cast %171 : i32 to index
      %c0_86 = arith.constant 0 : index
      %173 = vector.load %arg12[%172, %c0_86] : memref<288x256xf32, #tpu.memory_space<vmem>>, vector<1x256xf32>
      %c13 = arith.constant 13 : index
      %c0_87 = arith.constant 0 : index
      %c0_88 = arith.constant 0 : index
      %174 = vector.load %arg7[%c13, %c0_87, %c0_88] : memref<38x8x256xf32, #tpu.memory_space<vmem>>, vector<1x8x256xf32>
      %175 = vector.shape_cast %174 : vector<1x8x256xf32> to vector<8x256xf32>
      %176 = vector.broadcast %173 : vector<1x256xf32> to vector<8x256xf32>
      %177 = arith.mulf %176, %175 : vector<8x256xf32>
      %178 = arith.addf %162, %177 : vector<8x256xf32>
      %c14_i32 = arith.constant 14 : i32
      %179 = arith.addi %66, %c14_i32 : i32
      %180 = arith.index_cast %179 : i32 to index
      %c0_89 = arith.constant 0 : index
      %181 = vector.load %arg12[%180, %c0_89] : memref<288x256xf32, #tpu.memory_space<vmem>>, vector<1x256xf32>
      %c14 = arith.constant 14 : index
      %c0_90 = arith.constant 0 : index
      %c0_91 = arith.constant 0 : index
      %182 = vector.load %arg7[%c14, %c0_90, %c0_91] : memref<38x8x256xf32, #tpu.memory_space<vmem>>, vector<1x8x256xf32>
      %183 = vector.shape_cast %182 : vector<1x8x256xf32> to vector<8x256xf32>
      %184 = vector.broadcast %181 : vector<1x256xf32> to vector<8x256xf32>
      %185 = arith.mulf %184, %183 : vector<8x256xf32>
      %186 = arith.addf %170, %185 : vector<8x256xf32>
      %c15_i32 = arith.constant 15 : i32
      %187 = arith.addi %66, %c15_i32 : i32
      %188 = arith.index_cast %187 : i32 to index
      %c0_92 = arith.constant 0 : index
      %189 = vector.load %arg12[%188, %c0_92] : memref<288x256xf32, #tpu.memory_space<vmem>>, vector<1x256xf32>
      %c15 = arith.constant 15 : index
      %c0_93 = arith.constant 0 : index
      %c0_94 = arith.constant 0 : index
      %190 = vector.load %arg7[%c15, %c0_93, %c0_94] : memref<38x8x256xf32, #tpu.memory_space<vmem>>, vector<1x8x256xf32>
      %191 = vector.shape_cast %190 : vector<1x8x256xf32> to vector<8x256xf32>
      %192 = vector.broadcast %189 : vector<1x256xf32> to vector<8x256xf32>
      %193 = arith.mulf %192, %191 : vector<8x256xf32>
      %194 = arith.addf %178, %193 : vector<8x256xf32>
      %c16_i32 = arith.constant 16 : i32
      %195 = arith.addi %66, %c16_i32 : i32
      %196 = arith.index_cast %195 : i32 to index
      %c0_95 = arith.constant 0 : index
      %197 = vector.load %arg12[%196, %c0_95] : memref<288x256xf32, #tpu.memory_space<vmem>>, vector<1x256xf32>
      %c16 = arith.constant 16 : index
      %c0_96 = arith.constant 0 : index
      %c0_97 = arith.constant 0 : index
      %198 = vector.load %arg7[%c16, %c0_96, %c0_97] : memref<38x8x256xf32, #tpu.memory_space<vmem>>, vector<1x8x256xf32>
      %199 = vector.shape_cast %198 : vector<1x8x256xf32> to vector<8x256xf32>
      %200 = vector.broadcast %197 : vector<1x256xf32> to vector<8x256xf32>
      %201 = arith.mulf %200, %199 : vector<8x256xf32>
      %202 = arith.addf %186, %201 : vector<8x256xf32>
      %c17_i32 = arith.constant 17 : i32
      %203 = arith.addi %66, %c17_i32 : i32
      %204 = arith.index_cast %203 : i32 to index
      %c0_98 = arith.constant 0 : index
      %205 = vector.load %arg12[%204, %c0_98] : memref<288x256xf32, #tpu.memory_space<vmem>>, vector<1x256xf32>
      %c17 = arith.constant 17 : index
      %c0_99 = arith.constant 0 : index
      %c0_100 = arith.constant 0 : index
      %206 = vector.load %arg7[%c17, %c0_99, %c0_100] : memref<38x8x256xf32, #tpu.memory_space<vmem>>, vector<1x8x256xf32>
      %207 = vector.shape_cast %206 : vector<1x8x256xf32> to vector<8x256xf32>
      %208 = vector.broadcast %205 : vector<1x256xf32> to vector<8x256xf32>
      %209 = arith.mulf %208, %207 : vector<8x256xf32>
      %210 = arith.addf %194, %209 : vector<8x256xf32>
      %c18_i32 = arith.constant 18 : i32
      %211 = arith.addi %66, %c18_i32 : i32
      %212 = arith.index_cast %211 : i32 to index
      %c0_101 = arith.constant 0 : index
      %213 = vector.load %arg12[%212, %c0_101] : memref<288x256xf32, #tpu.memory_space<vmem>>, vector<1x256xf32>
      %c18 = arith.constant 18 : index
      %c0_102 = arith.constant 0 : index
      %c0_103 = arith.constant 0 : index
      %214 = vector.load %arg7[%c18, %c0_102, %c0_103] : memref<38x8x256xf32, #tpu.memory_space<vmem>>, vector<1x8x256xf32>
      %215 = vector.shape_cast %214 : vector<1x8x256xf32> to vector<8x256xf32>
      %216 = vector.broadcast %213 : vector<1x256xf32> to vector<8x256xf32>
      %217 = arith.mulf %216, %215 : vector<8x256xf32>
      %218 = arith.addf %202, %217 : vector<8x256xf32>
      %c19_i32 = arith.constant 19 : i32
      %219 = arith.addi %66, %c19_i32 : i32
      %220 = arith.index_cast %219 : i32 to index
      %c0_104 = arith.constant 0 : index
      %221 = vector.load %arg12[%220, %c0_104] : memref<288x256xf32, #tpu.memory_space<vmem>>, vector<1x256xf32>
      %c19 = arith.constant 19 : index
      %c0_105 = arith.constant 0 : index
      %c0_106 = arith.constant 0 : index
      %222 = vector.load %arg7[%c19, %c0_105, %c0_106] : memref<38x8x256xf32, #tpu.memory_space<vmem>>, vector<1x8x256xf32>
      %223 = vector.shape_cast %222 : vector<1x8x256xf32> to vector<8x256xf32>
      %224 = vector.broadcast %221 : vector<1x256xf32> to vector<8x256xf32>
      %225 = arith.mulf %224, %223 : vector<8x256xf32>
      %226 = arith.addf %210, %225 : vector<8x256xf32>
      %c20_i32 = arith.constant 20 : i32
      %227 = arith.addi %66, %c20_i32 : i32
      %228 = arith.index_cast %227 : i32 to index
      %c0_107 = arith.constant 0 : index
      %229 = vector.load %arg12[%228, %c0_107] : memref<288x256xf32, #tpu.memory_space<vmem>>, vector<1x256xf32>
      %c20 = arith.constant 20 : index
      %c0_108 = arith.constant 0 : index
      %c0_109 = arith.constant 0 : index
      %230 = vector.load %arg7[%c20, %c0_108, %c0_109] : memref<38x8x256xf32, #tpu.memory_space<vmem>>, vector<1x8x256xf32>
      %231 = vector.shape_cast %230 : vector<1x8x256xf32> to vector<8x256xf32>
      %232 = vector.broadcast %229 : vector<1x256xf32> to vector<8x256xf32>
      %233 = arith.mulf %232, %231 : vector<8x256xf32>
      %234 = arith.addf %218, %233 : vector<8x256xf32>
      %c21_i32 = arith.constant 21 : i32
      %235 = arith.addi %66, %c21_i32 : i32
      %236 = arith.index_cast %235 : i32 to index
      %c0_110 = arith.constant 0 : index
      %237 = vector.load %arg12[%236, %c0_110] : memref<288x256xf32, #tpu.memory_space<vmem>>, vector<1x256xf32>
      %c21 = arith.constant 21 : index
      %c0_111 = arith.constant 0 : index
      %c0_112 = arith.constant 0 : index
      %238 = vector.load %arg7[%c21, %c0_111, %c0_112] : memref<38x8x256xf32, #tpu.memory_space<vmem>>, vector<1x8x256xf32>
      %239 = vector.shape_cast %238 : vector<1x8x256xf32> to vector<8x256xf32>
      %240 = vector.broadcast %237 : vector<1x256xf32> to vector<8x256xf32>
      %241 = arith.mulf %240, %239 : vector<8x256xf32>
      %242 = arith.addf %226, %241 : vector<8x256xf32>
      %c22_i32 = arith.constant 22 : i32
      %243 = arith.addi %66, %c22_i32 : i32
      %244 = arith.index_cast %243 : i32 to index
      %c0_113 = arith.constant 0 : index
      %245 = vector.load %arg12[%244, %c0_113] : memref<288x256xf32, #tpu.memory_space<vmem>>, vector<1x256xf32>
      %c22 = arith.constant 22 : index
      %c0_114 = arith.constant 0 : index
      %c0_115 = arith.constant 0 : index
      %246 = vector.load %arg7[%c22, %c0_114, %c0_115] : memref<38x8x256xf32, #tpu.memory_space<vmem>>, vector<1x8x256xf32>
      %247 = vector.shape_cast %246 : vector<1x8x256xf32> to vector<8x256xf32>
      %248 = vector.broadcast %245 : vector<1x256xf32> to vector<8x256xf32>
      %249 = arith.mulf %248, %247 : vector<8x256xf32>
      %250 = arith.addf %234, %249 : vector<8x256xf32>
      %c23_i32 = arith.constant 23 : i32
      %251 = arith.addi %66, %c23_i32 : i32
      %252 = arith.index_cast %251 : i32 to index
      %c0_116 = arith.constant 0 : index
      %253 = vector.load %arg12[%252, %c0_116] : memref<288x256xf32, #tpu.memory_space<vmem>>, vector<1x256xf32>
      %c23 = arith.constant 23 : index
      %c0_117 = arith.constant 0 : index
      %c0_118 = arith.constant 0 : index
      %254 = vector.load %arg7[%c23, %c0_117, %c0_118] : memref<38x8x256xf32, #tpu.memory_space<vmem>>, vector<1x8x256xf32>
      %255 = vector.shape_cast %254 : vector<1x8x256xf32> to vector<8x256xf32>
      %256 = vector.broadcast %253 : vector<1x256xf32> to vector<8x256xf32>
      %257 = arith.mulf %256, %255 : vector<8x256xf32>
      %258 = arith.addf %242, %257 : vector<8x256xf32>
      %c24_i32 = arith.constant 24 : i32
      %259 = arith.addi %66, %c24_i32 : i32
      %260 = arith.index_cast %259 : i32 to index
      %c0_119 = arith.constant 0 : index
      %261 = vector.load %arg12[%260, %c0_119] : memref<288x256xf32, #tpu.memory_space<vmem>>, vector<1x256xf32>
      %c24 = arith.constant 24 : index
      %c0_120 = arith.constant 0 : index
      %c0_121 = arith.constant 0 : index
      %262 = vector.load %arg7[%c24, %c0_120, %c0_121] : memref<38x8x256xf32, #tpu.memory_space<vmem>>, vector<1x8x256xf32>
      %263 = vector.shape_cast %262 : vector<1x8x256xf32> to vector<8x256xf32>
      %264 = vector.broadcast %261 : vector<1x256xf32> to vector<8x256xf32>
      %265 = arith.mulf %264, %263 : vector<8x256xf32>
      %266 = arith.addf %250, %265 : vector<8x256xf32>
      %c25_i32 = arith.constant 25 : i32
      %267 = arith.addi %66, %c25_i32 : i32
      %268 = arith.index_cast %267 : i32 to index
      %c0_122 = arith.constant 0 : index
      %269 = vector.load %arg12[%268, %c0_122] : memref<288x256xf32, #tpu.memory_space<vmem>>, vector<1x256xf32>
      %c25 = arith.constant 25 : index
      %c0_123 = arith.constant 0 : index
      %c0_124 = arith.constant 0 : index
      %270 = vector.load %arg7[%c25, %c0_123, %c0_124] : memref<38x8x256xf32, #tpu.memory_space<vmem>>, vector<1x8x256xf32>
      %271 = vector.shape_cast %270 : vector<1x8x256xf32> to vector<8x256xf32>
      %272 = vector.broadcast %269 : vector<1x256xf32> to vector<8x256xf32>
      %273 = arith.mulf %272, %271 : vector<8x256xf32>
      %274 = arith.addf %258, %273 : vector<8x256xf32>
      %c26_i32 = arith.constant 26 : i32
      %275 = arith.addi %66, %c26_i32 : i32
      %276 = arith.index_cast %275 : i32 to index
      %c0_125 = arith.constant 0 : index
      %277 = vector.load %arg12[%276, %c0_125] : memref<288x256xf32, #tpu.memory_space<vmem>>, vector<1x256xf32>
      %c26 = arith.constant 26 : index
      %c0_126 = arith.constant 0 : index
      %c0_127 = arith.constant 0 : index
      %278 = vector.load %arg7[%c26, %c0_126, %c0_127] : memref<38x8x256xf32, #tpu.memory_space<vmem>>, vector<1x8x256xf32>
      %279 = vector.shape_cast %278 : vector<1x8x256xf32> to vector<8x256xf32>
      %280 = vector.broadcast %277 : vector<1x256xf32> to vector<8x256xf32>
      %281 = arith.mulf %280, %279 : vector<8x256xf32>
      %282 = arith.addf %266, %281 : vector<8x256xf32>
      %c27_i32 = arith.constant 27 : i32
      %283 = arith.addi %66, %c27_i32 : i32
      %284 = arith.index_cast %283 : i32 to index
      %c0_128 = arith.constant 0 : index
      %285 = vector.load %arg12[%284, %c0_128] : memref<288x256xf32, #tpu.memory_space<vmem>>, vector<1x256xf32>
      %c27 = arith.constant 27 : index
      %c0_129 = arith.constant 0 : index
      %c0_130 = arith.constant 0 : index
      %286 = vector.load %arg7[%c27, %c0_129, %c0_130] : memref<38x8x256xf32, #tpu.memory_space<vmem>>, vector<1x8x256xf32>
      %287 = vector.shape_cast %286 : vector<1x8x256xf32> to vector<8x256xf32>
      %288 = vector.broadcast %285 : vector<1x256xf32> to vector<8x256xf32>
      %289 = arith.mulf %288, %287 : vector<8x256xf32>
      %290 = arith.addf %274, %289 : vector<8x256xf32>
      %c28_i32 = arith.constant 28 : i32
      %291 = arith.addi %66, %c28_i32 : i32
      %292 = arith.index_cast %291 : i32 to index
      %c0_131 = arith.constant 0 : index
      %293 = vector.load %arg12[%292, %c0_131] : memref<288x256xf32, #tpu.memory_space<vmem>>, vector<1x256xf32>
      %c28 = arith.constant 28 : index
      %c0_132 = arith.constant 0 : index
      %c0_133 = arith.constant 0 : index
      %294 = vector.load %arg7[%c28, %c0_132, %c0_133] : memref<38x8x256xf32, #tpu.memory_space<vmem>>, vector<1x8x256xf32>
      %295 = vector.shape_cast %294 : vector<1x8x256xf32> to vector<8x256xf32>
      %296 = vector.broadcast %293 : vector<1x256xf32> to vector<8x256xf32>
      %297 = arith.mulf %296, %295 : vector<8x256xf32>
      %298 = arith.addf %282, %297 : vector<8x256xf32>
      %c29_i32 = arith.constant 29 : i32
      %299 = arith.addi %66, %c29_i32 : i32
      %300 = arith.index_cast %299 : i32 to index
      %c0_134 = arith.constant 0 : index
      %301 = vector.load %arg12[%300, %c0_134] : memref<288x256xf32, #tpu.memory_space<vmem>>, vector<1x256xf32>
      %c29 = arith.constant 29 : index
      %c0_135 = arith.constant 0 : index
      %c0_136 = arith.constant 0 : index
      %302 = vector.load %arg7[%c29, %c0_135, %c0_136] : memref<38x8x256xf32, #tpu.memory_space<vmem>>, vector<1x8x256xf32>
      %303 = vector.shape_cast %302 : vector<1x8x256xf32> to vector<8x256xf32>
      %304 = vector.broadcast %301 : vector<1x256xf32> to vector<8x256xf32>
      %305 = arith.mulf %304, %303 : vector<8x256xf32>
      %306 = arith.addf %290, %305 : vector<8x256xf32>
      %c30_i32 = arith.constant 30 : i32
      %307 = arith.addi %66, %c30_i32 : i32
      %308 = arith.index_cast %307 : i32 to index
      %c0_137 = arith.constant 0 : index
      %309 = vector.load %arg12[%308, %c0_137] : memref<288x256xf32, #tpu.memory_space<vmem>>, vector<1x256xf32>
      %c30 = arith.constant 30 : index
      %c0_138 = arith.constant 0 : index
      %c0_139 = arith.constant 0 : index
      %310 = vector.load %arg7[%c30, %c0_138, %c0_139] : memref<38x8x256xf32, #tpu.memory_space<vmem>>, vector<1x8x256xf32>
      %311 = vector.shape_cast %310 : vector<1x8x256xf32> to vector<8x256xf32>
      %312 = vector.broadcast %309 : vector<1x256xf32> to vector<8x256xf32>
      %313 = arith.mulf %312, %311 : vector<8x256xf32>
      %314 = arith.addf %298, %313 : vector<8x256xf32>
      %c31_i32 = arith.constant 31 : i32
      %315 = arith.addi %66, %c31_i32 : i32
      %316 = arith.index_cast %315 : i32 to index
      %c0_140 = arith.constant 0 : index
      %317 = vector.load %arg12[%316, %c0_140] : memref<288x256xf32, #tpu.memory_space<vmem>>, vector<1x256xf32>
      %c31 = arith.constant 31 : index
      %c0_141 = arith.constant 0 : index
      %c0_142 = arith.constant 0 : index
      %318 = vector.load %arg7[%c31, %c0_141, %c0_142] : memref<38x8x256xf32, #tpu.memory_space<vmem>>, vector<1x8x256xf32>
      %319 = vector.shape_cast %318 : vector<1x8x256xf32> to vector<8x256xf32>
      %320 = vector.broadcast %317 : vector<1x256xf32> to vector<8x256xf32>
      %321 = arith.mulf %320, %319 : vector<8x256xf32>
      %322 = arith.addf %306, %321 : vector<8x256xf32>
      %c32_i32_143 = arith.constant 32 : i32
      %323 = arith.addi %66, %c32_i32_143 : i32
      %324 = arith.index_cast %323 : i32 to index
      %c0_144 = arith.constant 0 : index
      %325 = vector.load %arg12[%324, %c0_144] : memref<288x256xf32, #tpu.memory_space<vmem>>, vector<1x256xf32>
      %c32 = arith.constant 32 : index
      %c0_145 = arith.constant 0 : index
      %c0_146 = arith.constant 0 : index
      %326 = vector.load %arg7[%c32, %c0_145, %c0_146] : memref<38x8x256xf32, #tpu.memory_space<vmem>>, vector<1x8x256xf32>
      %327 = vector.shape_cast %326 : vector<1x8x256xf32> to vector<8x256xf32>
      %328 = vector.broadcast %325 : vector<1x256xf32> to vector<8x256xf32>
      %329 = arith.mulf %328, %327 : vector<8x256xf32>
      %330 = arith.addf %314, %329 : vector<8x256xf32>
      %c33_i32 = arith.constant 33 : i32
      %331 = arith.addi %66, %c33_i32 : i32
      %332 = arith.index_cast %331 : i32 to index
      %c0_147 = arith.constant 0 : index
      %333 = vector.load %arg12[%332, %c0_147] : memref<288x256xf32, #tpu.memory_space<vmem>>, vector<1x256xf32>
      %c33 = arith.constant 33 : index
      %c0_148 = arith.constant 0 : index
      %c0_149 = arith.constant 0 : index
      %334 = vector.load %arg7[%c33, %c0_148, %c0_149] : memref<38x8x256xf32, #tpu.memory_space<vmem>>, vector<1x8x256xf32>
      %335 = vector.shape_cast %334 : vector<1x8x256xf32> to vector<8x256xf32>
      %336 = vector.broadcast %333 : vector<1x256xf32> to vector<8x256xf32>
      %337 = arith.mulf %336, %335 : vector<8x256xf32>
      %338 = arith.addf %322, %337 : vector<8x256xf32>
      %c34_i32 = arith.constant 34 : i32
      %339 = arith.addi %66, %c34_i32 : i32
      %340 = arith.index_cast %339 : i32 to index
      %c0_150 = arith.constant 0 : index
      %341 = vector.load %arg12[%340, %c0_150] : memref<288x256xf32, #tpu.memory_space<vmem>>, vector<1x256xf32>
      %c34 = arith.constant 34 : index
      %c0_151 = arith.constant 0 : index
      %c0_152 = arith.constant 0 : index
      %342 = vector.load %arg7[%c34, %c0_151, %c0_152] : memref<38x8x256xf32, #tpu.memory_space<vmem>>, vector<1x8x256xf32>
      %343 = vector.shape_cast %342 : vector<1x8x256xf32> to vector<8x256xf32>
      %344 = vector.broadcast %341 : vector<1x256xf32> to vector<8x256xf32>
      %345 = arith.mulf %344, %343 : vector<8x256xf32>
      %346 = arith.addf %330, %345 : vector<8x256xf32>
      %c35_i32 = arith.constant 35 : i32
      %347 = arith.addi %66, %c35_i32 : i32
      %348 = arith.index_cast %347 : i32 to index
      %c0_153 = arith.constant 0 : index
      %349 = vector.load %arg12[%348, %c0_153] : memref<288x256xf32, #tpu.memory_space<vmem>>, vector<1x256xf32>
      %c35 = arith.constant 35 : index
      %c0_154 = arith.constant 0 : index
      %c0_155 = arith.constant 0 : index
      %350 = vector.load %arg7[%c35, %c0_154, %c0_155] : memref<38x8x256xf32, #tpu.memory_space<vmem>>, vector<1x8x256xf32>
      %351 = vector.shape_cast %350 : vector<1x8x256xf32> to vector<8x256xf32>
      %352 = vector.broadcast %349 : vector<1x256xf32> to vector<8x256xf32>
      %353 = arith.mulf %352, %351 : vector<8x256xf32>
      %354 = arith.addf %338, %353 : vector<8x256xf32>
      %c36_i32 = arith.constant 36 : i32
      %355 = arith.addi %66, %c36_i32 : i32
      %356 = arith.index_cast %355 : i32 to index
      %c0_156 = arith.constant 0 : index
      %357 = vector.load %arg12[%356, %c0_156] : memref<288x256xf32, #tpu.memory_space<vmem>>, vector<1x256xf32>
      %c36 = arith.constant 36 : index
      %c0_157 = arith.constant 0 : index
      %c0_158 = arith.constant 0 : index
      %358 = vector.load %arg7[%c36, %c0_157, %c0_158] : memref<38x8x256xf32, #tpu.memory_space<vmem>>, vector<1x8x256xf32>
      %359 = vector.shape_cast %358 : vector<1x8x256xf32> to vector<8x256xf32>
      %360 = vector.broadcast %357 : vector<1x256xf32> to vector<8x256xf32>
      %361 = arith.mulf %360, %359 : vector<8x256xf32>
      %362 = arith.addf %346, %361 : vector<8x256xf32>
      %c37_i32 = arith.constant 37 : i32
      %363 = arith.addi %66, %c37_i32 : i32
      %364 = arith.index_cast %363 : i32 to index
      %c0_159 = arith.constant 0 : index
      %365 = vector.load %arg12[%364, %c0_159] : memref<288x256xf32, #tpu.memory_space<vmem>>, vector<1x256xf32>
      %c37 = arith.constant 37 : index
      %c0_160 = arith.constant 0 : index
      %c0_161 = arith.constant 0 : index
      %366 = vector.load %arg7[%c37, %c0_160, %c0_161] : memref<38x8x256xf32, #tpu.memory_space<vmem>>, vector<1x8x256xf32>
      %367 = vector.shape_cast %366 : vector<1x8x256xf32> to vector<8x256xf32>
      %368 = vector.broadcast %365 : vector<1x256xf32> to vector<8x256xf32>
      %369 = arith.mulf %368, %367 : vector<8x256xf32>
      %370 = arith.addf %354, %369 : vector<8x256xf32>
      %371 = arith.addf %362, %370 : vector<8x256xf32>
      %cst_162 = arith.constant 5.000000e-01 : f32
      %372 = vector.broadcast %cst_162 : f32 to vector<8x256xf32>
      %373 = arith.mulf %372, %371 : vector<8x256xf32>
      %374 = math.tanh %373 : vector<8x256xf32>
      %cst_163 = arith.constant 1.000000e+00 : f32
      %375 = vector.broadcast %cst_163 : f32 to vector<8x256xf32>
      %376 = arith.addf %374, %375 : vector<8x256xf32>
      %cst_164 = arith.constant 5.000000e-01 : f32
      %377 = vector.broadcast %cst_164 : f32 to vector<8x256xf32>
      %378 = arith.mulf %377, %376 : vector<8x256xf32>
      %379 = arith.mulf %371, %378 : vector<8x256xf32>
      %c8_i32_165 = arith.constant 8 : i32
      %380 = arith.muli %64, %c8_i32_165 : i32
      %381 = tpu.assume_multiple %380, 8 : i32
      %382 = arith.index_cast %381 : i32 to index
      %c0_166 = arith.constant 0 : index
      %383 = vector.load %arg13[%382, %c0_166] : memref<256x256xf32, #tpu.memory_space<vmem>>, vector<8x256xf32>
      tpu.vector_store %arg13[%382, %c0_166], %379 {strides = array<i32>} : memref<256x256xf32, #tpu.memory_space<vmem>>, vector<8x256xf32>,
    }
    %c32_i32_29 = arith.constant 32 : i32
    %c0_30 = arith.constant 0 : index
    %c0_31 = arith.constant 0 : index
    %53 = vector.load %arg13[%c0_30, %c0_31] : memref<256x256xf32, #tpu.memory_space<vmem>>, vector<256x256xf32>
    %54 = arith.truncf %53 : vector<256x256xf32> to vector<256x256xbf16>
    %c0_32 = arith.constant 0 : index
    %c0_33 = arith.constant 0 : index
    %55 = vector.load %arg9[%c0_32, %c0_33] : memref<256x128xbf16, #tpu.memory_space<vmem>>, vector<256x128xbf16>
    %cst_34 = arith.constant dense<0.000000e+00> : vector<256x128xf32>
    %56 = tpu.matmul %54, %55, %cst_34 {dimension_numbers = #tpu.dot_dimension_numbers<[1], [0], [0], [1], [0, 0, 1, 1], [], []>} : vector<256x256xbf16>, vector<256x128xbf16>, vector<256x128xf32> -> vector<256x128xf32>
    %c0_35 = arith.constant 0 : index
    %c0_36 = arith.constant 0 : index
    %57 = vector.load %arg10[%c0_35, %c0_36] : memref<1x128xf32, #tpu.memory_space<vmem>>, vector<1x128xf32>
    %58 = vector.broadcast %57 : vector<1x128xf32> to vector<256x128xf32>
    %59 = arith.addf %56, %58 : vector<256x128xf32>
    %c0_37 = arith.constant 0 : index
    %c0_38 = arith.constant 0 : index
    %c0_39 = arith.constant 0 : index
    %60 = vector.load %arg11[%c0_37, %c0_38, %c0_39] : memref<1x256x128xf32, #tpu.memory_space<vmem>>, vector<1x256x128xf32>
    %61 = vector.shape_cast %60 : vector<1x256x128xf32> to vector<256x128xf32>
    %62 = vector.shape_cast %59 : vector<256x128xf32> to vector<1x256x128xf32>
    tpu.vector_store %arg11[%c0_37, %c0_38, %c0_39], %62 {strides = array<i32>} : memref<1x256x128xf32, #tpu.memory_space<vmem>>, vector<1x256x128xf32>,
    return
  }
  func.func @transform_0(%arg0: i32, %arg1: i32) -> (i32, i32, i32) {
    %c0_i32 = arith.constant 0 : i32
    %c0_i32_0 = arith.constant 0 : i32
    return %arg0, %arg1, %c0_i32 : i32, i32, i32
  }
  func.func @transform_1(%arg0: i32, %arg1: i32) -> (i32, i32, i32) {
    %c16_i32 = arith.constant 16 : i32
    %0 = arith.muli %arg1, %c16_i32 : i32
    %c1_i32 = arith.constant 1 : i32
    %1 = arith.subi %0, %c1_i32 : i32
    %c0_i32 = arith.constant 0 : i32
    %2 = arith.maxsi %1, %c0_i32 : i32
    %c0_i32_0 = arith.constant 0 : i32
    %c0_i32_1 = arith.constant 0 : i32
    return %arg0, %2, %c0_i32_0 : i32, i32, i32
  }
  func.func @transform_2(%arg0: i32, %arg1: i32) -> (i32, i32, i32) {
    %c1_i32 = arith.constant 1 : i32
    %0 = arith.addi %arg1, %c1_i32 : i32
    %c16_i32 = arith.constant 16 : i32
    %1 = arith.muli %0, %c16_i32 : i32
    %c31_i32 = arith.constant 31 : i32
    %2 = arith.minsi %1, %c31_i32 : i32
    %c0_i32 = arith.constant 0 : i32
    %c0_i32_0 = arith.constant 0 : i32
    return %arg0, %2, %c0_i32 : i32, i32, i32
  }
  func.func @transform_3(%arg0: i32, %arg1: i32) -> (i32, i32) {
    %c0_i32 = arith.constant 0 : i32
    %c0_i32_0 = arith.constant 0 : i32
    %c0_i32_1 = arith.constant 0 : i32
    return %c0_i32, %c0_i32_0 : i32, i32
  }
  func.func @transform_4(%arg0: i32, %arg1: i32) -> (i32, i32) {
    %c0_i32 = arith.constant 0 : i32
    %c0_i32_0 = arith.constant 0 : i32
    %c0_i32_1 = arith.constant 0 : i32
    return %c0_i32, %c0_i32_0 : i32, i32
  }
  func.func @transform_5(%arg0: i32, %arg1: i32) -> (i32, i32, i32) {
    %c0_i32 = arith.constant 0 : i32
    %c0_i32_0 = arith.constant 0 : i32
    %c0_i32_1 = arith.constant 0 : i32
    %c0_i32_2 = arith.constant 0 : i32
    return %c0_i32, %c0_i32_0, %c0_i32_1 : i32, i32, i32
  }
  func.func @transform_6(%arg0: i32, %arg1: i32) -> (i32, i32) {
    %c0_i32 = arith.constant 0 : i32
    %c0_i32_0 = arith.constant 0 : i32
    %c0_i32_1 = arith.constant 0 : i32
    return %c0_i32, %c0_i32_0 : i32, i32
  }
  func.func @transform_7(%arg0: i32, %arg1: i32) -> (i32, i32) {
    %c0_i32 = arith.constant 0 : i32
    %c0_i32_0 = arith.constant 0 : i32
    %c0_i32_1 = arith.constant 0 : i32
    return %c0_i32, %c0_i32_0 : i32, i32
  }
  func.func @transform_8(%arg0: i32, %arg1: i32) -> (i32, i32) {
    %c0_i32 = arith.constant 0 : i32
    %c0_i32_0 = arith.constant 0 : i32
    %c0_i32_1 = arith.constant 0 : i32
    return %c0_i32, %c0_i32_0 : i32, i32
  }
  func.func @transform_9(%arg0: i32, %arg1: i32) -> (i32, i32, i32) {
    %c0_i32 = arith.constant 0 : i32
    %c0_i32_0 = arith.constant 0 : i32
    return %arg0, %arg1, %c0_i32 : i32, i32, i32
  }
}

</mosaic_0001>

<llo_original>
// kernel: tpu_custom_call.1
$region0: #{tpu_custom_call.1}
  #allocation0 [shape = 'u32[]', space=smem, size = 0x4, offset = 0x4, fixed_abs, tag = 'smem constant byte address 0x4 - core index']
  #allocation1 [shape = 'u32[144,128]{1,0:T(1,128)}', space=vmem, size = 0x12000, scoped, tag = 'internal scratch']
  #allocation2 [shape = 'f32[288,256]{1,0:T(8,128)}', space=vmem, size = 0x48000, scoped, tag = 'scratch operand']
  #allocation3 [shape = 'f32[256,256]{1,0:T(8,128)}', space=vmem, size = 0x40000, scoped, tag = 'scratch operand']
  %s0 = inlined_call_operand.hbm [shape: f32[2,512,128], index: 0, kind: input, shape index: {}]
  %s1 = inlined_call_operand.hbm [shape: f32[2,512,128], index: 1, kind: input, shape index: {}]
  %s2 = inlined_call_operand.hbm [shape: f32[2,512,128], index: 2, kind: input, shape index: {}]
  %s3 = inlined_call_operand.hbm [shape: bf16[128,512], index: 3, kind: input, shape index: {}]
  %s4 = inlined_call_operand.vmem [shape: f32[1,512], index: 4, kind: input, shape index: {}]
  %s5 = inlined_call_operand.hbm [shape: f32[38,8,256], index: 5, kind: input, shape index: {}]
  %s6 = inlined_call_operand.vmem [shape: f32[1,256], index: 6, kind: input, shape index: {}]
  %s7 = inlined_call_operand.hbm [shape: bf16[256,128], index: 7, kind: input, shape index: {}]
  %s8 = inlined_call_operand.vmem [shape: f32[1,128], index: 8, kind: input, shape index: {}]
  %s9 = inlined_call_operand.hbm [shape: f32[2,512,128], index: 9, kind: output, shape index: {}]
  %s10 = sld [smem:[#allocation0]]
  $region108: #{tpu_custom_call.1} parent=0
    _
  %s12 = ssub.s32 1, %s10
  %s13 = scalar_select 0, %s12, %s10
  $region1: #{tpu_custom_call.1} parent=0
    #allocation4 [shape = 'u8[262144]{0}', space=vmem, size = 0x40000, scoped, tag = 'input window, operand 0']
    #allocation5 [shape = 's32[2]{0}', space=sflag, size = 0x8, scoped, tag = 'scoped memory for tpu_custom_call.1']
    #allocation6 [shape = 's32[2]{0}', space=sflag, size = 0x8, scoped, tag = 'scoped memory for tpu_custom_call.1']
    #allocation7 [shape = 'u8[16384]{0}', space=vmem, size = 0x4000, scoped, tag = 'input window, operand 1']
    #allocation8 [shape = 's32[2]{0}', space=sflag, size = 0x8, scoped, tag = 'scoped memory for tpu_custom_call.1']
    #allocation9 [shape = 'u8[16384]{0}', space=vmem, size = 0x4000, scoped, tag = 'input window, operand 2']
    #allocation10 [shape = 'u8[131072]{0}', space=vmem, size = 0x20000, scoped, tag = 'input window, operand 3, single buffered']
    #allocation11 [shape = 's32[1]{0}', space=sflag, size = 0x4, scoped, tag = 'scoped memory for tpu_custom_call.1']
    #allocation12 [shape = 'u8[311296]{0}', space=vmem, size = 0x4c000, scoped, tag = 'input window, operand 5, single buffered']
    #allocation13 [shape = 'u8[65536]{0}', space=vmem, size = 0x10000, scoped, tag = 'input window, operand 7, single buffered']
    #allocation14 [shape = 's32[1]{0}', space=sflag, size = 0x4, scoped, tag = 'scoped memory for tpu_custom_call.1']
    #allocation15 [shape = 'u8[262144]{0}', space=vmem, size = 0x40000, scoped, tag = 'output window, operand 0']
    %14 = vsyncpa [#allocation5], 0
    %s15 = scalar_lea.sflag [#allocation5], 1
    %16 = vsyncpa %s15, 0
    %17 = vsyncpa [#allocation8], 0
    %s18 = scalar_lea.sflag [#allocation8], 1
    %19 = vsyncpa %s18, 0
    %20 = vsyncpa [#allocation11], 0
    %21 = vsyncpa [#allocation14], 0
    %22 = vsyncpa [#allocation6], 0
    %s23 = scalar_lea.sflag [#allocation6], 1
    %24 = vsyncpa %s23, 0
    loop: start=0, step=1, limit=6
    $region2: #{tpu_custom_call.1} parent=1 // loop_pre_header
      _
    $region3: #{tpu_custom_call.1} parent=1 // loop_header
      %s26 = sphi 0, %s30
      %p27 = scmp.ge.s32.totalorder %s26, 6
      %s33 = sphi 0, %s45
      %s34 = sphi 0, %s41
      %s35 = sphi 0, %s33
      %s36 = sphi 0, %s34
      %s37 = sphi 0, %s35
      %s38 = sphi 0, %s36
      %s50 = sphi 0, %s52
      %s53 = sphi 0, %s50
      %s54 = sphi 0, %s53
      %s70 = sphi 0, %s54
      %s86 = sphi 0, %s88
      %s89 = sphi 0, %s86
      %s90 = sphi 0, %s89
      %s106 = sphi 0, %s90
      %s122 = sphi 0, %s124
      %s125 = sphi 0, %s122
      %s126 = sphi 0, %s125
      %s142 = sphi 0, %s126
      %s146 = sphi 0, %s146
      %s148 = sphi 0, %s146
      %s149 = sphi 0, %s148
      %s163 = sphi 0, %s149
      %s167 = sphi 0, %s167
      %s169 = sphi 0, %s167
      %s170 = sphi 0, %s169
      %s184 = sphi 0, %s170
      %s188 = sphi 0, %s188
      %s190 = sphi 0, %s188
      %s191 = sphi 0, %s190
      %s205 = sphi 0, %s191
      %s209 = sphi 0, %s209
      %s211 = sphi 0, %s209
      %s212 = sphi 0, %s211
      %s226 = sphi 0, %s212
      %s230 = sphi 0, %s230
      %s232 = sphi 0, %s230
      %s233 = sphi 0, %s232
      %s247 = sphi 0, %s233
      %s251 = sphi 0, %s251
      %s253 = sphi 0, %s251
      %s254 = sphi 0, %s253
      %s268 = sphi 0, %s254
      %s276 = sphi 0, %s278
      %s279 = sphi 0, %s276
      %s280 = sphi 0, %s279
      %s296 = sphi 0, %s280
    $region4: #{tpu_custom_call.1} parent=1 // loop_header_branch
      %29 = sbr.rel (%p27) target = $region8
    $region5: #{tpu_custom_call.1} parent=1 // loop_body
      %s31 = ssub.s32 %s26, 1
      %s32 = ssub.s32 %s26, 2
      %s39 = sadd.s32 1, %s34
      %p40 = scmp.ge.s32.totalorder %s39, 2
      %s41 = scalar_select %p40, 0, %s39
      %s42 = sadd.s32 1, %s33
      %s43 = scalar_select %p40, %s42, %s33
      %p44 = scmp.ge.s32.totalorder %s43, 2
      %s45 = scalar_select %p44, 0, %s43
      %s46 = ssub.s32 %s33, %s45
      %s47 = ssub.s32 %s34, %s41
      %s48 = sor.u32 %s46, %s47
      %p49 = scmp.eq.s32.totalorder %s48, 0
      %s51 = sadd.s32 %s50, 1
      %s52 = scalar_select %p49, %s50, %s51
      %p55 = pneg %p49
      %p56 = scmp.eq.s32.totalorder %s26, 3
      %p57 = por %p55, %p56
      %p58 = scmp.ne.s32.totalorder %s50, %s53
      %p59 = scmp.eq.s32.totalorder %s26, 0
      %p60 = por %p58, %p59
      %p61 = scmp.ne.s32.totalorder %s50, %s53
      %p62 = scmp.eq.s32.totalorder %s31, 3
      %p63 = por %p61, %p62
      %p64 = scmp.ne.s32.totalorder %s53, %s54
      %p65 = scmp.eq.s32.totalorder %s31, 0
      %p66 = por %p64, %p65
      %p67 = scmp.ne.s32.totalorder %s53, %s54
      %p68 = scmp.eq.s32.totalorder %s32, 3
      %p69 = por %p67, %p68
      %p71 = scmp.ne.s32.totalorder %s54, %s70
      %p72 = scmp.eq.s32.totalorder %s32, 0
      %p73 = por %p71, %p72
      %s74 = smul.u32 %s34, 16
      %s75 = ssub.s32 %s74, 1
      %p76 = scmp.gt.s32.totalorder %s75, 0
      %s77 = scalar_select %p76, %s75, 0
      %s78 = smul.u32 %s41, 16
      %s79 = ssub.s32 %s78, 1
      %p80 = scmp.gt.s32.totalorder %s79, 0
      %s81 = scalar_select %p80, %s79, 0
      %s82 = ssub.s32 %s33, %s45
      %s83 = ssub.s32 %s77, %s81
      %s84 = sor.u32 %s82, %s83
      %p85 = scmp.eq.s32.totalorder %s84, 0
      %s87 = sadd.s32 %s86, 1
      %s88 = scalar_select %p85, %s86, %s87
      %p91 = pneg %p85
      %p92 = scmp.eq.s32.totalorder %s26, 3
      %p93 = por %p91, %p92
      %p94 = scmp.ne.s32.totalorder %s86, %s89
      %p95 = scmp.eq.s32.totalorder %s26, 0
      %p96 = por %p94, %p95
      %p97 = scmp.ne.s32.totalorder %s86, %s89
      %p98 = scmp.eq.s32.totalorder %s31, 3
      %p99 = por %p97, %p98
      %p100 = scmp.ne.s32.totalorder %s89, %s90
      %p101 = scmp.eq.s32.totalorder %s31, 0
      %p102 = por %p100, %p101
      %p103 = scmp.ne.s32.totalorder %s89, %s90
      %p104 = scmp.eq.s32.totalorder %s32, 3
      %p105 = por %p103, %p104
      %p107 = scmp.ne.s32.totalorder %s90, %s106
      %p108 = scmp.eq.s32.totalorder %s32, 0
      %p109 = por %p107, %p108
      %s110 = sadd.s32 %s34, 1
      %s111 = smul.u32 %s110, 16
      %p112 = scmp.lt.s32.totalorder %s111, 31
      %s113 = scalar_select %p112, %s111, 31
      %s114 = sadd.s32 %s41, 1
      %s115 = smul.u32 %s114, 16
      %p116 = scmp.lt.s32.totalorder %s115, 31
      %s117 = scalar_select %p116, %s115, 31
      %s118 = ssub.s32 %s33, %s45
      %s119 = ssub.s32 %s113, %s117
      %s120 = sor.u32 %s118, %s119
      %p121 = scmp.eq.s32.totalorder %s120, 0
      %s123 = sadd.s32 %s122, 1
      %s124 = scalar_select %p121, %s122, %s123
      %p127 = pneg %p121
      %p128 = scmp.eq.s32.totalorder %s26, 3
      %p129 = por %p127, %p128
      %p130 = scmp.ne.s32.totalorder %s122, %s125
      %p131 = scmp.eq.s32.totalorder %s26, 0
      %p132 = por %p130, %p131
      %p133 = scmp.ne.s32.totalorder %s122, %s125
      %p134 = scmp.eq.s32.totalorder %s31, 3
      %p135 = por %p133, %p134
      %p136 = scmp.ne.s32.totalorder %s125, %s126
      %p137 = scmp.eq.s32.totalorder %s31, 0
      %p138 = por %p136, %p137
      %p139 = scmp.ne.s32.totalorder %s125, %s126
      %p140 = scmp.eq.s32.totalorder %s32, 3
      %p141 = por %p139, %p140
      %p143 = scmp.ne.s32.totalorder %s126, %s142
      %p144 = scmp.eq.s32.totalorder %s32, 0
      %p145 = por %p143, %p144
      %s147 = sadd.s32 %s146, 1
      %p150 = scmp.eq.s32.totalorder %s26, 3
      %p151 = scmp.ne.s32.totalorder %s146, %s148
      %p152 = scmp.eq.s32.totalorder %s26, 0
      %p153 = por %p151, %p152
      %p154 = scmp.ne.s32.totalorder %s146, %s148
      %p155 = scmp.eq.s32.totalorder %s31, 3
      %p156 = por %p154, %p155
      %p157 = scmp.ne.s32.totalorder %s148, %s149
      %p158 = scmp.eq.s32.totalorder %s31, 0
      %p159 = por %p157, %p158
      %p160 = scmp.ne.s32.totalorder %s148, %s149
      %p161 = scmp.eq.s32.totalorder %s32, 3
      %p162 = por %p160, %p161
      %p164 = scmp.ne.s32.totalorder %s149, %s163
      %p165 = scmp.eq.s32.totalorder %s32, 0
      %p166 = por %p164, %p165
      %s168 = sadd.s32 %s167, 1
      %p171 = scmp.eq.s32.totalorder %s26, 3
      %p172 = scmp.ne.s32.totalorder %s167, %s169
      %p173 = scmp.eq.s32.totalorder %s26, 0
      %p174 = por %p172, %p173
      %p175 = scmp.ne.s32.totalorder %s167, %s169
      %p176 = scmp.eq.s32.totalorder %s31, 3
      %p177 = por %p175, %p176
      %p178 = scmp.ne.s32.totalorder %s169, %s170
      %p179 = scmp.eq.s32.totalorder %s31, 0
      %p180 = por %p178, %p179
      %p181 = scmp.ne.s32.totalorder %s169, %s170
      %p182 = scmp.eq.s32.totalorder %s32, 3
      %p183 = por %p181, %p182
      %p185 = scmp.ne.s32.totalorder %s170, %s184
      %p186 = scmp.eq.s32.totalorder %s32, 0
      %p187 = por %p185, %p186
      %s189 = sadd.s32 %s188, 1
      %p192 = scmp.eq.s32.totalorder %s26, 3
      %p193 = scmp.ne.s32.totalorder %s188, %s190
      %p194 = scmp.eq.s32.totalorder %s26, 0
      %p195 = por %p193, %p194
      %p196 = scmp.ne.s32.totalorder %s188, %s190
      %p197 = scmp.eq.s32.totalorder %s31, 3
      %p198 = por %p196, %p197
      %p199 = scmp.ne.s32.totalorder %s190, %s191
      %p200 = scmp.eq.s32.totalorder %s31, 0
      %p201 = por %p199, %p200
      %p202 = scmp.ne.s32.totalorder %s190, %s191
      %p203 = scmp.eq.s32.totalorder %s32, 3
      %p204 = por %p202, %p203
      %p206 = scmp.ne.s32.totalorder %s191, %s205
      %p207 = scmp.eq.s32.totalorder %s32, 0
      %p208 = por %p206, %p207
      %s210 = sadd.s32 %s209, 1
      %p213 = scmp.eq.s32.totalorder %s26, 3
      %p214 = scmp.ne.s32.totalorder %s209, %s211
      %p215 = scmp.eq.s32.totalorder %s26, 0
      %p216 = por %p214, %p215
      %p217 = scmp.ne.s32.totalorder %s209, %s211
      %p218 = scmp.eq.s32.totalorder %s31, 3
      %p219 = por %p217, %p218
      %p220 = scmp.ne.s32.totalorder %s211, %s212
      %p221 = scmp.eq.s32.totalorder %s31, 0
      %p222 = por %p220, %p221
      %p223 = scmp.ne.s32.totalorder %s211, %s212
      %p224 = scmp.eq.s32.totalorder %s32, 3
      %p225 = por %p223, %p224
      %p227 = scmp.ne.s32.totalorder %s212, %s226
      %p228 = scmp.eq.s32.totalorder %s32, 0
      %p229 = por %p227, %p228
      %s231 = sadd.s32 %s230, 1
      %p234 = scmp.eq.s32.totalorder %s26, 3
      %p235 = scmp.ne.s32.totalorder %s230, %s232
      %p236 = scmp.eq.s32.totalorder %s26, 0
      %p237 = por %p235, %p236
      %p238 = scmp.ne.s32.totalorder %s230, %s232
      %p239 = scmp.eq.s32.totalorder %s31, 3
      %p240 = por %p238, %p239
      %p241 = scmp.ne.s32.totalorder %s232, %s233
      %p242 = scmp.eq.s32.totalorder %s31, 0
      %p243 = por %p241, %p242
      %p244 = scmp.ne.s32.totalorder %s232, %s233
      %p245 = scmp.eq.s32.totalorder %s32, 3
      %p246 = por %p244, %p245
      %p248 = scmp.ne.s32.totalorder %s233, %s247
      %p249 = scmp.eq.s32.totalorder %s32, 0
      %p250 = por %p248, %p249
      %s252 = sadd.s32 %s251, 1
      %p255 = scmp.eq.s32.totalorder %s26, 3
      %p256 = scmp.ne.s32.totalorder %s251, %s253
      %p257 = scmp.eq.s32.totalorder %s26, 0
      %p258 = por %p256, %p257
      %p259 = scmp.ne.s32.totalorder %s251, %s253
      %p260 = scmp.eq.s32.totalorder %s31, 3
      %p261 = por %p259, %p260
      %p262 = scmp.ne.s32.totalorder %s253, %s254
      %p263 = scmp.eq.s32.totalorder %s31, 0
      %p264 = por %p262, %p263
      %p265 = scmp.ne.s32.totalorder %s253, %s254
      %p266 = scmp.eq.s32.totalorder %s32, 3
      %p267 = por %p265, %p266
      %p269 = scmp.ne.s32.totalorder %s254, %s268
      %p270 = scmp.eq.s32.totalorder %s32, 0
      %p271 = por %p269, %p270
      %s272 = ssub.s32 %s33, %s45
      %s273 = ssub.s32 %s34, %s41
      %s274 = sor.u32 %s272, %s273
      %p275 = scmp.eq.s32.totalorder %s274, 0
      %s277 = sadd.s32 %s276, 1
      %s278 = scalar_select %p275, %s276, %s277
      %p281 = pneg %p275
      %p282 = scmp.eq.s32.totalorder %s26, 3
      %p283 = por %p281, %p282
      %p284 = scmp.ne.s32.totalorder %s276, %s279
      %p285 = scmp.eq.s32.totalorder %s26, 0
      %p286 = por %p284, %p285
      %p287 = scmp.ne.s32.totalorder %s276, %s279
      %p288 = scmp.eq.s32.totalorder %s31, 3
      %p289 = por %p287, %p288
      %p290 = scmp.ne.s32.totalorder %s279, %s280
      %p291 = scmp.eq.s32.totalorder %s31, 0
      %p292 = por %p290, %p291
      %p293 = scmp.ne.s32.totalorder %s279, %s280
      %p294 = scmp.eq.s32.totalorder %s32, 3
      %p295 = por %p293, %p294
      %p297 = scmp.ne.s32.totalorder %s280, %s296
      %p298 = scmp.eq.s32.totalorder %s32, 0
      %p299 = por %p297, %p298
      %p300 = scmp.le.s32.totalorder 1, %s26
      %p301 = scmp.lt.s32.totalorder %s26, 5
      %p302 = pnand %p300, %p301
      %p303 = pneg %p302
      // Predicated region
      $region9: #{tpu_custom_call.1} parent=5 // pred_check
        _
      $region10: #{tpu_custom_call.1} parent=5 // pred_check_branch
        %305 = sbr.rel (%p302) target = $region12
      $region11: #{tpu_custom_call.1} parent=5 // pred_region
        %s306 = ssub.s32 %s26, 1
        // Predicated region
        $region13: #{tpu_custom_call.1} parent=11 // pred_check
          %p307 = pneg %p159
        $region14: #{tpu_custom_call.1} parent=11 // pred_check_branch
          %309 = sbr.rel (%p307) target = $region16
        $region15: #{tpu_custom_call.1} parent=11 // pred_region
          %s311 = ssub.s32 4096, 4096
          %312 = vsyncadd [#allocation11], %s311
          %s313 = sshll.u32 [#allocation10], 4
          %s314 = int_to_ptr.vmem [resolvable:$true] %s313
          %319 = dma.hbm_to_vmem [thread:$0]  %s3, 4096, %s314, [#allocation11], 256, 256, 16
        $region16: #{tpu_custom_call.1} parent=11 // pred_fallthru
          _
        // Predicated region
        $region17: #{tpu_custom_call.1} parent=11 // pred_check
          %p320 = pneg %p180
        $region18: #{tpu_custom_call.1} parent=11 // pred_check_branch
          %322 = sbr.rel (%p320) target = $region20
        $region19: #{tpu_custom_call.1} parent=11 // pred_region
          _
        $region20: #{tpu_custom_call.1} parent=11 // pred_fallthru
          _
        // Predicated region
        $region21: #{tpu_custom_call.1} parent=11 // pred_check
          %p323 = pneg %p201
        $region22: #{tpu_custom_call.1} parent=11 // pred_check_branch
          %325 = sbr.rel (%p323) target = $region24
        $region23: #{tpu_custom_call.1} parent=11 // pred_region
          %s327 = ssub.s32 9728, 9728
          %328 = vsyncadd [#allocation11], %s327
          %s329 = sshll.u32 [#allocation12], 4
          %s330 = int_to_ptr.vmem [resolvable:$true] %s329
          %335 = dma.hbm_to_vmem [thread:$0]  %s5, 9728, %s330, [#allocation11], 256, 256, 16
        $region24: #{tpu_custom_call.1} parent=11 // pred_fallthru
          _
        // Predicated region
        $region25: #{tpu_custom_call.1} parent=11 // pred_check
          %p336 = pneg %p222
        $region26: #{tpu_custom_call.1} parent=11 // pred_check_branch
          %338 = sbr.rel (%p336) target = $region28
        $region27: #{tpu_custom_call.1} parent=11 // pred_region
          _
        $region28: #{tpu_custom_call.1} parent=11 // pred_fallthru
          _
        // Predicated region
        $region29: #{tpu_custom_call.1} parent=11 // pred_check
          %p339 = pneg %p243
        $region30: #{tpu_custom_call.1} parent=11 // pred_check_branch
          %341 = sbr.rel (%p339) target = $region32
        $region31: #{tpu_custom_call.1} parent=11 // pred_region
          %s343 = ssub.s32 2048, 2048
          %344 = vsyncadd [#allocation14], %s343
          %s345 = sshll.u32 [#allocation13], 4
          %s346 = int_to_ptr.vmem [resolvable:$true] %s345
          %351 = dma.hbm_to_vmem [thread:$0]  %s7, 2048, %s346, [#allocation14], 64, 64, 4
        $region32: #{tpu_custom_call.1} parent=11 // pred_fallthru
          _
        // Predicated region
        $region33: #{tpu_custom_call.1} parent=11 // pred_check
          %p352 = pneg %p264
        $region34: #{tpu_custom_call.1} parent=11 // pred_check_branch
          %354 = sbr.rel (%p352) target = $region36
        $region35: #{tpu_custom_call.1} parent=11 // pred_region
          _
        $region36: #{tpu_custom_call.1} parent=11 // pred_fallthru
          _
      $region12: #{tpu_custom_call.1} parent=5 // pred_fallthru
        _
      %p355 = scmp.lt.s32.totalorder %s26, 4
      // Predicated region
      $region37: #{tpu_custom_call.1} parent=5 // pred_check
        %p356 = pneg %p355
      $region38: #{tpu_custom_call.1} parent=5 // pred_check_branch
        %358 = sbr.rel (%p356) target = $region40
      $region39: #{tpu_custom_call.1} parent=5 // pred_region
        // Predicated region
        $region41: #{tpu_custom_call.1} parent=39 // pred_check
          %p359 = pneg %p60
        $region42: #{tpu_custom_call.1} parent=39 // pred_check_branch
          %361 = sbr.rel (%p359) target = $region44
        $region43: #{tpu_custom_call.1} parent=39 // pred_region
          %s362 = sand.u32 %s50, 1
          %s363 = scalar_lea.sflag [#allocation5], %s362
          %s364 = sand.u32 %s50, 1
          %s365 = smul.addr %s364, 256
          %s366 = scalar_lea.vmem [#allocation4], %s365
          %s367 = smul.u32 32, %s34
          %s369 = ssub.s32 4096, 4096
          %370 = vsyncadd %s363, %s369
          %s371 = smul.addr %s33, 64
          %s372 = sadd.s32 %s367, %s371
          %s373 = smul.addr %s372, 128
          %s374 = scalar_lea.hbm %s0, %s373
          %s375 = sshll.u32 %s366, 4
          %s376 = int_to_ptr.vmem [resolvable:$true] %s375
          %381 = dma.hbm_to_vmem [thread:$0]  %s374, 4096, %s376, %s363, 128, 128, 8
        $region44: #{tpu_custom_call.1} parent=39 // pred_fallthru
          _
        // Predicated region
        $region45: #{tpu_custom_call.1} parent=39 // pred_check
          %p382 = pneg %p96
        $region46: #{tpu_custom_call.1} parent=39 // pred_check_branch
          %384 = sbr.rel (%p382) target = $region48
        $region47: #{tpu_custom_call.1} parent=39 // pred_region
          %s385 = sand.u32 %s26, 1
          %s386 = scalar_lea.sflag [#allocation8], %s385
          %s387 = sand.u32 %s86, 1
          %s388 = smul.addr %s387, 16
          %s389 = scalar_lea.vmem [#allocation7], %s388
          %s390 = smul.u32 %s34, 16
          %s391 = ssub.s32 %s390, 1
          %p392 = scmp.gt.s32.totalorder %s391, 0
          %s393 = scalar_select %p392, %s391, 0
          %s394 = smul.u32 2, %s393
          %s396 = ssub.s32 256, 256
          %397 = vsyncadd %s386, %s396
          %s398 = smul.addr %s33, 64
          %s399 = sadd.s32 %s394, %s398
          %s400 = smul.addr %s399, 128
          %s401 = scalar_lea.hbm %s1, %s400
          %s402 = sshll.u32 %s389, 4
          %s403 = int_to_ptr.vmem [resolvable:$true] %s402
          %408 = dma.hbm_to_vmem [thread:$0]  %s401, 256, %s403, %s386, 128, 128, 8
        $region48: #{tpu_custom_call.1} parent=39 // pred_fallthru
          _
        // Predicated region
        $region49: #{tpu_custom_call.1} parent=39 // pred_check
          %p409 = pneg %p132
        $region50: #{tpu_custom_call.1} parent=39 // pred_check_branch
          %411 = sbr.rel (%p409) target = $region52
        $region51: #{tpu_custom_call.1} parent=39 // pred_region
          %s412 = sand.u32 %s26, 1
          %s413 = scalar_lea.sflag [#allocation8], %s412
          %s414 = sand.u32 %s122, 1
          %s415 = smul.addr %s414, 16
          %s416 = scalar_lea.vmem [#allocation9], %s415
          %s417 = sadd.s32 %s34, 1
          %s418 = smul.u32 %s417, 16
          %p419 = scmp.lt.s32.totalorder %s418, 31
          %s420 = scalar_select %p419, %s418, 31
          %s421 = smul.u32 2, %s420
          %s423 = ssub.s32 256, 256
          %424 = vsyncadd %s413, %s423
          %s425 = smul.addr %s33, 64
          %s426 = sadd.s32 %s421, %s425
          %s427 = smul.addr %s426, 128
          %s428 = scalar_lea.hbm %s2, %s427
          %s429 = sshll.u32 %s416, 4
          %s430 = int_to_ptr.vmem [resolvable:$true] %s429
          %435 = dma.hbm_to_vmem [thread:$0]  %s428, 256, %s430, %s413, 128, 128, 8
        $region52: #{tpu_custom_call.1} parent=39 // pred_fallthru
          _
      $region40: #{tpu_custom_call.1} parent=5 // pred_fallthru
        _
      %p436 = scmp.le.s32.totalorder 1, %s26
      %p437 = scmp.lt.s32.totalorder %s26, 5
      %p438 = pnand %p436, %p437
      %p439 = pneg %p438
      // Predicated region
      $region53: #{tpu_custom_call.1} parent=5 // pred_check
        _
      $region54: #{tpu_custom_call.1} parent=5 // pred_check_branch
        %441 = sbr.rel (%p438) target = $region56
      $region55: #{tpu_custom_call.1} parent=5 // pred_region
        %s442 = ssub.s32 %s26, 1
        %s443 = sand.u32 %s53, 1
        %s444 = scalar_lea.sflag [#allocation5], %s443
        %s445 = sand.u32 %s53, 1
        %s446 = smul.addr %s445, 256
        %s447 = scalar_lea.vmem [#allocation4], %s446
        // Predicated region
        $region57: #{tpu_custom_call.1} parent=55 // pred_check
          %p448 = pneg %p66
        $region58: #{tpu_custom_call.1} parent=55 // pred_check_branch
          %450 = sbr.rel (%p448) target = $region60
        $region59: #{tpu_custom_call.1} parent=55 // pred_region
          %451 = dma.done %s444, 4096
        $region60: #{tpu_custom_call.1} parent=55 // pred_fallthru
          _
        %s452 = sand.u32 %s31, 1
        %s453 = scalar_lea.sflag [#allocation8], %s452
        %s454 = sand.u32 %s89, 1
        %s455 = smul.addr %s454, 16
        %s456 = scalar_lea.vmem [#allocation7], %s455
        // Predicated region
        $region61: #{tpu_custom_call.1} parent=55 // pred_check
          %p457 = pneg %p102
        $region62: #{tpu_custom_call.1} parent=55 // pred_check_branch
          %459 = sbr.rel (%p457) target = $region64
        $region63: #{tpu_custom_call.1} parent=55 // pred_region
          %460 = dma.done %s453, 256
        $region64: #{tpu_custom_call.1} parent=55 // pred_fallthru
          _
        %s461 = sand.u32 %s31, 1
        %s462 = scalar_lea.sflag [#allocation8], %s461
        %s463 = sand.u32 %s125, 1
        %s464 = smul.addr %s463, 16
        %s465 = scalar_lea.vmem [#allocation9], %s464
        // Predicated region
        $region65: #{tpu_custom_call.1} parent=55 // pred_check
          %p466 = pneg %p138
        $region66: #{tpu_custom_call.1} parent=55 // pred_check_branch
          %468 = sbr.rel (%p466) target = $region68
        $region67: #{tpu_custom_call.1} parent=55 // pred_region
          %469 = dma.done %s462, 256
        $region68: #{tpu_custom_call.1} parent=55 // pred_fallthru
          _
        // Predicated region
        $region69: #{tpu_custom_call.1} parent=55 // pred_check
          %p470 = pneg %p159
        $region70: #{tpu_custom_call.1} parent=55 // pred_check_branch
          %472 = sbr.rel (%p470) target = $region72
        $region71: #{tpu_custom_call.1} parent=55 // pred_region
          %473 = dma.done [#allocation11], 4096
        $region72: #{tpu_custom_call.1} parent=55 // pred_fallthru
          _
        // Predicated region
        $region73: #{tpu_custom_call.1} parent=55 // pred_check
          %p474 = pneg %p201
        $region74: #{tpu_custom_call.1} parent=55 // pred_check_branch
          %476 = sbr.rel (%p474) target = $region76
        $region75: #{tpu_custom_call.1} parent=55 // pred_region
          %477 = dma.done [#allocation11], 9728
        $region76: #{tpu_custom_call.1} parent=55 // pred_fallthru
          _
        // Predicated region
        $region77: #{tpu_custom_call.1} parent=55 // pred_check
          %p478 = pneg %p243
        $region78: #{tpu_custom_call.1} parent=55 // pred_check_branch
          %480 = sbr.rel (%p478) target = $region80
        $region79: #{tpu_custom_call.1} parent=55 // pred_region
          %481 = dma.done [#allocation14], 2048
        $region80: #{tpu_custom_call.1} parent=55 // pred_fallthru
          _
        %s482 = sand.u32 %s53, 1
        %s483 = scalar_lea.sflag [#allocation5], %s482
        %s484 = sand.u32 %s53, 1
        %s485 = smul.addr %s484, 256
        %s486 = scalar_lea.vmem [#allocation4], %s485
        %p487 = pneg %p66
        %p488 = pneg %p63
        %s489 = sand.u32 %s31, 1
        %s490 = scalar_lea.sflag [#allocation8], %s489
        %s491 = sand.u32 %s89, 1
        %s492 = smul.addr %s491, 16
        %s493 = scalar_lea.vmem [#allocation7], %s492
        %p494 = pneg %p102
        %p495 = pneg %p99
        %s496 = sand.u32 %s31, 1
        %s497 = scalar_lea.sflag [#allocation8], %s496
        %s498 = sand.u32 %s125, 1
        %s499 = smul.addr %s498, 16
        %s500 = scalar_lea.vmem [#allocation9], %s499
        %p501 = pneg %p138
        %p502 = pneg %p135
        %p503 = pneg %p159
        %p504 = pneg %p156
        %p505 = pneg %p180
        %p506 = pneg %p177
        %p507 = pneg %p201
        %p508 = pneg %p198
        %p509 = pneg %p222
        %p510 = pneg %p219
        %p511 = pneg %p243
        %p512 = pneg %p240
        %p513 = pneg %p264
        %p514 = pneg %p261
        %p515 = pneg %p292
        %p516 = pneg %p289
        %s517 = sand.u32 %s279, 1
        %s518 = scalar_lea.sflag [#allocation6], %s517
        %s519 = sand.u32 %s279, 1
        %s520 = smul.addr %s519, 256
        %s521 = scalar_lea.vmem [#allocation15], %s520
        %s522 = smul.u32 32, %s36
        %s523 = smul.u32 %s36, 16
        %s524 = ssub.s32 %s523, 1
        %p525 = scmp.gt.s32.totalorder %s524, 0
        %s526 = scalar_select %p525, %s524, 0
        %s527 = smul.u32 2, %s526
        %s528 = sadd.s32 %s36, 1
        %s529 = smul.u32 %s528, 16
        %p530 = scmp.lt.s32.totalorder %s529, 31
        %s531 = scalar_select %p530, %s529, 31
        %s532 = smul.u32 2, %s531
        %s533 = smul.u32 32, %s36
        %v535 = vld [vmem:[%s456] sm:$0xff]
        %v536 = vld [vmem:[%s456 + $0x8] sm:$0xff]
        %v537 = vld [vmem:[%s447] sm:$0xff]
        %v538 = vld [vmem:[%s447 + $0x8] sm:$0xff]
        %v539 = vld [vmem:[%s447 + $0x10] sm:$0xff]
        %v540 = vld [vmem:[%s447 + $0x18] sm:$0xff]
        %v541 = vld [vmem:[%s447 + $0x20] sm:$0xff]
        %v542 = vld [vmem:[%s447 + $0x28] sm:$0xff]
        %v543 = vld [vmem:[%s447 + $0x30] sm:$0xff]
        %v544 = vld [vmem:[%s447 + $0x38] sm:$0xff]
        %v545 = vld [vmem:[%s447 + $0x40] sm:$0xff]
        %v546 = vld [vmem:[%s447 + $0x48] sm:$0xff]
        %v547 = vld [vmem:[%s447 + $0x50] sm:$0xff]
        %v548 = vld [vmem:[%s447 + $0x58] sm:$0xff]
        %v549 = vld [vmem:[%s447 + $0x60] sm:$0xff]
        %v550 = vld [vmem:[%s447 + $0x68] sm:$0xff]
        %v551 = vld [vmem:[%s447 + $0x70] sm:$0xff]
        %v552 = vld [vmem:[%s447 + $0x78] sm:$0xff]
        %v553 = vld [vmem:[%s447 + $0x80] sm:$0xff]
        %v554 = vld [vmem:[%s447 + $0x88] sm:$0xff]
        %v555 = vld [vmem:[%s447 + $0x90] sm:$0xff]
        %v556 = vld [vmem:[%s447 + $0x98] sm:$0xff]
        %v557 = vld [vmem:[%s447 + $0xa0] sm:$0xff]
        %v558 = vld [vmem:[%s447 + $0xa8] sm:$0xff]
        %v559 = vld [vmem:[%s447 + $0xb0] sm:$0xff]
        %v560 = vld [vmem:[%s447 + $0xb8] sm:$0xff]
        %v561 = vld [vmem:[%s447 + $0xc0] sm:$0xff]
        %v562 = vld [vmem:[%s447 + $0xc8] sm:$0xff]
        %v563 = vld [vmem:[%s447 + $0xd0] sm:$0xff]
        %v564 = vld [vmem:[%s447 + $0xd8] sm:$0xff]
        %v565 = vld [vmem:[%s447 + $0xe0] sm:$0xff]
        %v566 = vld [vmem:[%s447 + $0xe8] sm:$0xff]
        %v567 = vld [vmem:[%s447 + $0xf0] sm:$0xff]
        %v568 = vld [vmem:[%s447 + $0xf8] sm:$0xff]
        %v569 = vld [vmem:[%s465] sm:$0xff]
        %v570 = vld [vmem:[%s465 + $0x8] sm:$0xff]
        %571 = vadd.xlane.f32.xlu0 %v535
        %v572 = vpop.xlane.xlu0 %571
        %573 = vadd.xlane.f32.xlu0 %v536
        %v574 = vpop.xlane.xlu0 %573
        %575 = vadd.xlane.f32.xlu0 %v537
        %v576 = vpop.xlane.xlu0 %575
        %577 = vadd.xlane.f32.xlu0 %v538
        %v578 = vpop.xlane.xlu0 %577
        %579 = vadd.xlane.f32.xlu0 %v539
        %v580 = vpop.xlane.xlu0 %579
        %581 = vadd.xlane.f32.xlu0 %v540
        %v582 = vpop.xlane.xlu0 %581
        %583 = vadd.xlane.f32.xlu0 %v541
        %v584 = vpop.xlane.xlu0 %583
        %585 = vadd.xlane.f32.xlu0 %v542
        %v586 = vpop.xlane.xlu0 %585
        %587 = vadd.xlane.f32.xlu0 %v543
        %v588 = vpop.xlane.xlu0 %587
        %589 = vadd.xlane.f32.xlu0 %v544
        %v590 = vpop.xlane.xlu0 %589
        %591 = vadd.xlane.f32.xlu0 %v545
        %v592 = vpop.xlane.xlu0 %591
        %593 = vadd.xlane.f32.xlu0 %v546
        %v594 = vpop.xlane.xlu0 %593
        %595 = vadd.xlane.f32.xlu0 %v547
        %v596 = vpop.xlane.xlu0 %595
        %597 = vadd.xlane.f32.xlu0 %v548
        %v598 = vpop.xlane.xlu0 %597
        %599 = vadd.xlane.f32.xlu0 %v549
        %v600 = vpop.xlane.xlu0 %599
        %601 = vadd.xlane.f32.xlu0 %v550
        %v602 = vpop.xlane.xlu0 %601
        %603 = vadd.xlane.f32.xlu0 %v551
        %v604 = vpop.xlane.xlu0 %603
        %605 = vadd.xlane.f32.xlu0 %v552
        %v606 = vpop.xlane.xlu0 %605
        %607 = vadd.xlane.f32.xlu0 %v553
        %v608 = vpop.xlane.xlu0 %607
        %609 = vadd.xlane.f32.xlu0 %v554
        %v610 = vpop.xlane.xlu0 %609
        %611 = vadd.xlane.f32.xlu0 %v555
        %v612 = vpop.xlane.xlu0 %611
        %613 = vadd.xlane.f32.xlu0 %v556
        %v614 = vpop.xlane.xlu0 %613
        %615 = vadd.xlane.f32.xlu0 %v557
        %v616 = vpop.xlane.xlu0 %615
        %617 = vadd.xlane.f32.xlu0 %v558
        %v618 = vpop.xlane.xlu0 %617
        %619 = vadd.xlane.f32.xlu0 %v559
        %v620 = vpop.xlane.xlu0 %619
        %621 = vadd.xlane.f32.xlu0 %v560
        %v622 = vpop.xlane.xlu0 %621
        %623 = vadd.xlane.f32.xlu0 %v561
        %v624 = vpop.xlane.xlu0 %623
        %625 = vadd.xlane.f32.xlu0 %v562
        %v626 = vpop.xlane.xlu0 %625
        %627 = vadd.xlane.f32.xlu0 %v563
        %v628 = vpop.xlane.xlu0 %627
        %629 = vadd.xlane.f32.xlu0 %v564
        %v630 = vpop.xlane.xlu0 %629
        %631 = vadd.xlane.f32.xlu0 %v565
        %v632 = vpop.xlane.xlu0 %631
        %633 = vadd.xlane.f32.xlu0 %v566
        %v634 = vpop.xlane.xlu0 %633
        %635 = vadd.xlane.f32.xlu0 %v567
        %v636 = vpop.xlane.xlu0 %635
        %637 = vadd.xlane.f32.xlu0 %v568
        %v638 = vpop.xlane.xlu0 %637
        %639 = vadd.xlane.f32.xlu0 %v569
        %v640 = vpop.xlane.xlu0 %639
        %641 = vadd.xlane.f32.xlu0 %v570
        %v642 = vpop.xlane.xlu0 %641
        %v643 = vrcp.pop 128.0
        %v644 = vmul.f32 %v572, %v643
        %v645 = vmul.f32 %v574, %v643
        %v646 = vmul.f32 %v576, %v643
        %v647 = vmul.f32 %v578, %v643
        %v648 = vmul.f32 %v580, %v643
        %v649 = vmul.f32 %v582, %v643
        %v650 = vmul.f32 %v584, %v643
        %v651 = vmul.f32 %v586, %v643
        %v652 = vmul.f32 %v588, %v643
        %v653 = vmul.f32 %v590, %v643
        %v654 = vmul.f32 %v592, %v643
        %v655 = vmul.f32 %v594, %v643
        %v656 = vmul.f32 %v596, %v643
        %v657 = vmul.f32 %v598, %v643
        %v658 = vmul.f32 %v600, %v643
        %v659 = vmul.f32 %v602, %v643
        %v660 = vmul.f32 %v604, %v643
        %v661 = vmul.f32 %v606, %v643
        %v662 = vmul.f32 %v608, %v643
        %v663 = vmul.f32 %v610, %v643
        %v664 = vmul.f32 %v612, %v643
        %v665 = vmul.f32 %v614, %v643
        %v666 = vmul.f32 %v616, %v643
        %v667 = vmul.f32 %v618, %v643
        %v668 = vmul.f32 %v620, %v643
        %v669 = vmul.f32 %v622, %v643
        %v670 = vmul.f32 %v624, %v643
        %v671 = vmul.f32 %v626, %v643
        %v672 = vmul.f32 %v628, %v643
        %v673 = vmul.f32 %v630, %v643
        %v674 = vmul.f32 %v632, %v643
        %v675 = vmul.f32 %v634, %v643
        %v676 = vmul.f32 %v636, %v643
        %v677 = vmul.f32 %v638, %v643
        %v678 = vmul.f32 %v640, %v643
        %v679 = vmul.f32 %v642, %v643
        %v680 = vsub.f32 %v535, %v644
        %v681 = vsub.f32 %v536, %v645
        %v682 = vsub.f32 %v537, %v646
        %v683 = vsub.f32 %v538, %v647
        %v684 = vsub.f32 %v539, %v648
        %v685 = vsub.f32 %v540, %v649
        %v686 = vsub.f32 %v541, %v650
        %v687 = vsub.f32 %v542, %v651
        %v688 = vsub.f32 %v543, %v652
        %v689 = vsub.f32 %v544, %v653
        %v690 = vsub.f32 %v545, %v654
        %v691 = vsub.f32 %v546, %v655
        %v692 = vsub.f32 %v547, %v656
        %v693 = vsub.f32 %v548, %v657
        %v694 = vsub.f32 %v549, %v658
        %v695 = vsub.f32 %v550, %v659
        %v696 = vsub.f32 %v551, %v660
        %v697 = vsub.f32 %v552, %v661
        %v698 = vsub.f32 %v553, %v662
        %v699 = vsub.f32 %v554, %v663
        %v700 = vsub.f32 %v555, %v664
        %v701 = vsub.f32 %v556, %v665
        %v702 = vsub.f32 %v557, %v666
        %v703 = vsub.f32 %v558, %v667
        %v704 = vsub.f32 %v559, %v668
        %v705 = vsub.f32 %v560, %v669
        %v706 = vsub.f32 %v561, %v670
        %v707 = vsub.f32 %v562, %v671
        %v708 = vsub.f32 %v563, %v672
        %v709 = vsub.f32 %v564, %v673
        %v710 = vsub.f32 %v565, %v674
        %v711 = vsub.f32 %v566, %v675
        %v712 = vsub.f32 %v567, %v676
        %v713 = vsub.f32 %v568, %v677
        %v714 = vsub.f32 %v569, %v678
        %v715 = vsub.f32 %v570, %v679
        %v716 = vmul.f32 %v680, %v680
        %v717 = vmul.f32 %v681, %v681
        %v718 = vmul.f32 %v682, %v682
        %v719 = vmul.f32 %v683, %v683
        %v720 = vmul.f32 %v684, %v684
        %v721 = vmul.f32 %v685, %v685
        %v722 = vmul.f32 %v686, %v686
        %v723 = vmul.f32 %v687, %v687
        %v724 = vmul.f32 %v688, %v688
        %v725 = vmul.f32 %v689, %v689
        %v726 = vmul.f32 %v690, %v690
        %v727 = vmul.f32 %v691, %v691
        %v728 = vmul.f32 %v692, %v692
        %v729 = vmul.f32 %v693, %v693
        %v730 = vmul.f32 %v694, %v694
        %v731 = vmul.f32 %v695, %v695
        %v732 = vmul.f32 %v696, %v696
        %v733 = vmul.f32 %v697, %v697
        %v734 = vmul.f32 %v698, %v698
        %v735 = vmul.f32 %v699, %v699
        %v736 = vmul.f32 %v700, %v700
        %v737 = vmul.f32 %v701, %v701
        %v738 = vmul.f32 %v702, %v702
        %v739 = vmul.f32 %v703, %v703
        %v740 = vmul.f32 %v704, %v704
        %v741 = vmul.f32 %v705, %v705
        %v742 = vmul.f32 %v706, %v706
        %v743 = vmul.f32 %v707, %v707
        %v744 = vmul.f32 %v708, %v708
        %v745 = vmul.f32 %v709, %v709
        %v746 = vmul.f32 %v710, %v710
        %v747 = vmul.f32 %v711, %v711
        %v748 = vmul.f32 %v712, %v712
        %v749 = vmul.f32 %v713, %v713
        %v750 = vmul.f32 %v714, %v714
        %v751 = vmul.f32 %v715, %v715
        %752 = vadd.xlane.f32.xlu0 %v716
        %v753 = vpop.xlane.xlu0 %752
        %754 = vadd.xlane.f32.xlu0 %v717
        %v755 = vpop.xlane.xlu0 %754
        %756 = vadd.xlane.f32.xlu0 %v718
        %v757 = vpop.xlane.xlu0 %756
        %758 = vadd.xlane.f32.xlu0 %v719
        %v759 = vpop.xlane.xlu0 %758
        %760 = vadd.xlane.f32.xlu0 %v720
        %v761 = vpop.xlane.xlu0 %760
        %762 = vadd.xlane.f32.xlu0 %v721
        %v763 = vpop.xlane.xlu0 %762
        %764 = vadd.xlane.f32.xlu0 %v722
        %v765 = vpop.xlane.xlu0 %764
        %766 = vadd.xlane.f32.xlu0 %v723
        %v767 = vpop.xlane.xlu0 %766
        %768 = vadd.xlane.f32.xlu0 %v724
        %v769 = vpop.xlane.xlu0 %768
        %770 = vadd.xlane.f32.xlu0 %v725
        %v771 = vpop.xlane.xlu0 %770
        %772 = vadd.xlane.f32.xlu0 %v726
        %v773 = vpop.xlane.xlu0 %772
        %774 = vadd.xlane.f32.xlu0 %v727
        %v775 = vpop.xlane.xlu0 %774
        %776 = vadd.xlane.f32.xlu0 %v728
        %v777 = vpop.xlane.xlu0 %776
        %778 = vadd.xlane.f32.xlu0 %v729
        %v779 = vpop.xlane.xlu0 %778
        %780 = vadd.xlane.f32.xlu0 %v730
        %v781 = vpop.xlane.xlu0 %780
        %782 = vadd.xlane.f32.xlu0 %v731
        %v783 = vpop.xlane.xlu0 %782
        %784 = vadd.xlane.f32.xlu0 %v732
        %v785 = vpop.xlane.xlu0 %784
        %786 = vadd.xlane.f32.xlu0 %v733
        %v787 = vpop.xlane.xlu0 %786
        %788 = vadd.xlane.f32.xlu0 %v734
        %v789 = vpop.xlane.xlu0 %788
        %790 = vadd.xlane.f32.xlu0 %v735
        %v791 = vpop.xlane.xlu0 %790
        %792 = vadd.xlane.f32.xlu0 %v736
        %v793 = vpop.xlane.xlu0 %792
        %794 = vadd.xlane.f32.xlu0 %v737
        %v795 = vpop.xlane.xlu0 %794
        %796 = vadd.xlane.f32.xlu0 %v738
        %v797 = vpop.xlane.xlu0 %796
        %798 = vadd.xlane.f32.xlu0 %v739
        %v799 = vpop.xlane.xlu0 %798
        %800 = vadd.xlane.f32.xlu0 %v740
        %v801 = vpop.xlane.xlu0 %800
        %802 = vadd.xlane.f32.xlu0 %v741
        %v803 = vpop.xlane.xlu0 %802
        %804 = vadd.xlane.f32.xlu0 %v742
        %v805 = vpop.xlane.xlu0 %804
        %806 = vadd.xlane.f32.xlu0 %v743
        %v807 = vpop.xlane.xlu0 %806
        %808 = vadd.xlane.f32.xlu0 %v744
        %v809 = vpop.xlane.xlu0 %808
        %810 = vadd.xlane.f32.xlu0 %v745
        %v811 = vpop.xlane.xlu0 %810
        %812 = vadd.xlane.f32.xlu0 %v746
        %v813 = vpop.xlane.xlu0 %812
        %814 = vadd.xlane.f32.xlu0 %v747
        %v815 = vpop.xlane.xlu0 %814
        %816 = vadd.xlane.f32.xlu0 %v748
        %v817 = vpop.xlane.xlu0 %816
        %818 = vadd.xlane.f32.xlu0 %v749
        %v819 = vpop.xlane.xlu0 %818
        %820 = vadd.xlane.f32.xlu0 %v750
        %v821 = vpop.xlane.xlu0 %820
        %822 = vadd.xlane.f32.xlu0 %v751
        %v823 = vpop.xlane.xlu0 %822
        %v824 = vmul.f32 %v753, %v643
        %v825 = vmul.f32 %v755, %v643
        %v826 = vmul.f32 %v757, %v643
        %v827 = vmul.f32 %v759, %v643
        %v828 = vmul.f32 %v761, %v643
        %v829 = vmul.f32 %v763, %v643
        %v830 = vmul.f32 %v765, %v643
        %v831 = vmul.f32 %v767, %v643
        %v832 = vmul.f32 %v769, %v643
        %v833 = vmul.f32 %v771, %v643
        %v834 = vmul.f32 %v773, %v643
        %v835 = vmul.f32 %v775, %v643
        %v836 = vmul.f32 %v777, %v643
        %v837 = vmul.f32 %v779, %v643
        %v838 = vmul.f32 %v781, %v643
        %v839 = vmul.f32 %v783, %v643
        %v840 = vmul.f32 %v785, %v643
        %v841 = vmul.f32 %v787, %v643
        %v842 = vmul.f32 %v789, %v643
        %v843 = vmul.f32 %v791, %v643
        %v844 = vmul.f32 %v793, %v643
        %v845 = vmul.f32 %v795, %v643
        %v846 = vmul.f32 %v797, %v643
        %v847 = vmul.f32 %v799, %v643
        %v848 = vmul.f32 %v801, %v643
        %v849 = vmul.f32 %v803, %v643
        %v850 = vmul.f32 %v805, %v643
        %v851 = vmul.f32 %v807, %v643
        %v852 = vmul.f32 %v809, %v643
        %v853 = vmul.f32 %v811, %v643
        %v854 = vmul.f32 %v813, %v643
        %v855 = vmul.f32 %v815, %v643
        %v856 = vmul.f32 %v817, %v643
        %v857 = vmul.f32 %v819, %v643
        %v858 = vmul.f32 %v821, %v643
        %v859 = vmul.f32 %v823, %v643
        %v860 = vadd.f32 %v824, 1e-05
        %v861 = vadd.f32 %v825, 1e-05
        %v862 = vadd.f32 %v826, 1e-05
        %v863 = vadd.f32 %v827, 1e-05
        %v864 = vadd.f32 %v828, 1e-05
        %v865 = vadd.f32 %v829, 1e-05
        %v866 = vadd.f32 %v830, 1e-05
        %v867 = vadd.f32 %v831, 1e-05
        %v868 = vadd.f32 %v832, 1e-05
        %v869 = vadd.f32 %v833, 1e-05
        %v870 = vadd.f32 %v834, 1e-05
        %v871 = vadd.f32 %v835, 1e-05
        %v872 = vadd.f32 %v836, 1e-05
        %v873 = vadd.f32 %v837, 1e-05
        %v874 = vadd.f32 %v838, 1e-05
        %v875 = vadd.f32 %v839, 1e-05
        %v876 = vadd.f32 %v840, 1e-05
        %v877 = vadd.f32 %v841, 1e-05
        %v878 = vadd.f32 %v842, 1e-05
        %v879 = vadd.f32 %v843, 1e-05
        %v880 = vadd.f32 %v844, 1e-05
        %v881 = vadd.f32 %v845, 1e-05
        %v882 = vadd.f32 %v846, 1e-05
        %v883 = vadd.f32 %v847, 1e-05
        %v884 = vadd.f32 %v848, 1e-05
        %v885 = vadd.f32 %v849, 1e-05
        %v886 = vadd.f32 %v850, 1e-05
        %v887 = vadd.f32 %v851, 1e-05
        %v888 = vadd.f32 %v852, 1e-05
        %v889 = vadd.f32 %v853, 1e-05
        %v890 = vadd.f32 %v854, 1e-05
        %v891 = vadd.f32 %v855, 1e-05
        %v892 = vadd.f32 %v856, 1e-05
        %v893 = vadd.f32 %v857, 1e-05
        %v894 = vadd.f32 %v858, 1e-05
        %v895 = vadd.f32 %v859, 1e-05
        %v896 = vrsqrt.pop %v860
        %v897 = vrsqrt.pop %v861
        %v898 = vrsqrt.pop %v862
        %v899 = vrsqrt.pop %v863
        %v900 = vrsqrt.pop %v864
        %v901 = vrsqrt.pop %v865
        %v902 = vrsqrt.pop %v866
        %v903 = vrsqrt.pop %v867
        %v904 = vrsqrt.pop %v868
        %v905 = vrsqrt.pop %v869
        %v906 = vrsqrt.pop %v870
        %v907 = vrsqrt.pop %v871
        %v908 = vrsqrt.pop %v872
        %v909 = vrsqrt.pop %v873
        %v910 = vrsqrt.pop %v874
        %v911 = vrsqrt.pop %v875
        %v912 = vrsqrt.pop %v876
        %v913 = vrsqrt.pop %v877
        %v914 = vrsqrt.pop %v878
        %v915 = vrsqrt.pop %v879
        %v916 = vrsqrt.pop %v880
        %v917 = vrsqrt.pop %v881
        %v918 = vrsqrt.pop %v882
        %v919 = vrsqrt.pop %v883
        %v920 = vrsqrt.pop %v884
        %v921 = vrsqrt.pop %v885
        %v922 = vrsqrt.pop %v886
        %v923 = vrsqrt.pop %v887
        %v924 = vrsqrt.pop %v888
        %v925 = vrsqrt.pop %v889
        %v926 = vrsqrt.pop %v890
        %v927 = vrsqrt.pop %v891
        %v928 = vrsqrt.pop %v892
        %v929 = vrsqrt.pop %v893
        %v930 = vrsqrt.pop %v894
        %v931 = vrsqrt.pop %v895
        %v932 = vmul.f32 %v680, %v896
        %v933 = vmul.f32 %v681, %v897
        %v934 = vmul.f32 %v682, %v898
        %v935 = vmul.f32 %v683, %v899
        %v936 = vmul.f32 %v684, %v900
        %v937 = vmul.f32 %v685, %v901
        %v938 = vmul.f32 %v686, %v902
        %v939 = vmul.f32 %v687, %v903
        %v940 = vmul.f32 %v688, %v904
        %v941 = vmul.f32 %v689, %v905
        %v942 = vmul.f32 %v690, %v906
        %v943 = vmul.f32 %v691, %v907
        %v944 = vmul.f32 %v692, %v908
        %v945 = vmul.f32 %v693, %v909
        %v946 = vmul.f32 %v694, %v910
        %v947 = vmul.f32 %v695, %v911
        %v948 = vmul.f32 %v696, %v912
        %v949 = vmul.f32 %v697, %v913
        %v950 = vmul.f32 %v698, %v914
        %v951 = vmul.f32 %v699, %v915
        %v952 = vmul.f32 %v700, %v916
        %v953 = vmul.f32 %v701, %v917
        %v954 = vmul.f32 %v702, %v918
        %v955 = vmul.f32 %v703, %v919
        %v956 = vmul.f32 %v704, %v920
        %v957 = vmul.f32 %v705, %v921
        %v958 = vmul.f32 %v706, %v922
        %v959 = vmul.f32 %v707, %v923
        %v960 = vmul.f32 %v708, %v924
        %v961 = vmul.f32 %v709, %v925
        %v962 = vmul.f32 %v710, %v926
        %v963 = vmul.f32 %v711, %v927
        %v964 = vmul.f32 %v712, %v928
        %v965 = vmul.f32 %v713, %v929
        %v966 = vmul.f32 %v714, %v930
        %v967 = vmul.f32 %v715, %v931
        %v968 = vpack.c.bf16 %v933, %v932
        %v969 = vpack.c.bf16 %v935, %v934
        %v970 = vpack.c.bf16 %v937, %v936
        %v971 = vpack.c.bf16 %v939, %v938
        %v972 = vpack.c.bf16 %v941, %v940
        %v973 = vpack.c.bf16 %v943, %v942
        %v974 = vpack.c.bf16 %v945, %v944
        %v975 = vpack.c.bf16 %v947, %v946
        %v976 = vpack.c.bf16 %v949, %v948
        %v977 = vpack.c.bf16 %v951, %v950
        %v978 = vpack.c.bf16 %v953, %v952
        %v979 = vpack.c.bf16 %v955, %v954
        %v980 = vpack.c.bf16 %v957, %v956
        %v981 = vpack.c.bf16 %v959, %v958
        %v982 = vpack.c.bf16 %v961, %v960
        %v983 = vpack.c.bf16 %v963, %v962
        %v984 = vpack.c.bf16 %v965, %v964
        %v985 = vpack.c.bf16 %v967, %v966
        %v986 = vld [vmem:[#allocation10] sm:$0xff]
        %v987 = vld [vmem:[#allocation10 + $0x8] sm:$0xff]
        %v988 = vld [vmem:[#allocation10 + $0x10] sm:$0xff]
        %v989 = vld [vmem:[#allocation10 + $0x18] sm:$0xff]
        %v990 = vld [vmem:[#allocation10 + $0x20] sm:$0xff]
        %v991 = vld [vmem:[#allocation10 + $0x28] sm:$0xff]
        %v992 = vld [vmem:[#allocation10 + $0x30] sm:$0xff]
        %v993 = vld [vmem:[#allocation10 + $0x38] sm:$0xff]
        %v994 = vld [vmem:[#allocation10 + $0x40] sm:$0xff]
        %v995 = vld [vmem:[#allocation10 + $0x48] sm:$0xff]
        %v996 = vld [vmem:[#allocation10 + $0x50] sm:$0xff]
        %v997 = vld [vmem:[#allocation10 + $0x58] sm:$0xff]
        %v998 = vld [vmem:[#allocation10 + $0x60] sm:$0xff]
        %v999 = vld [vmem:[#allocation10 + $0x68] sm:$0xff]
        %v1000 = vld [vmem:[#allocation10 + $0x70] sm:$0xff]
        %v1001 = vld [vmem:[#allocation10 + $0x78] sm:$0xff]
        %v1002 = vld [vmem:[#allocation10 + $0x80] sm:$0xff]
        %v1003 = vld [vmem:[#allocation10 + $0x88] sm:$0xff]
        %v1004 = vld [vmem:[#allocation10 + $0x90] sm:$0xff]
        %v1005 = vld [vmem:[#allocation10 + $0x98] sm:$0xff]
        %v1006 = vld [vmem:[#allocation10 + $0xa0] sm:$0xff]
        %v1007 = vld [vmem:[#allocation10 + $0xa8] sm:$0xff]
        %v1008 = vld [vmem:[#allocation10 + $0xb0] sm:$0xff]
        %v1009 = vld [vmem:[#allocation10 + $0xb8] sm:$0xff]
        %v1010 = vld [vmem:[#allocation10 + $0xc0] sm:$0xff]
        %v1011 = vld [vmem:[#allocation10 + $0xc8] sm:$0xff]
        %v1012 = vld [vmem:[#allocation10 + $0xd0] sm:$0xff]
        %v1013 = vld [vmem:[#allocation10 + $0xd8] sm:$0xff]
        %v1014 = vld [vmem:[#allocation10 + $0xe0] sm:$0xff]
        %v1015 = vld [vmem:[#allocation10 + $0xe8] sm:$0xff]
        %v1016 = vld [vmem:[#allocation10 + $0xf0] sm:$0xff]
        %v1017 = vld [vmem:[#allocation10 + $0xf8] sm:$0xff]
        %v1018 = vld [vmem:[%s4] sm:$0xf]
        %v1020 = vlaneseq
        %v1021 = vshrl.u32 %v1020, 7
        %v1022 = vsub.s32 0, %v1021
        %v1023 = vrot.slane %v1018, %v1022
        %v1024 = vlaneseq
        %v1025 = vshrl.u32 %v1024, 7
        %v1026 = vsub.s32 1, %v1025
        %v1027 = vrot.slane %v1018, %v1026
        %v1028 = vlaneseq
        %v1029 = vshrl.u32 %v1028, 7
        %v1030 = vsub.s32 2, %v1029
        %v1031 = vrot.slane %v1018, %v1030
        %v1032 = vlaneseq
        %v1033 = vshrl.u32 %v1032, 7
        %v1034 = vsub.s32 3, %v1033
        %v1035 = vrot.slane %v1018, %v1034
        %v1072 = vunpack.c.l.b16 %v986
        %v1073 = vunpack.c.h.b16 %v986
        %v1074 = vunpack.c.l.b16 %v987
        %v1075 = vunpack.c.h.b16 %v987
        %v1076 = vunpack.c.l.b16 %v988
        %v1077 = vunpack.c.h.b16 %v988
        %v1078 = vunpack.c.l.b16 %v989
        %v1079 = vunpack.c.h.b16 %v989
        %v1080 = vunpack.c.l.b16 %v990
        %v1081 = vunpack.c.h.b16 %v990
        %v1082 = vunpack.c.l.b16 %v991
        %v1083 = vunpack.c.h.b16 %v991
        %v1084 = vunpack.c.l.b16 %v992
        %v1085 = vunpack.c.h.b16 %v992
        %v1086 = vunpack.c.l.b16 %v993
        %v1087 = vunpack.c.h.b16 %v993
        %v1088 = vunpack.c.l.b16 %v994
        %v1089 = vunpack.c.h.b16 %v994
        %v1090 = vunpack.c.l.b16 %v995
        %v1091 = vunpack.c.h.b16 %v995
        %v1092 = vunpack.c.l.b16 %v996
        %v1093 = vunpack.c.h.b16 %v996
        %v1094 = vunpack.c.l.b16 %v997
        %v1095 = vunpack.c.h.b16 %v997
        %v1096 = vunpack.c.l.b16 %v998
        %v1097 = vunpack.c.h.b16 %v998
        %v1098 = vunpack.c.l.b16 %v999
        %v1099 = vunpack.c.h.b16 %v999
        %v1100 = vunpack.c.l.b16 %v1000
        %v1101 = vunpack.c.h.b16 %v1000
        %v1102 = vunpack.c.l.b16 %v1001
        %v1103 = vunpack.c.h.b16 %v1001
        %v1104 = vunpack.c.l.b16 %v1002
        %v1105 = vunpack.c.h.b16 %v1002
        %v1106 = vunpack.c.l.b16 %v1003
        %v1107 = vunpack.c.h.b16 %v1003
        %v1108 = vunpack.c.l.b16 %v1004
        %v1109 = vunpack.c.h.b16 %v1004
        %v1110 = vunpack.c.l.b16 %v1005
        %v1111 = vunpack.c.h.b16 %v1005
        %v1112 = vunpack.c.l.b16 %v1006
        %v1113 = vunpack.c.h.b16 %v1006
        %v1114 = vunpack.c.l.b16 %v1007
        %v1115 = vunpack.c.h.b16 %v1007
        %v1116 = vunpack.c.l.b16 %v1008
        %v1117 = vunpack.c.h.b16 %v1008
        %v1118 = vunpack.c.l.b16 %v1009
        %v1119 = vunpack.c.h.b16 %v1009
        %v1120 = vunpack.c.l.b16 %v1010
        %v1121 = vunpack.c.h.b16 %v1010
        %v1122 = vunpack.c.l.b16 %v1011
        %v1123 = vunpack.c.h.b16 %v1011
        %v1124 = vunpack.c.l.b16 %v1012
        %v1125 = vunpack.c.h.b16 %v1012
        %v1126 = vunpack.c.l.b16 %v1013
        %v1127 = vunpack.c.h.b16 %v1013
        %v1128 = vunpack.c.l.b16 %v1014
        %v1129 = vunpack.c.h.b16 %v1014
        %v1130 = vunpack.c.l.b16 %v1015
        %v1131 = vunpack.c.h.b16 %v1015
        %v1132 = vunpack.c.l.b16 %v1016
        %v1133 = vunpack.c.h.b16 %v1016
        %v1134 = vunpack.c.l.b16 %v1017
        %v1135 = vunpack.c.h.b16 %v1017
        %v1136 = vpack.c.b16 %v1076, %v1072
        %v1137 = vpack.c.b16 %v1077, %v1073
        %v1138 = vpack.c.b16 %v1078, %v1074
        %v1139 = vpack.c.b16 %v1079, %v1075
        %v1140 = vpack.c.b16 %v1084, %v1080
        %v1141 = vpack.c.b16 %v1085, %v1081
        %v1142 = vpack.c.b16 %v1086, %v1082
        %v1143 = vpack.c.b16 %v1087, %v1083
        %v1144 = vpack.c.b16 %v1092, %v1088
        %v1145 = vpack.c.b16 %v1093, %v1089
        %v1146 = vpack.c.b16 %v1094, %v1090
        %v1147 = vpack.c.b16 %v1095, %v1091
        %v1148 = vpack.c.b16 %v1100, %v1096
        %v1149 = vpack.c.b16 %v1101, %v1097
        %v1150 = vpack.c.b16 %v1102, %v1098
        %v1151 = vpack.c.b16 %v1103, %v1099
        %v1152 = vpack.c.b16 %v1108, %v1104
        %v1153 = vpack.c.b16 %v1109, %v1105
        %v1154 = vpack.c.b16 %v1110, %v1106
        %v1155 = vpack.c.b16 %v1111, %v1107
        %v1156 = vpack.c.b16 %v1116, %v1112
        %v1157 = vpack.c.b16 %v1117, %v1113
        %v1158 = vpack.c.b16 %v1118, %v1114
        %v1159 = vpack.c.b16 %v1119, %v1115
        %v1160 = vpack.c.b16 %v1124, %v1120
        %v1161 = vpack.c.b16 %v1125, %v1121
        %v1162 = vpack.c.b16 %v1126, %v1122
        %v1163 = vpack.c.b16 %v1127, %v1123
        %v1164 = vpack.c.b16 %v1132, %v1128
        %v1165 = vpack.c.b16 %v1133, %v1129
        %v1166 = vpack.c.b16 %v1134, %v1130
        %v1167 = vpack.c.b16 %v1135, %v1131
        %1200 = vmatprep.subr.bf16.mxu0 %v1137
        %1201 = vmatpush1.bf16.msra.mxu0 %v1136
        %1202 = vmatprep.subr.bf16.mxu0 %v1141
        %1203 = vmatpush1.bf16.msra.mxu0 %v1140
        %1204 = vmatprep.subr.bf16.mxu0 %v1145
        %1205 = vmatpush1.bf16.msra.mxu0 %v1144
        %1206 = vmatprep.subr.bf16.mxu0 %v1149
        %1207 = vmatpush1.bf16.msra.mxu0 %v1148
        %1208 = vmatprep.subr.bf16.mxu0 %v1153
        %1209 = vmatpush1.bf16.msra.mxu0 %v1152
        %1210 = vmatprep.subr.bf16.mxu0 %v1157
        %1211 = vmatpush1.bf16.msra.mxu0 %v1156
        %1212 = vmatprep.subr.bf16.mxu0 %v1161
        %1213 = vmatpush1.bf16.msra.mxu0 %v1160
        %1214 = vmatprep.subr.bf16.mxu0 %v1165
        %1215 = vmatpush1.bf16.msra.mxu0 %v1164
        %1216 = vmatprep.subr.bf16.mxu0 0
        %1217 = vmatpush1.bf16.msra.mxu0 0
        %1218 = vmatprep.subr.bf16.mxu0 0
        %1219 = vmatpush1.bf16.msra.mxu0 0
        %1220 = vmatprep.subr.bf16.mxu0 0
        %1221 = vmatpush1.bf16.msra.mxu0 0
        %1222 = vmatprep.subr.bf16.mxu0 0
        %1223 = vmatpush1.bf16.msra.mxu0 0
        %1224 = vmatprep.subr.bf16.mxu0 0
        %1225 = vmatpush1.bf16.msra.mxu0 0
        %1226 = vmatprep.subr.bf16.mxu0 0
        %1227 = vmatpush1.bf16.msra.mxu0 0
        %1228 = vmatprep.subr.bf16.mxu0 0
        %1229 = vmatpush1.bf16.msra.mxu0 0
        %1230 = vmatprep.subr.bf16.mxu0 0
        %1231 = vmatpush1.bf16.msra.mxu0 0
        %1232 = vmatprep.mubr.bf16.mxu0 0
        %1233 = vmatmul.mubr.bf16.gmra.mrb[0].mxu0 %v968
        %v1234 = vpop.f32.mrb[0].mxu0
        %v1235 = vadd.f32 %v1023, %v1234
        %v1236 = vpop.f32.mrb[0].mxu0
        %v1237 = vadd.f32 %v1027, %v1236
        %v1238 = vpop.f32.mrb[0].mxu0
        %v1239 = vadd.f32 %v1023, %v1238
        %v1240 = vpop.f32.mrb[0].mxu0
        %v1241 = vadd.f32 %v1027, %v1240
        %1242 = vmatprep.mubr.bf16.mxu0 0
        %1243 = vmatmul.mubr.bf16.gmra.mrb[0].mxu0 %v969
        %v1244 = vpop.f32.mrb[0].mxu0
        %v1245 = vadd.f32 %v1023, %v1244
        %v1246 = vpop.f32.mrb[0].mxu0
        %v1247 = vadd.f32 %v1027, %v1246
        %v1248 = vpop.f32.mrb[0].mxu0
        %v1249 = vadd.f32 %v1023, %v1248
        %v1250 = vpop.f32.mrb[0].mxu0
        %v1251 = vadd.f32 %v1027, %v1250
        %1252 = vmatprep.mubr.bf16.mxu0 0
        %1253 = vmatmul.mubr.bf16.gmra.mrb[0].mxu0 %v970
        %v1254 = vpop.f32.mrb[0].mxu0
        %v1255 = vadd.f32 %v1023, %v1254
        %v1256 = vpop.f32.mrb[0].mxu0
        %v1257 = vadd.f32 %v1027, %v1256
        %v1258 = vpop.f32.mrb[0].mxu0
        %v1259 = vadd.f32 %v1023, %v1258
        %v1260 = vpop.f32.mrb[0].mxu0
        %v1261 = vadd.f32 %v1027, %v1260
        %1262 = vmatprep.mubr.bf16.mxu0 0
        %1263 = vmatmul.mubr.bf16.gmra.mrb[0].mxu0 %v971
        %v1264 = vpop.f32.mrb[0].mxu0
        %v1265 = vadd.f32 %v1023, %v1264
        %v1266 = vpop.f32.mrb[0].mxu0
        %v1267 = vadd.f32 %v1027, %v1266
        %v1268 = vpop.f32.mrb[0].mxu0
        %v1269 = vadd.f32 %v1023, %v1268
        %v1270 = vpop.f32.mrb[0].mxu0
        %v1271 = vadd.f32 %v1027, %v1270
        %1272 = vmatprep.mubr.bf16.mxu0 0
        %1273 = vmatmul.mubr.bf16.gmra.mrb[0].mxu0 %v972
        %v1274 = vpop.f32.mrb[0].mxu0
        %v1275 = vadd.f32 %v1023, %v1274
        %v1276 = vpop.f32.mrb[0].mxu0
        %v1277 = vadd.f32 %v1027, %v1276
        %v1278 = vpop.f32.mrb[0].mxu0
        %v1279 = vadd.f32 %v1023, %v1278
        %v1280 = vpop.f32.mrb[0].mxu0
        %v1281 = vadd.f32 %v1027, %v1280
        %1282 = vmatprep.mubr.bf16.mxu0 0
        %1283 = vmatmul.mubr.bf16.gmra.mrb[0].mxu0 %v973
        %v1284 = vpop.f32.mrb[0].mxu0
        %v1285 = vadd.f32 %v1023, %v1284
        %v1286 = vpop.f32.mrb[0].mxu0
        %v1287 = vadd.f32 %v1027, %v1286
        %v1288 = vpop.f32.mrb[0].mxu0
        %v1289 = vadd.f32 %v1023, %v1288
        %v1290 = vpop.f32.mrb[0].mxu0
        %v1291 = vadd.f32 %v1027, %v1290
        %1292 = vmatprep.mubr.bf16.mxu0 0
        %1293 = vmatmul.mubr.bf16.gmra.mrb[0].mxu0 %v974
        %v1294 = vpop.f32.mrb[0].mxu0
        %v1295 = vadd.f32 %v1023, %v1294
        %v1296 = vpop.f32.mrb[0].mxu0
        %v1297 = vadd.f32 %v1027, %v1296
        %v1298 = vpop.f32.mrb[0].mxu0
        %v1299 = vadd.f32 %v1023, %v1298
        %v1300 = vpop.f32.mrb[0].mxu0
        %v1301 = vadd.f32 %v1027, %v1300
        %1302 = vmatprep.mubr.bf16.mxu0 0
        %1303 = vmatmul.mubr.bf16.gmra.mrb[0].mxu0 %v975
        %v1304 = vpop.f32.mrb[0].mxu0
        %v1305 = vadd.f32 %v1023, %v1304
        %v1306 = vpop.f32.mrb[0].mxu0
        %v1307 = vadd.f32 %v1027, %v1306
        %v1308 = vpop.f32.mrb[0].mxu0
        %v1309 = vadd.f32 %v1023, %v1308
        %v1310 = vpop.f32.mrb[0].mxu0
        %v1311 = vadd.f32 %v1027, %v1310
        %1312 = vmatprep.mubr.bf16.mxu0 0
        %1313 = vmatmul.mubr.bf16.gmra.mrb[0].mxu0 %v976
        %v1314 = vpop.f32.mrb[0].mxu0
        %v1315 = vadd.f32 %v1023, %v1314
        %v1316 = vpop.f32.mrb[0].mxu0
        %v1317 = vadd.f32 %v1027, %v1316
        %v1318 = vpop.f32.mrb[0].mxu0
        %v1319 = vadd.f32 %v1023, %v1318
        %v1320 = vpop.f32.mrb[0].mxu0
        %v1321 = vadd.f32 %v1027, %v1320
        %1322 = vmatprep.mubr.bf16.mxu0 0
        %1323 = vmatmul.mubr.bf16.gmra.mrb[0].mxu0 %v977
        %v1324 = vpop.f32.mrb[0].mxu0
        %v1325 = vadd.f32 %v1023, %v1324
        %v1326 = vpop.f32.mrb[0].mxu0
        %v1327 = vadd.f32 %v1027, %v1326
        %v1328 = vpop.f32.mrb[0].mxu0
        %v1329 = vadd.f32 %v1023, %v1328
        %v1330 = vpop.f32.mrb[0].mxu0
        %v1331 = vadd.f32 %v1027, %v1330
        %1332 = vmatprep.mubr.bf16.mxu0 0
        %1333 = vmatmul.mubr.bf16.gmra.mrb[0].mxu0 %v978
        %v1334 = vpop.f32.mrb[0].mxu0
        %v1335 = vadd.f32 %v1023, %v1334
        %v1336 = vpop.f32.mrb[0].mxu0
        %v1337 = vadd.f32 %v1027, %v1336
        %v1338 = vpop.f32.mrb[0].mxu0
        %v1339 = vadd.f32 %v1023, %v1338
        %v1340 = vpop.f32.mrb[0].mxu0
        %v1341 = vadd.f32 %v1027, %v1340
        %1342 = vmatprep.mubr.bf16.mxu0 0
        %1343 = vmatmul.mubr.bf16.gmra.mrb[0].mxu0 %v979
        %v1344 = vpop.f32.mrb[0].mxu0
        %v1345 = vadd.f32 %v1023, %v1344
        %v1346 = vpop.f32.mrb[0].mxu0
        %v1347 = vadd.f32 %v1027, %v1346
        %v1348 = vpop.f32.mrb[0].mxu0
        %v1349 = vadd.f32 %v1023, %v1348
        %v1350 = vpop.f32.mrb[0].mxu0
        %v1351 = vadd.f32 %v1027, %v1350
        %1352 = vmatprep.mubr.bf16.mxu0 0
        %1353 = vmatmul.mubr.bf16.gmra.mrb[0].mxu0 %v980
        %v1354 = vpop.f32.mrb[0].mxu0
        %v1355 = vadd.f32 %v1023, %v1354
        %v1356 = vpop.f32.mrb[0].mxu0
        %v1357 = vadd.f32 %v1027, %v1356
        %v1358 = vpop.f32.mrb[0].mxu0
        %v1359 = vadd.f32 %v1023, %v1358
        %v1360 = vpop.f32.mrb[0].mxu0
        %v1361 = vadd.f32 %v1027, %v1360
        %1362 = vmatprep.mubr.bf16.mxu0 0
        %1363 = vmatmul.mubr.bf16.gmra.mrb[0].mxu0 %v981
        %v1364 = vpop.f32.mrb[0].mxu0
        %v1365 = vadd.f32 %v1023, %v1364
        %v1366 = vpop.f32.mrb[0].mxu0
        %v1367 = vadd.f32 %v1027, %v1366
        %v1368 = vpop.f32.mrb[0].mxu0
        %v1369 = vadd.f32 %v1023, %v1368
        %v1370 = vpop.f32.mrb[0].mxu0
        %v1371 = vadd.f32 %v1027, %v1370
        %1372 = vmatprep.mubr.bf16.mxu0 0
        %1373 = vmatmul.mubr.bf16.gmra.mrb[0].mxu0 %v982
        %v1374 = vpop.f32.mrb[0].mxu0
        %v1375 = vadd.f32 %v1023, %v1374
        %v1376 = vpop.f32.mrb[0].mxu0
        %v1377 = vadd.f32 %v1027, %v1376
        %v1378 = vpop.f32.mrb[0].mxu0
        %v1379 = vadd.f32 %v1023, %v1378
        %v1380 = vpop.f32.mrb[0].mxu0
        %v1381 = vadd.f32 %v1027, %v1380
        %1382 = vmatprep.mubr.bf16.mxu0 0
        %1383 = vmatmul.mubr.bf16.gmra.mrb[0].mxu0 %v983
        %v1384 = vpop.f32.mrb[0].mxu0
        %v1385 = vadd.f32 %v1023, %v1384
        %v1386 = vpop.f32.mrb[0].mxu0
        %v1387 = vadd.f32 %v1027, %v1386
        %v1388 = vpop.f32.mrb[0].mxu0
        %v1389 = vadd.f32 %v1023, %v1388
        %v1390 = vpop.f32.mrb[0].mxu0
        %v1391 = vadd.f32 %v1027, %v1390
        %1392 = vmatprep.mubr.bf16.mxu0 0
        %1393 = vmatmul.mubr.bf16.gmra.mrb[0].mxu0 %v984
        %v1394 = vpop.f32.mrb[0].mxu0
        %v1395 = vadd.f32 %v1023, %v1394
        %v1396 = vpop.f32.mrb[0].mxu0
        %v1397 = vadd.f32 %v1027, %v1396
        %v1398 = vpop.f32.mrb[0].mxu0
        %v1399 = vadd.f32 %v1023, %v1398
        %v1400 = vpop.f32.mrb[0].mxu0
        %v1401 = vadd.f32 %v1027, %v1400
        %1402 = vmatprep.mubr.bf16.mxu0 0
        %1403 = vmatmul.mubr.bf16.gmra.mrb[0].mxu0 %v985
        %v1404 = vpop.f32.mrb[0].mxu0
        %v1405 = vadd.f32 %v1023, %v1404
        %v1406 = vpop.f32.mrb[0].mxu0
        %v1407 = vadd.f32 %v1027, %v1406
        %v1408 = vpop.f32.mrb[0].mxu0
        %v1409 = vadd.f32 %v1023, %v1408
        %v1410 = vpop.f32.mrb[0].mxu0
        %v1411 = vadd.f32 %v1027, %v1410
        %1412 = vdwg.mxu0
        %1413 = vmatprep.subr.bf16.mxu0 %v1139
        %1414 = vmatpush1.bf16.msra.mxu0 %v1138
        %1415 = vmatprep.subr.bf16.mxu0 %v1143
        %1416 = vmatpush1.bf16.msra.mxu0 %v1142
        %1417 = vmatprep.subr.bf16.mxu0 %v1147
        %1418 = vmatpush1.bf16.msra.mxu0 %v1146
        %1419 = vmatprep.subr.bf16.mxu0 %v1151
        %1420 = vmatpush1.bf16.msra.mxu0 %v1150
        %1421 = vmatprep.subr.bf16.mxu0 %v1155
        %1422 = vmatpush1.bf16.msra.mxu0 %v1154
        %1423 = vmatprep.subr.bf16.mxu0 %v1159
        %1424 = vmatpush1.bf16.msra.mxu0 %v1158
        %1425 = vmatprep.subr.bf16.mxu0 %v1163
        %1426 = vmatpush1.bf16.msra.mxu0 %v1162
        %1427 = vmatprep.subr.bf16.mxu0 %v1167
        %1428 = vmatpush1.bf16.msra.mxu0 %v1166
        %1429 = vmatprep.subr.bf16.mxu0 0
        %1430 = vmatpush1.bf16.msra.mxu0 0
        %1431 = vmatprep.subr.bf16.mxu0 0
        %1432 = vmatpush1.bf16.msra.mxu0 0
        %1433 = vmatprep.subr.bf16.mxu0 0
        %1434 = vmatpush1.bf16.msra.mxu0 0
        %1435 = vmatprep.subr.bf16.mxu0 0
        %1436 = vmatpush1.bf16.msra.mxu0 0
        %1437 = vmatprep.subr.bf16.mxu0 0
        %1438 = vmatpush1.bf16.msra.mxu0 0
        %1439 = vmatprep.subr.bf16.mxu0 0
        %1440 = vmatpush1.bf16.msra.mxu0 0
        %1441 = vmatprep.subr.bf16.mxu0 0
        %1442 = vmatpush1.bf16.msra.mxu0 0
        %1443 = vmatprep.subr.bf16.mxu0 0
        %1444 = vmatpush1.bf16.msra.mxu0 0
        %1445 = vmatprep.mubr.bf16.mxu0 0
        %1446 = vmatmul.mubr.bf16.gmra.mrb[0].mxu0 %v968
        %v1447 = vpop.f32.mrb[0].mxu0
        %v1448 = vadd.f32 %v1031, %v1447
        %v1449 = vpop.f32.mrb[0].mxu0
        %v1450 = vadd.f32 %v1035, %v1449
        %v1451 = vpop.f32.mrb[0].mxu0
        %v1452 = vadd.f32 %v1031, %v1451
        %v1453 = vpop.f32.mrb[0].mxu0
        %v1454 = vadd.f32 %v1035, %v1453
        %1455 = vmatprep.mubr.bf16.mxu0 0
        %1456 = vmatmul.mubr.bf16.gmra.mrb[0].mxu0 %v969
        %v1457 = vpop.f32.mrb[0].mxu0
        %v1458 = vadd.f32 %v1031, %v1457
        %v1459 = vpop.f32.mrb[0].mxu0
        %v1460 = vadd.f32 %v1035, %v1459
        %v1461 = vpop.f32.mrb[0].mxu0
        %v1462 = vadd.f32 %v1031, %v1461
        %v1463 = vpop.f32.mrb[0].mxu0
        %v1464 = vadd.f32 %v1035, %v1463
        %1465 = vmatprep.mubr.bf16.mxu0 0
        %1466 = vmatmul.mubr.bf16.gmra.mrb[0].mxu0 %v970
        %v1467 = vpop.f32.mrb[0].mxu0
        %v1468 = vadd.f32 %v1031, %v1467
        %v1469 = vpop.f32.mrb[0].mxu0
        %v1470 = vadd.f32 %v1035, %v1469
        %v1471 = vpop.f32.mrb[0].mxu0
        %v1472 = vadd.f32 %v1031, %v1471
        %v1473 = vpop.f32.mrb[0].mxu0
        %v1474 = vadd.f32 %v1035, %v1473
        %1475 = vmatprep.mubr.bf16.mxu0 0
        %1476 = vmatmul.mubr.bf16.gmra.mrb[0].mxu0 %v971
        %v1477 = vpop.f32.mrb[0].mxu0
        %v1478 = vadd.f32 %v1031, %v1477
        %v1479 = vpop.f32.mrb[0].mxu0
        %v1480 = vadd.f32 %v1035, %v1479
        %v1481 = vpop.f32.mrb[0].mxu0
        %v1482 = vadd.f32 %v1031, %v1481
        %v1483 = vpop.f32.mrb[0].mxu0
        %v1484 = vadd.f32 %v1035, %v1483
        %1485 = vmatprep.mubr.bf16.mxu0 0
        %1486 = vmatmul.mubr.bf16.gmra.mrb[0].mxu0 %v972
        %v1487 = vpop.f32.mrb[0].mxu0
        %v1488 = vadd.f32 %v1031, %v1487
        %v1489 = vpop.f32.mrb[0].mxu0
        %v1490 = vadd.f32 %v1035, %v1489
        %v1491 = vpop.f32.mrb[0].mxu0
        %v1492 = vadd.f32 %v1031, %v1491
        %v1493 = vpop.f32.mrb[0].mxu0
        %v1494 = vadd.f32 %v1035, %v1493
        %1495 = vmatprep.mubr.bf16.mxu0 0
        %1496 = vmatmul.mubr.bf16.gmra.mrb[0].mxu0 %v973
        %v1497 = vpop.f32.mrb[0].mxu0
        %v1498 = vadd.f32 %v1031, %v1497
        %v1499 = vpop.f32.mrb[0].mxu0
        %v1500 = vadd.f32 %v1035, %v1499
        %v1501 = vpop.f32.mrb[0].mxu0
        %v1502 = vadd.f32 %v1031, %v1501
        %v1503 = vpop.f32.mrb[0].mxu0
        %v1504 = vadd.f32 %v1035, %v1503
        %1505 = vmatprep.mubr.bf16.mxu0 0
        %1506 = vmatmul.mubr.bf16.gmra.mrb[0].mxu0 %v974
        %v1507 = vpop.f32.mrb[0].mxu0
        %v1508 = vadd.f32 %v1031, %v1507
        %v1509 = vpop.f32.mrb[0].mxu0
        %v1510 = vadd.f32 %v1035, %v1509
        %v1511 = vpop.f32.mrb[0].mxu0
        %v1512 = vadd.f32 %v1031, %v1511
        %v1513 = vpop.f32.mrb[0].mxu0
        %v1514 = vadd.f32 %v1035, %v1513
        %1515 = vmatprep.mubr.bf16.mxu0 0
        %1516 = vmatmul.mubr.bf16.gmra.mrb[0].mxu0 %v975
        %v1517 = vpop.f32.mrb[0].mxu0
        %v1518 = vadd.f32 %v1031, %v1517
        %v1519 = vpop.f32.mrb[0].mxu0
        %v1520 = vadd.f32 %v1035, %v1519
        %v1521 = vpop.f32.mrb[0].mxu0
        %v1522 = vadd.f32 %v1031, %v1521
        %v1523 = vpop.f32.mrb[0].mxu0
        %v1524 = vadd.f32 %v1035, %v1523
        %1525 = vmatprep.mubr.bf16.mxu0 0
        %1526 = vmatmul.mubr.bf16.gmra.mrb[0].mxu0 %v976
        %v1527 = vpop.f32.mrb[0].mxu0
        %v1528 = vadd.f32 %v1031, %v1527
        %v1529 = vpop.f32.mrb[0].mxu0
        %v1530 = vadd.f32 %v1035, %v1529
        %v1531 = vpop.f32.mrb[0].mxu0
        %v1532 = vadd.f32 %v1031, %v1531
        %v1533 = vpop.f32.mrb[0].mxu0
        %v1534 = vadd.f32 %v1035, %v1533
        %1535 = vmatprep.mubr.bf16.mxu0 0
        %1536 = vmatmul.mubr.bf16.gmra.mrb[0].mxu0 %v977
        %v1537 = vpop.f32.mrb[0].mxu0
        %v1538 = vadd.f32 %v1031, %v1537
        %v1539 = vpop.f32.mrb[0].mxu0
        %v1540 = vadd.f32 %v1035, %v1539
        %v1541 = vpop.f32.mrb[0].mxu0
        %v1542 = vadd.f32 %v1031, %v1541
        %v1543 = vpop.f32.mrb[0].mxu0
        %v1544 = vadd.f32 %v1035, %v1543
        %1545 = vmatprep.mubr.bf16.mxu0 0
        %1546 = vmatmul.mubr.bf16.gmra.mrb[0].mxu0 %v978
        %v1547 = vpop.f32.mrb[0].mxu0
        %v1548 = vadd.f32 %v1031, %v1547
        %v1549 = vpop.f32.mrb[0].mxu0
        %v1550 = vadd.f32 %v1035, %v1549
        %v1551 = vpop.f32.mrb[0].mxu0
        %v1552 = vadd.f32 %v1031, %v1551
        %v1553 = vpop.f32.mrb[0].mxu0
        %v1554 = vadd.f32 %v1035, %v1553
        %1555 = vmatprep.mubr.bf16.mxu0 0
        %1556 = vmatmul.mubr.bf16.gmra.mrb[0].mxu0 %v979
        %v1557 = vpop.f32.mrb[0].mxu0
        %v1558 = vadd.f32 %v1031, %v1557
        %v1559 = vpop.f32.mrb[0].mxu0
        %v1560 = vadd.f32 %v1035, %v1559
        %v1561 = vpop.f32.mrb[0].mxu0
        %v1562 = vadd.f32 %v1031, %v1561
        %v1563 = vpop.f32.mrb[0].mxu0
        %v1564 = vadd.f32 %v1035, %v1563
        %1565 = vmatprep.mubr.bf16.mxu0 0
        %1566 = vmatmul.mubr.bf16.gmra.mrb[0].mxu0 %v980
        %v1567 = vpop.f32.mrb[0].mxu0
        %v1568 = vadd.f32 %v1031, %v1567
        %v1569 = vpop.f32.mrb[0].mxu0
        %v1570 = vadd.f32 %v1035, %v1569
        %v1571 = vpop.f32.mrb[0].mxu0
        %v1572 = vadd.f32 %v1031, %v1571
        %v1573 = vpop.f32.mrb[0].mxu0
        %v1574 = vadd.f32 %v1035, %v1573
        %1575 = vmatprep.mubr.bf16.mxu0 0
        %1576 = vmatmul.mubr.bf16.gmra.mrb[0].mxu0 %v981
        %v1577 = vpop.f32.mrb[0].mxu0
        %v1578 = vadd.f32 %v1031, %v1577
        %v1579 = vpop.f32.mrb[0].mxu0
        %v1580 = vadd.f32 %v1035, %v1579
        %v1581 = vpop.f32.mrb[0].mxu0
        %v1582 = vadd.f32 %v1031, %v1581
        %v1583 = vpop.f32.mrb[0].mxu0
        %v1584 = vadd.f32 %v1035, %v1583
        %1585 = vmatprep.mubr.bf16.mxu0 0
        %1586 = vmatmul.mubr.bf16.gmra.mrb[0].mxu0 %v982
        %v1587 = vpop.f32.mrb[0].mxu0
        %v1588 = vadd.f32 %v1031, %v1587
        %v1589 = vpop.f32.mrb[0].mxu0
        %v1590 = vadd.f32 %v1035, %v1589
        %v1591 = vpop.f32.mrb[0].mxu0
        %v1592 = vadd.f32 %v1031, %v1591
        %v1593 = vpop.f32.mrb[0].mxu0
        %v1594 = vadd.f32 %v1035, %v1593
        %1595 = vmatprep.mubr.bf16.mxu0 0
        %1596 = vmatmul.mubr.bf16.gmra.mrb[0].mxu0 %v983
        %v1597 = vpop.f32.mrb[0].mxu0
        %v1598 = vadd.f32 %v1031, %v1597
        %v1599 = vpop.f32.mrb[0].mxu0
        %v1600 = vadd.f32 %v1035, %v1599
        %v1601 = vpop.f32.mrb[0].mxu0
        %v1602 = vadd.f32 %v1031, %v1601
        %v1603 = vpop.f32.mrb[0].mxu0
        %v1604 = vadd.f32 %v1035, %v1603
        %1605 = vmatprep.mubr.bf16.mxu0 0
        %1606 = vmatmul.mubr.bf16.gmra.mrb[0].mxu0 %v984
        %v1607 = vpop.f32.mrb[0].mxu0
        %v1608 = vadd.f32 %v1031, %v1607
        %v1609 = vpop.f32.mrb[0].mxu0
        %v1610 = vadd.f32 %v1035, %v1609
        %v1611 = vpop.f32.mrb[0].mxu0
        %v1612 = vadd.f32 %v1031, %v1611
        %v1613 = vpop.f32.mrb[0].mxu0
        %v1614 = vadd.f32 %v1035, %v1613
        %1615 = vmatprep.mubr.bf16.mxu0 0
        %1616 = vmatmul.mubr.bf16.gmra.mrb[0].mxu0 %v985
        %v1617 = vpop.f32.mrb[0].mxu0
        %v1618 = vadd.f32 %v1031, %v1617
        %v1619 = vpop.f32.mrb[0].mxu0
        %v1620 = vadd.f32 %v1035, %v1619
        %v1621 = vpop.f32.mrb[0].mxu0
        %v1622 = vadd.f32 %v1031, %v1621
        %v1623 = vpop.f32.mrb[0].mxu0
        %v1624 = vadd.f32 %v1035, %v1623
        %1625 = vdwg.mxu0
        %v1626 = vmul.f32 %v1448, 0.5
        %v1627 = vmul.f32 %v1450, 0.5
        %v1628 = vmul.f32 %v1452, 0.5
        %v1629 = vmul.f32 %v1454, 0.5
        %v1630 = vmul.f32 %v1458, 0.5
        %v1631 = vmul.f32 %v1460, 0.5
        %v1632 = vmul.f32 %v1462, 0.5
        %v1633 = vmul.f32 %v1464, 0.5
        %v1634 = vmul.f32 %v1468, 0.5
        %v1635 = vmul.f32 %v1470, 0.5
        %v1636 = vmul.f32 %v1472, 0.5
        %v1637 = vmul.f32 %v1474, 0.5
        %v1638 = vmul.f32 %v1478, 0.5
        %v1639 = vmul.f32 %v1480, 0.5
        %v1640 = vmul.f32 %v1482, 0.5
        %v1641 = vmul.f32 %v1484, 0.5
        %v1642 = vmul.f32 %v1488, 0.5
        %v1643 = vmul.f32 %v1490, 0.5
        %v1644 = vmul.f32 %v1492, 0.5
        %v1645 = vmul.f32 %v1494, 0.5
        %v1646 = vmul.f32 %v1498, 0.5
        %v1647 = vmul.f32 %v1500, 0.5
        %v1648 = vmul.f32 %v1502, 0.5
        %v1649 = vmul.f32 %v1504, 0.5
        %v1650 = vmul.f32 %v1508, 0.5
        %v1651 = vmul.f32 %v1510, 0.5
        %v1652 = vmul.f32 %v1512, 0.5
        %v1653 = vmul.f32 %v1514, 0.5
        %v1654 = vmul.f32 %v1518, 0.5
        %v1655 = vmul.f32 %v1520, 0.5
        %v1656 = vmul.f32 %v1522, 0.5
        %v1657 = vmul.f32 %v1524, 0.5
        %v1658 = vmul.f32 %v1528, 0.5
        %v1659 = vmul.f32 %v1530, 0.5
        %v1660 = vmul.f32 %v1532, 0.5
        %v1661 = vmul.f32 %v1534, 0.5
        %v1662 = vmul.f32 %v1538, 0.5
        %v1663 = vmul.f32 %v1540, 0.5
        %v1664 = vmul.f32 %v1542, 0.5
        %v1665 = vmul.f32 %v1544, 0.5
        %v1666 = vmul.f32 %v1548, 0.5
        %v1667 = vmul.f32 %v1550, 0.5
        %v1668 = vmul.f32 %v1552, 0.5
        %v1669 = vmul.f32 %v1554, 0.5
        %v1670 = vmul.f32 %v1558, 0.5
        %v1671 = vmul.f32 %v1560, 0.5
        %v1672 = vmul.f32 %v1562, 0.5
        %v1673 = vmul.f32 %v1564, 0.5
        %v1674 = vmul.f32 %v1568, 0.5
        %v1675 = vmul.f32 %v1570, 0.5
        %v1676 = vmul.f32 %v1572, 0.5
        %v1677 = vmul.f32 %v1574, 0.5
        %v1678 = vmul.f32 %v1578, 0.5
        %v1679 = vmul.f32 %v1580, 0.5
        %v1680 = vmul.f32 %v1582, 0.5
        %v1681 = vmul.f32 %v1584, 0.5
        %v1682 = vmul.f32 %v1588, 0.5
        %v1683 = vmul.f32 %v1590, 0.5
        %v1684 = vmul.f32 %v1592, 0.5
        %v1685 = vmul.f32 %v1594, 0.5
        %v1686 = vmul.f32 %v1598, 0.5
        %v1687 = vmul.f32 %v1600, 0.5
        %v1688 = vmul.f32 %v1602, 0.5
        %v1689 = vmul.f32 %v1604, 0.5
        %v1690 = vmul.f32 %v1608, 0.5
        %v1691 = vmul.f32 %v1610, 0.5
        %v1692 = vmul.f32 %v1612, 0.5
        %v1693 = vmul.f32 %v1614, 0.5
        %v1694 = vmul.f32 %v1618, 0.5
        %v1695 = vmul.f32 %v1620, 0.5
        %v1696 = vmul.f32 %v1622, 0.5
        %v1697 = vmul.f32 %v1624, 0.5
        %v1698 = vtanh.pop %v1626
        %v1699 = vtanh.pop %v1627
        %v1700 = vtanh.pop %v1628
        %v1701 = vtanh.pop %v1629
        %v1702 = vtanh.pop %v1630
        %v1703 = vtanh.pop %v1631
        %v1704 = vtanh.pop %v1632
        %v1705 = vtanh.pop %v1633
        %v1706 = vtanh.pop %v1634
        %v1707 = vtanh.pop %v1635
        %v1708 = vtanh.pop %v1636
        %v1709 = vtanh.pop %v1637
        %v1710 = vtanh.pop %v1638
        %v1711 = vtanh.pop %v1639
        %v1712 = vtanh.pop %v1640
        %v1713 = vtanh.pop %v1641
        %v1714 = vtanh.pop %v1642
        %v1715 = vtanh.pop %v1643
        %v1716 = vtanh.pop %v1644
        %v1717 = vtanh.pop %v1645
        %v1718 = vtanh.pop %v1646
        %v1719 = vtanh.pop %v1647
        %v1720 = vtanh.pop %v1648
        %v1721 = vtanh.pop %v1649
        %v1722 = vtanh.pop %v1650
        %v1723 = vtanh.pop %v1651
        %v1724 = vtanh.pop %v1652
        %v1725 = vtanh.pop %v1653
        %v1726 = vtanh.pop %v1654
        %v1727 = vtanh.pop %v1655
        %v1728 = vtanh.pop %v1656
        %v1729 = vtanh.pop %v1657
        %v1730 = vtanh.pop %v1658
        %v1731 = vtanh.pop %v1659
        %v1732 = vtanh.pop %v1660
        %v1733 = vtanh.pop %v1661
        %v1734 = vtanh.pop %v1662
        %v1735 = vtanh.pop %v1663
        %v1736 = vtanh.pop %v1664
        %v1737 = vtanh.pop %v1665
        %v1738 = vtanh.pop %v1666
        %v1739 = vtanh.pop %v1667
        %v1740 = vtanh.pop %v1668
        %v1741 = vtanh.pop %v1669
        %v1742 = vtanh.pop %v1670
        %v1743 = vtanh.pop %v1671
        %v1744 = vtanh.pop %v1672
        %v1745 = vtanh.pop %v1673
        %v1746 = vtanh.pop %v1674
        %v1747 = vtanh.pop %v1675
        %v1748 = vtanh.pop %v1676
        %v1749 = vtanh.pop %v1677
        %v1750 = vtanh.pop %v1678
        %v1751 = vtanh.pop %v1679
        %v1752 = vtanh.pop %v1680
        %v1753 = vtanh.pop %v1681
        %v1754 = vtanh.pop %v1682
        %v1755 = vtanh.pop %v1683
        %v1756 = vtanh.pop %v1684
        %v1757 = vtanh.pop %v1685
        %v1758 = vtanh.pop %v1686
        %v1759 = vtanh.pop %v1687
        %v1760 = vtanh.pop %v1688
        %v1761 = vtanh.pop %v1689
        %v1762 = vtanh.pop %v1690
        %v1763 = vtanh.pop %v1691
        %v1764 = vtanh.pop %v1692
        %v1765 = vtanh.pop %v1693
        %v1766 = vtanh.pop %v1694
        %v1767 = vtanh.pop %v1695
        %v1768 = vtanh.pop %v1696
        %v1769 = vtanh.pop %v1697
        %v1770 = vadd.f32 %v1698, 1.0
        %v1771 = vadd.f32 %v1699, 1.0
        %v1772 = vadd.f32 %v1700, 1.0
        %v1773 = vadd.f32 %v1701, 1.0
        %v1774 = vadd.f32 %v1702, 1.0
        %v1775 = vadd.f32 %v1703, 1.0
        %v1776 = vadd.f32 %v1704, 1.0
        %v1777 = vadd.f32 %v1705, 1.0
        %v1778 = vadd.f32 %v1706, 1.0
        %v1779 = vadd.f32 %v1707, 1.0
        %v1780 = vadd.f32 %v1708, 1.0
        %v1781 = vadd.f32 %v1709, 1.0
        %v1782 = vadd.f32 %v1710, 1.0
        %v1783 = vadd.f32 %v1711, 1.0
        %v1784 = vadd.f32 %v1712, 1.0
        %v1785 = vadd.f32 %v1713, 1.0
        %v1786 = vadd.f32 %v1714, 1.0
        %v1787 = vadd.f32 %v1715, 1.0
        %v1788 = vadd.f32 %v1716, 1.0
        %v1789 = vadd.f32 %v1717, 1.0
        %v1790 = vadd.f32 %v1718, 1.0
        %v1791 = vadd.f32 %v1719, 1.0
        %v1792 = vadd.f32 %v1720, 1.0
        %v1793 = vadd.f32 %v1721, 1.0
        %v1794 = vadd.f32 %v1722, 1.0
        %v1795 = vadd.f32 %v1723, 1.0
        %v1796 = vadd.f32 %v1724, 1.0
        %v1797 = vadd.f32 %v1725, 1.0
        %v1798 = vadd.f32 %v1726, 1.0
        %v1799 = vadd.f32 %v1727, 1.0
        %v1800 = vadd.f32 %v1728, 1.0
        %v1801 = vadd.f32 %v1729, 1.0
        %v1802 = vadd.f32 %v1730, 1.0
        %v1803 = vadd.f32 %v1731, 1.0
        %v1804 = vadd.f32 %v1732, 1.0
        %v1805 = vadd.f32 %v1733, 1.0
        %v1806 = vadd.f32 %v1734, 1.0
        %v1807 = vadd.f32 %v1735, 1.0
        %v1808 = vadd.f32 %v1736, 1.0
        %v1809 = vadd.f32 %v1737, 1.0
        %v1810 = vadd.f32 %v1738, 1.0
        %v1811 = vadd.f32 %v1739, 1.0
        %v1812 = vadd.f32 %v1740, 1.0
        %v1813 = vadd.f32 %v1741, 1.0
        %v1814 = vadd.f32 %v1742, 1.0
        %v1815 = vadd.f32 %v1743, 1.0
        %v1816 = vadd.f32 %v1744, 1.0
        %v1817 = vadd.f32 %v1745, 1.0
        %v1818 = vadd.f32 %v1746, 1.0
        %v1819 = vadd.f32 %v1747, 1.0
        %v1820 = vadd.f32 %v1748, 1.0
        %v1821 = vadd.f32 %v1749, 1.0
        %v1822 = vadd.f32 %v1750, 1.0
        %v1823 = vadd.f32 %v1751, 1.0
        %v1824 = vadd.f32 %v1752, 1.0
        %v1825 = vadd.f32 %v1753, 1.0
        %v1826 = vadd.f32 %v1754, 1.0
        %v1827 = vadd.f32 %v1755, 1.0
        %v1828 = vadd.f32 %v1756, 1.0
        %v1829 = vadd.f32 %v1757, 1.0
        %v1830 = vadd.f32 %v1758, 1.0
        %v1831 = vadd.f32 %v1759, 1.0
        %v1832 = vadd.f32 %v1760, 1.0
        %v1833 = vadd.f32 %v1761, 1.0
        %v1834 = vadd.f32 %v1762, 1.0
        %v1835 = vadd.f32 %v1763, 1.0
        %v1836 = vadd.f32 %v1764, 1.0
        %v1837 = vadd.f32 %v1765, 1.0
        %v1838 = vadd.f32 %v1766, 1.0
        %v1839 = vadd.f32 %v1767, 1.0
        %v1840 = vadd.f32 %v1768, 1.0
        %v1841 = vadd.f32 %v1769, 1.0
        %v1842 = vmul.f32 %v1770, 0.5
        %v1843 = vmul.f32 %v1771, 0.5
        %v1844 = vmul.f32 %v1772, 0.5
        %v1845 = vmul.f32 %v1773, 0.5
        %v1846 = vmul.f32 %v1774, 0.5
        %v1847 = vmul.f32 %v1775, 0.5
        %v1848 = vmul.f32 %v1776, 0.5
        %v1849 = vmul.f32 %v1777, 0.5
        %v1850 = vmul.f32 %v1778, 0.5
        %v1851 = vmul.f32 %v1779, 0.5
        %v1852 = vmul.f32 %v1780, 0.5
        %v1853 = vmul.f32 %v1781, 0.5
        %v1854 = vmul.f32 %v1782, 0.5
        %v1855 = vmul.f32 %v1783, 0.5
        %v1856 = vmul.f32 %v1784, 0.5
        %v1857 = vmul.f32 %v1785, 0.5
        %v1858 = vmul.f32 %v1786, 0.5
        %v1859 = vmul.f32 %v1787, 0.5
        %v1860 = vmul.f32 %v1788, 0.5
        %v1861 = vmul.f32 %v1789, 0.5
        %v1862 = vmul.f32 %v1790, 0.5
        %v1863 = vmul.f32 %v1791, 0.5
        %v1864 = vmul.f32 %v1792, 0.5
        %v1865 = vmul.f32 %v1793, 0.5
        %v1866 = vmul.f32 %v1794, 0.5
        %v1867 = vmul.f32 %v1795, 0.5
        %v1868 = vmul.f32 %v1796, 0.5
        %v1869 = vmul.f32 %v1797, 0.5
        %v1870 = vmul.f32 %v1798, 0.5
        %v1871 = vmul.f32 %v1799, 0.5
        %v1872 = vmul.f32 %v1800, 0.5
        %v1873 = vmul.f32 %v1801, 0.5
        %v1874 = vmul.f32 %v1802, 0.5
        %v1875 = vmul.f32 %v1803, 0.5
        %v1876 = vmul.f32 %v1804, 0.5
        %v1877 = vmul.f32 %v1805, 0.5
        %v1878 = vmul.f32 %v1806, 0.5
        %v1879 = vmul.f32 %v1807, 0.5
        %v1880 = vmul.f32 %v1808, 0.5
        %v1881 = vmul.f32 %v1809, 0.5
        %v1882 = vmul.f32 %v1810, 0.5
        %v1883 = vmul.f32 %v1811, 0.5
        %v1884 = vmul.f32 %v1812, 0.5
        %v1885 = vmul.f32 %v1813, 0.5
        %v1886 = vmul.f32 %v1814, 0.5
        %v1887 = vmul.f32 %v1815, 0.5
        %v1888 = vmul.f32 %v1816, 0.5
        %v1889 = vmul.f32 %v1817, 0.5
        %v1890 = vmul.f32 %v1818, 0.5
        %v1891 = vmul.f32 %v1819, 0.5
        %v1892 = vmul.f32 %v1820, 0.5
        %v1893 = vmul.f32 %v1821, 0.5
        %v1894 = vmul.f32 %v1822, 0.5
        %v1895 = vmul.f32 %v1823, 0.5
        %v1896 = vmul.f32 %v1824, 0.5
        %v1897 = vmul.f32 %v1825, 0.5
        %v1898 = vmul.f32 %v1826, 0.5
        %v1899 = vmul.f32 %v1827, 0.5
        %v1900 = vmul.f32 %v1828, 0.5
        %v1901 = vmul.f32 %v1829, 0.5
        %v1902 = vmul.f32 %v1830, 0.5
        %v1903 = vmul.f32 %v1831, 0.5
        %v1904 = vmul.f32 %v1832, 0.5
        %v1905 = vmul.f32 %v1833, 0.5
        %v1906 = vmul.f32 %v1834, 0.5
        %v1907 = vmul.f32 %v1835, 0.5
        %v1908 = vmul.f32 %v1836, 0.5
        %v1909 = vmul.f32 %v1837, 0.5
        %v1910 = vmul.f32 %v1838, 0.5
        %v1911 = vmul.f32 %v1839, 0.5
        %v1912 = vmul.f32 %v1840, 0.5
        %v1913 = vmul.f32 %v1841, 0.5
        %v1914 = vmul.f32 %v1235, %v1842
        %v1915 = vmul.f32 %v1237, %v1843
        %v1916 = vmul.f32 %v1239, %v1844
        %v1917 = vmul.f32 %v1241, %v1845
        %v1918 = vmul.f32 %v1245, %v1846
        %v1919 = vmul.f32 %v1247, %v1847
        %v1920 = vmul.f32 %v1249, %v1848
        %v1921 = vmul.f32 %v1251, %v1849
        %v1922 = vmul.f32 %v1255, %v1850
        %v1923 = vmul.f32 %v1257, %v1851
        %v1924 = vmul.f32 %v1259, %v1852
        %v1925 = vmul.f32 %v1261, %v1853
        %v1926 = vmul.f32 %v1265, %v1854
        %v1927 = vmul.f32 %v1267, %v1855
        %v1928 = vmul.f32 %v1269, %v1856
        %v1929 = vmul.f32 %v1271, %v1857
        %v1930 = vmul.f32 %v1275, %v1858
        %v1931 = vmul.f32 %v1277, %v1859
        %v1932 = vmul.f32 %v1279, %v1860
        %v1933 = vmul.f32 %v1281, %v1861
        %v1934 = vmul.f32 %v1285, %v1862
        %v1935 = vmul.f32 %v1287, %v1863
        %v1936 = vmul.f32 %v1289, %v1864
        %v1937 = vmul.f32 %v1291, %v1865
        %v1938 = vmul.f32 %v1295, %v1866
        %v1939 = vmul.f32 %v1297, %v1867
        %v1940 = vmul.f32 %v1299, %v1868
        %v1941 = vmul.f32 %v1301, %v1869
        %v1942 = vmul.f32 %v1305, %v1870
        %v1943 = vmul.f32 %v1307, %v1871
        %v1944 = vmul.f32 %v1309, %v1872
        %v1945 = vmul.f32 %v1311, %v1873
        %v1946 = vmul.f32 %v1315, %v1874
        %v1947 = vmul.f32 %v1317, %v1875
        %v1948 = vmul.f32 %v1319, %v1876
        %v1949 = vmul.f32 %v1321, %v1877
        %v1950 = vmul.f32 %v1325, %v1878
        %v1951 = vmul.f32 %v1327, %v1879
        %v1952 = vmul.f32 %v1329, %v1880
        %v1953 = vmul.f32 %v1331, %v1881
        %v1954 = vmul.f32 %v1335, %v1882
        %v1955 = vmul.f32 %v1337, %v1883
        %v1956 = vmul.f32 %v1339, %v1884
        %v1957 = vmul.f32 %v1341, %v1885
        %v1958 = vmul.f32 %v1345, %v1886
        %v1959 = vmul.f32 %v1347, %v1887
        %v1960 = vmul.f32 %v1349, %v1888
        %v1961 = vmul.f32 %v1351, %v1889
        %v1962 = vmul.f32 %v1355, %v1890
        %v1963 = vmul.f32 %v1357, %v1891
        %v1964 = vmul.f32 %v1359, %v1892
        %v1965 = vmul.f32 %v1361, %v1893
        %v1966 = vmul.f32 %v1365, %v1894
        %v1967 = vmul.f32 %v1367, %v1895
        %v1968 = vmul.f32 %v1369, %v1896
        %v1969 = vmul.f32 %v1371, %v1897
        %v1970 = vmul.f32 %v1375, %v1898
        %v1971 = vmul.f32 %v1377, %v1899
        %v1972 = vmul.f32 %v1379, %v1900
        %v1973 = vmul.f32 %v1381, %v1901
        %v1974 = vmul.f32 %v1385, %v1902
        %v1975 = vmul.f32 %v1387, %v1903
        %v1976 = vmul.f32 %v1389, %v1904
        %v1977 = vmul.f32 %v1391, %v1905
        %v1978 = vmul.f32 %v1395, %v1906
        %v1979 = vmul.f32 %v1397, %v1907
        %v1980 = vmul.f32 %v1399, %v1908
        %v1981 = vmul.f32 %v1401, %v1909
        %v1982 = vmul.f32 %v1405, %v1910
        %v1983 = vmul.f32 %v1407, %v1911
        %v1984 = vmul.f32 %v1409, %v1912
        %v1985 = vmul.f32 %v1411, %v1913
        %1986 = vst [vmem:[#allocation2] sm:$0xff] %v1914
        %1987 = vst [vmem:[#allocation2 + $0x8] sm:$0xff] %v1915
        %1988 = vst [vmem:[#allocation2 + $0x10] sm:$0xff] %v1916
        %1989 = vst [vmem:[#allocation2 + $0x18] sm:$0xff] %v1917
        %1990 = vst [vmem:[#allocation2 + $0x20] sm:$0xff] %v1918
        %1991 = vst [vmem:[#allocation2 + $0x28] sm:$0xff] %v1919
        %1992 = vst [vmem:[#allocation2 + $0x30] sm:$0xff] %v1920
        %1993 = vst [vmem:[#allocation2 + $0x38] sm:$0xff] %v1921
        %1994 = vst [vmem:[#allocation2 + $0x40] sm:$0xff] %v1922
        %1995 = vst [vmem:[#allocation2 + $0x48] sm:$0xff] %v1923
        %1996 = vst [vmem:[#allocation2 + $0x50] sm:$0xff] %v1924
        %1997 = vst [vmem:[#allocation2 + $0x58] sm:$0xff] %v1925
        %1998 = vst [vmem:[#allocation2 + $0x60] sm:$0xff] %v1926
        %1999 = vst [vmem:[#allocation2 + $0x68] sm:$0xff] %v1927
        %2000 = vst [vmem:[#allocation2 + $0x70] sm:$0xff] %v1928
        %2001 = vst [vmem:[#allocation2 + $0x78] sm:$0xff] %v1929
        %2002 = vst [vmem:[#allocation2 + $0x80] sm:$0xff] %v1930
        %2003 = vst [vmem:[#allocation2 + $0x88] sm:$0xff] %v1931
        %2004 = vst [vmem:[#allocation2 + $0x90] sm:$0xff] %v1932
        %2005 = vst [vmem:[#allocation2 + $0x98] sm:$0xff] %v1933
        %2006 = vst [vmem:[#allocation2 + $0xa0] sm:$0xff] %v1934
        %2007 = vst [vmem:[#allocation2 + $0xa8] sm:$0xff] %v1935
        %2008 = vst [vmem:[#allocation2 + $0xb0] sm:$0xff] %v1936
        %2009 = vst [vmem:[#allocation2 + $0xb8] sm:$0xff] %v1937
        %2010 = vst [vmem:[#allocation2 + $0xc0] sm:$0xff] %v1938
        %2011 = vst [vmem:[#allocation2 + $0xc8] sm:$0xff] %v1939
        %2012 = vst [vmem:[#allocation2 + $0xd0] sm:$0xff] %v1940
        %2013 = vst [vmem:[#allocation2 + $0xd8] sm:$0xff] %v1941
        %2014 = vst [vmem:[#allocation2 + $0xe0] sm:$0xff] %v1942
        %2015 = vst [vmem:[#allocation2 + $0xe8] sm:$0xff] %v1943
        %2016 = vst [vmem:[#allocation2 + $0xf0] sm:$0xff] %v1944
        %2017 = vst [vmem:[#allocation2 + $0xf8] sm:$0xff] %v1945
        %2018 = vst [vmem:[#allocation2 + $0x100] sm:$0xff] %v1946
        %2019 = vst [vmem:[#allocation2 + $0x108] sm:$0xff] %v1947
        %2020 = vst [vmem:[#allocation2 + $0x110] sm:$0xff] %v1948
        %2021 = vst [vmem:[#allocation2 + $0x118] sm:$0xff] %v1949
        %2022 = vst [vmem:[#allocation2 + $0x120] sm:$0xff] %v1950
        %2023 = vst [vmem:[#allocation2 + $0x128] sm:$0xff] %v1951
        %2024 = vst [vmem:[#allocation2 + $0x130] sm:$0xff] %v1952
        %2025 = vst [vmem:[#allocation2 + $0x138] sm:$0xff] %v1953
        %2026 = vst [vmem:[#allocation2 + $0x140] sm:$0xff] %v1954
        %2027 = vst [vmem:[#allocation2 + $0x148] sm:$0xff] %v1955
        %2028 = vst [vmem:[#allocation2 + $0x150] sm:$0xff] %v1956
        %2029 = vst [vmem:[#allocation2 + $0x158] sm:$0xff] %v1957
        %2030 = vst [vmem:[#allocation2 + $0x160] sm:$0xff] %v1958
        %2031 = vst [vmem:[#allocation2 + $0x168] sm:$0xff] %v1959
        %2032 = vst [vmem:[#allocation2 + $0x170] sm:$0xff] %v1960
        %2033 = vst [vmem:[#allocation2 + $0x178] sm:$0xff] %v1961
        %2034 = vst [vmem:[#allocation2 + $0x180] sm:$0xff] %v1962
        %2035 = vst [vmem:[#allocation2 + $0x188] sm:$0xff] %v1963
        %2036 = vst [vmem:[#allocation2 + $0x190] sm:$0xff] %v1964
        %2037 = vst [vmem:[#allocation2 + $0x198] sm:$0xff] %v1965
        %2038 = vst [vmem:[#allocation2 + $0x1a0] sm:$0xff] %v1966
        %2039 = vst [vmem:[#allocation2 + $0x1a8] sm:$0xff] %v1967
        %2040 = vst [vmem:[#allocation2 + $0x1b0] sm:$0xff] %v1968
        %2041 = vst [vmem:[#allocation2 + $0x1b8] sm:$0xff] %v1969
        %2042 = vst [vmem:[#allocation2 + $0x1c0] sm:$0xff] %v1970
        %2043 = vst [vmem:[#allocation2 + $0x1c8] sm:$0xff] %v1971
        %2044 = vst [vmem:[#allocation2 + $0x1d0] sm:$0xff] %v1972
        %2045 = vst [vmem:[#allocation2 + $0x1d8] sm:$0xff] %v1973
        %2046 = vst [vmem:[#allocation2 + $0x1e0] sm:$0xff] %v1974
        %2047 = vst [vmem:[#allocation2 + $0x1e8] sm:$0xff] %v1975
        %2048 = vst [vmem:[#allocation2 + $0x1f0] sm:$0xff] %v1976
        %2049 = vst [vmem:[#allocation2 + $0x1f8] sm:$0xff] %v1977
        %2050 = vst [vmem:[#allocation2 + $0x200] sm:$0xff] %v1978
        %2051 = vst [vmem:[#allocation2 + $0x208] sm:$0xff] %v1979
        %2052 = vst [vmem:[#allocation2 + $0x210] sm:$0xff] %v1980
        %2053 = vst [vmem:[#allocation2 + $0x218] sm:$0xff] %v1981
        %2054 = vst [vmem:[#allocation2 + $0x220] sm:$0xff] %v1982
        %2055 = vst [vmem:[#allocation2 + $0x228] sm:$0xff] %v1983
        %2056 = vst [vmem:[#allocation2 + $0x230] sm:$0xff] %v1984
        %2057 = vst [vmem:[#allocation2 + $0x238] sm:$0xff] %v1985
        %p2058 = scmp.eq.s32.totalorder %s36, 0
        // Predicated region
        $region81: #{tpu_custom_call.1} parent=55 // pred_check
          %p2059 = pneg %p2058
        $region82: #{tpu_custom_call.1} parent=55 // pred_check_branch
          %2061 = sbr.rel (%p2059) target = $region84
        $region83: #{tpu_custom_call.1} parent=55 // pred_region
          %2062 = vst [vmem:[#allocation2] sm:$0xff] 0.0
          %2063 = vst [vmem:[#allocation2 + $0x8] sm:$0xff] 0.0
          %2064 = vst [vmem:[#allocation2 + $0x10] sm:$0xff] 0.0
          %2065 = vst [vmem:[#allocation2 + $0x18] sm:$0xff] 0.0
        $region84: #{tpu_custom_call.1} parent=55 // pred_fallthru
          _
        %p2066 = scmp.eq.s32.totalorder %s36, 1
        // Predicated region
        $region85: #{tpu_custom_call.1} parent=55 // pred_check
          %p2067 = pneg %p2066
        $region86: #{tpu_custom_call.1} parent=55 // pred_check_branch
          %2069 = sbr.rel (%p2067) target = $region88
        $region87: #{tpu_custom_call.1} parent=55 // pred_region
          %2070 = vst [vmem:[#allocation2 + $0x220] sm:$0xff] 0.0
          %2071 = vst [vmem:[#allocation2 + $0x228] sm:$0xff] 0.0
          %2072 = vst [vmem:[#allocation2 + $0x230] sm:$0xff] 0.0
          %2073 = vst [vmem:[#allocation2 + $0x238] sm:$0xff] 0.0
        $region88: #{tpu_custom_call.1} parent=55 // pred_fallthru
          _
        %v2074 = vld [vmem:[%s6] sm:$0x3]
        %v2076 = vlaneseq
        %v2077 = vshrl.u32 %v2076, 7
        %v2078 = vsub.s32 0, %v2077
        %v2079 = vrot.slane %v2074, %v2078
        %v2080 = vlaneseq
        %v2081 = vshrl.u32 %v2080, 7
        %v2082 = vsub.s32 1, %v2081
        %v2083 = vrot.slane %v2074, %v2082
        loop: start=0, step=1, limit=32
        $region89: #{tpu_custom_call.1} parent=55 // loop_pre_header
          _
        $region90: #{tpu_custom_call.1} parent=55 // loop_header
          %s2087 = sphi 0, %s2091
          %p2088 = scmp.ge.s32.totalorder %s2087, 32
        $region91: #{tpu_custom_call.1} parent=55 // loop_header_branch
          %2090 = sbr.rel (%p2088) target = $region95
        $region92: #{tpu_custom_call.1} parent=55 // loop_body
          %s2092 = smul.u32 %s2087, 8
          %s2093 = sadd.s32 %s2092, 1
          %s2094 = sshra.s32 %s2093, 3
          %s2095 = sand.u32 %s2093, 7
          %s2096 = sshra.s32 %s2093, 3
          %s2097 = sand.u32 %s2093, 7
          %s2098 = smul.u32 %s2094, 2
          %s2099 = smul.u32 %s2098, 8
          %s2100 = sadd.s32 %s2099, %s2097
          %s2101 = scalar_lea.vmem [#allocation2], %s2100
          %v2102 = vld [vmem:[%s2101] ss:$8 sm:$0x3]
          %v2103 = vld [vmem:[#allocation12] sm:$0xff]
          %v2104 = vld [vmem:[#allocation12 + $0x8] sm:$0xff]
          %v2106 = vlaneseq
          %v2107 = vshrl.u32 %v2106, 7
          %v2108 = vsub.s32 0, %v2107
          %v2109 = vrot.slane %v2102, %v2108
          %v2110 = vlaneseq
          %v2111 = vshrl.u32 %v2110, 7
          %v2112 = vsub.s32 1, %v2111
          %v2113 = vrot.slane %v2102, %v2112
          %v2116 = vmul.f32 %v2109, %v2103
          %v2117 = vmul.f32 %v2113, %v2104
          %v2118 = vadd.f32 %v2079, %v2116
          %v2119 = vadd.f32 %v2083, %v2117
          %s2120 = sadd.s32 %s2092, 2
          %s2121 = sshra.s32 %s2120, 3
          %s2122 = sand.u32 %s2120, 7
          %s2123 = sshra.s32 %s2120, 3
          %s2124 = sand.u32 %s2120, 7
          %s2125 = smul.u32 %s2121, 2
          %s2126 = smul.u32 %s2125, 8
          %s2127 = sadd.s32 %s2126, %s2124
          %s2128 = scalar_lea.vmem [#allocation2], %s2127
          %v2129 = vld [vmem:[%s2128] ss:$8 sm:$0x3]
          %s2130 = scalar_lea.vmem [#allocation12], 16
          %v2131 = vld [vmem:[%s2130] sm:$0xff]
          %v2132 = vld [vmem:[%s2130 + $0x8] sm:$0xff]
          %v2134 = vlaneseq
          %v2135 = vshrl.u32 %v2134, 7
          %v2136 = vsub.s32 0, %v2135
          %v2137 = vrot.slane %v2129, %v2136
          %v2138 = vlaneseq
          %v2139 = vshrl.u32 %v2138, 7
          %v2140 = vsub.s32 1, %v2139
          %v2141 = vrot.slane %v2129, %v2140
          %v2144 = vmul.f32 %v2137, %v2131
          %v2145 = vmul.f32 %v2141, %v2132
          %v2146 = vadd.f32 %v2144, 0.0
          %v2147 = vadd.f32 %v2145, 0.0
          %s2148 = sadd.s32 %s2092, 3
          %s2149 = sshra.s32 %s2148, 3
          %s2150 = sand.u32 %s2148, 7
          %s2151 = sshra.s32 %s2148, 3
          %s2152 = sand.u32 %s2148, 7
          %s2153 = smul.u32 %s2149, 2
          %s2154 = smul.u32 %s2153, 8
          %s2155 = sadd.s32 %s2154, %s2152
          %s2156 = scalar_lea.vmem [#allocation2], %s2155
          %v2157 = vld [vmem:[%s2156] ss:$8 sm:$0x3]
          %s2158 = scalar_lea.vmem [#allocation12], 32
          %v2159 = vld [vmem:[%s2158] sm:$0xff]
          %v2160 = vld [vmem:[%s2158 + $0x8] sm:$0xff]
          %v2162 = vlaneseq
          %v2163 = vshrl.u32 %v2162, 7
          %v2164 = vsub.s32 0, %v2163
          %v2165 = vrot.slane %v2157, %v2164
          %v2166 = vlaneseq
          %v2167 = vshrl.u32 %v2166, 7
          %v2168 = vsub.s32 1, %v2167
          %v2169 = vrot.slane %v2157, %v2168
          %v2172 = vmul.f32 %v2165, %v2159
          %v2173 = vmul.f32 %v2169, %v2160
          %v2174 = vadd.f32 %v2118, %v2172
          %v2175 = vadd.f32 %v2119, %v2173
          %s2176 = sadd.s32 %s2092, 4
          %s2177 = sshra.s32 %s2176, 3
          %s2178 = sand.u32 %s2176, 7
          %s2179 = sshra.s32 %s2176, 3
          %s2180 = sand.u32 %s2176, 7
          %s2181 = smul.u32 %s2177, 2
          %s2182 = smul.u32 %s2181, 8
          %s2183 = sadd.s32 %s2182, %s2180
          %s2184 = scalar_lea.vmem [#allocation2], %s2183
          %v2185 = vld [vmem:[%s2184] ss:$8 sm:$0x3]
          %s2186 = scalar_lea.vmem [#allocation12], 48
          %v2187 = vld [vmem:[%s2186] sm:$0xff]
          %v2188 = vld [vmem:[%s2186 + $0x8] sm:$0xff]
          %v2190 = vlaneseq
          %v2191 = vshrl.u32 %v2190, 7
          %v2192 = vsub.s32 0, %v2191
          %v2193 = vrot.slane %v2185, %v2192
          %v2194 = vlaneseq
          %v2195 = vshrl.u32 %v2194, 7
          %v2196 = vsub.s32 1, %v2195
          %v2197 = vrot.slane %v2185, %v2196
          %v2200 = vmul.f32 %v2193, %v2187
          %v2201 = vmul.f32 %v2197, %v2188
          %v2202 = vadd.f32 %v2146, %v2200
          %v2203 = vadd.f32 %v2147, %v2201
          %s2204 = sadd.s32 %s2092, 5
          %s2205 = sshra.s32 %s2204, 3
          %s2206 = sand.u32 %s2204, 7
          %s2207 = sshra.s32 %s2204, 3
          %s2208 = sand.u32 %s2204, 7
          %s2209 = smul.u32 %s2205, 2
          %s2210 = smul.u32 %s2209, 8
          %s2211 = sadd.s32 %s2210, %s2208
          %s2212 = scalar_lea.vmem [#allocation2], %s2211
          %v2213 = vld [vmem:[%s2212] ss:$8 sm:$0x3]
          %s2214 = scalar_lea.vmem [#allocation12], 64
          %v2215 = vld [vmem:[%s2214] sm:$0xff]
          %v2216 = vld [vmem:[%s2214 + $0x8] sm:$0xff]
          %v2218 = vlaneseq
          %v2219 = vshrl.u32 %v2218, 7
          %v2220 = vsub.s32 0, %v2219
          %v2221 = vrot.slane %v2213, %v2220
          %v2222 = vlaneseq
          %v2223 = vshrl.u32 %v2222, 7
          %v2224 = vsub.s32 1, %v2223
          %v2225 = vrot.slane %v2213, %v2224
          %v2228 = vmul.f32 %v2221, %v2215
          %v2229 = vmul.f32 %v2225, %v2216
          %v2230 = vadd.f32 %v2174, %v2228
          %v2231 = vadd.f32 %v2175, %v2229
          %s2232 = sadd.s32 %s2092, 6
          %s2233 = sshra.s32 %s2232, 3
          %s2234 = sand.u32 %s2232, 7
          %s2235 = sshra.s32 %s2232, 3
          %s2236 = sand.u32 %s2232, 7
          %s2237 = smul.u32 %s2233, 2
          %s2238 = smul.u32 %s2237, 8
          %s2239 = sadd.s32 %s2238, %s2236
          %s2240 = scalar_lea.vmem [#allocation2], %s2239
          %v2241 = vld [vmem:[%s2240] ss:$8 sm:$0x3]
          %s2242 = scalar_lea.vmem [#allocation12], 80
          %v2243 = vld [vmem:[%s2242] sm:$0xff]
          %v2244 = vld [vmem:[%s2242 + $0x8] sm:$0xff]
          %v2246 = vlaneseq
          %v2247 = vshrl.u32 %v2246, 7
          %v2248 = vsub.s32 0, %v2247
          %v2249 = vrot.slane %v2241, %v2248
          %v2250 = vlaneseq
          %v2251 = vshrl.u32 %v2250, 7
          %v2252 = vsub.s32 1, %v2251
          %v2253 = vrot.slane %v2241, %v2252
          %v2256 = vmul.f32 %v2249, %v2243
          %v2257 = vmul.f32 %v2253, %v2244
          %v2258 = vadd.f32 %v2202, %v2256
          %v2259 = vadd.f32 %v2203, %v2257
          %s2260 = sadd.s32 %s2092, 7
          %s2261 = sshra.s32 %s2260, 3
          %s2262 = sand.u32 %s2260, 7
          %s2263 = sshra.s32 %s2260, 3
          %s2264 = sand.u32 %s2260, 7
          %s2265 = smul.u32 %s2261, 2
          %s2266 = smul.u32 %s2265, 8
          %s2267 = sadd.s32 %s2266, %s2264
          %s2268 = scalar_lea.vmem [#allocation2], %s2267
          %v2269 = vld [vmem:[%s2268] ss:$8 sm:$0x3]
          %s2270 = scalar_lea.vmem [#allocation12], 96
          %v2271 = vld [vmem:[%s2270] sm:$0xff]
          %v2272 = vld [vmem:[%s2270 + $0x8] sm:$0xff]
          %v2274 = vlaneseq
          %v2275 = vshrl.u32 %v2274, 7
          %v2276 = vsub.s32 0, %v2275
          %v2277 = vrot.slane %v2269, %v2276
          %v2278 = vlaneseq
          %v2279 = vshrl.u32 %v2278, 7
          %v2280 = vsub.s32 1, %v2279
          %v2281 = vrot.slane %v2269, %v2280
          %v2284 = vmul.f32 %v2277, %v2271
          %v2285 = vmul.f32 %v2281, %v2272
          %v2286 = vadd.f32 %v2230, %v2284
          %v2287 = vadd.f32 %v2231, %v2285
          %s2288 = sadd.s32 %s2092, 8
          %s2289 = sshra.s32 %s2288, 3
          %s2290 = sand.u32 %s2288, 7
          %s2291 = smul.u32 %s2289, 2
          %s2292 = smul.addr %s2291, 8
          %s2293 = scalar_lea.vmem [#allocation2], %s2292
          %v2294 = vld [vmem:[%s2293] ss:$8 sm:$0x3]
          %s2295 = scalar_lea.vmem [#allocation12], 112
          %v2296 = vld [vmem:[%s2295] sm:$0xff]
          %v2297 = vld [vmem:[%s2295 + $0x8] sm:$0xff]
          %v2299 = vlaneseq
          %v2300 = vshrl.u32 %v2299, 7
          %v2301 = vsub.s32 0, %v2300
          %v2302 = vrot.slane %v2294, %v2301
          %v2303 = vlaneseq
          %v2304 = vshrl.u32 %v2303, 7
          %v2305 = vsub.s32 1, %v2304
          %v2306 = vrot.slane %v2294, %v2305
          %v2309 = vmul.f32 %v2302, %v2296
          %v2310 = vmul.f32 %v2306, %v2297
          %v2311 = vadd.f32 %v2258, %v2309
          %v2312 = vadd.f32 %v2259, %v2310
          %s2313 = sadd.s32 %s2092, 9
          %s2314 = sshra.s32 %s2313, 3
          %s2315 = sand.u32 %s2313, 7
          %s2316 = sshra.s32 %s2313, 3
          %s2317 = sand.u32 %s2313, 7
          %s2318 = smul.u32 %s2314, 2
          %s2319 = smul.u32 %s2318, 8
          %s2320 = sadd.s32 %s2319, %s2317
          %s2321 = scalar_lea.vmem [#allocation2], %s2320
          %v2322 = vld [vmem:[%s2321] ss:$8 sm:$0x3]
          %s2323 = scalar_lea.vmem [#allocation12], 128
          %v2324 = vld [vmem:[%s2323] sm:$0xff]
          %v2325 = vld [vmem:[%s2323 + $0x8] sm:$0xff]
          %v2327 = vlaneseq
          %v2328 = vshrl.u32 %v2327, 7
          %v2329 = vsub.s32 0, %v2328
          %v2330 = vrot.slane %v2322, %v2329
          %v2331 = vlaneseq
          %v2332 = vshrl.u32 %v2331, 7
          %v2333 = vsub.s32 1, %v2332
          %v2334 = vrot.slane %v2322, %v2333
          %v2337 = vmul.f32 %v2330, %v2324
          %v2338 = vmul.f32 %v2334, %v2325
          %v2339 = vadd.f32 %v2286, %v2337
          %v2340 = vadd.f32 %v2287, %v2338
          %s2341 = sadd.s32 %s2092, 10
          %s2342 = sshra.s32 %s2341, 3
          %s2343 = sand.u32 %s2341, 7
          %s2344 = sshra.s32 %s2341, 3
          %s2345 = sand.u32 %s2341, 7
          %s2346 = smul.u32 %s2342, 2
          %s2347 = smul.u32 %s2346, 8
          %s2348 = sadd.s32 %s2347, %s2345
          %s2349 = scalar_lea.vmem [#allocation2], %s2348
          %v2350 = vld [vmem:[%s2349] ss:$8 sm:$0x3]
          %s2351 = scalar_lea.vmem [#allocation12], 144
          %v2352 = vld [vmem:[%s2351] sm:$0xff]
          %v2353 = vld [vmem:[%s2351 + $0x8] sm:$0xff]
          %v2355 = vlaneseq
          %v2356 = vshrl.u32 %v2355, 7
          %v2357 = vsub.s32 0, %v2356
          %v2358 = vrot.slane %v2350, %v2357
          %v2359 = vlaneseq
          %v2360 = vshrl.u32 %v2359, 7
          %v2361 = vsub.s32 1, %v2360
          %v2362 = vrot.slane %v2350, %v2361
          %v2365 = vmul.f32 %v2358, %v2352
          %v2366 = vmul.f32 %v2362, %v2353
          %v2367 = vadd.f32 %v2311, %v2365
          %v2368 = vadd.f32 %v2312, %v2366
          %s2369 = sadd.s32 %s2092, 11
          %s2370 = sshra.s32 %s2369, 3
          %s2371 = sand.u32 %s2369, 7
          %s2372 = sshra.s32 %s2369, 3
          %s2373 = sand.u32 %s2369, 7
          %s2374 = smul.u32 %s2370, 2
          %s2375 = smul.u32 %s2374, 8
          %s2376 = sadd.s32 %s2375, %s2373
          %s2377 = scalar_lea.vmem [#allocation2], %s2376
          %v2378 = vld [vmem:[%s2377] ss:$8 sm:$0x3]
          %s2379 = scalar_lea.vmem [#allocation12], 160
          %v2380 = vld [vmem:[%s2379] sm:$0xff]
          %v2381 = vld [vmem:[%s2379 + $0x8] sm:$0xff]
          %v2383 = vlaneseq
          %v2384 = vshrl.u32 %v2383, 7
          %v2385 = vsub.s32 0, %v2384
          %v2386 = vrot.slane %v2378, %v2385
          %v2387 = vlaneseq
          %v2388 = vshrl.u32 %v2387, 7
          %v2389 = vsub.s32 1, %v2388
          %v2390 = vrot.slane %v2378, %v2389
          %v2393 = vmul.f32 %v2386, %v2380
          %v2394 = vmul.f32 %v2390, %v2381
          %v2395 = vadd.f32 %v2339, %v2393
          %v2396 = vadd.f32 %v2340, %v2394
          %s2397 = sadd.s32 %s2092, 12
          %s2398 = sshra.s32 %s2397, 3
          %s2399 = sand.u32 %s2397, 7
          %s2400 = sshra.s32 %s2397, 3
          %s2401 = sand.u32 %s2397, 7
          %s2402 = smul.u32 %s2398, 2
          %s2403 = smul.u32 %s2402, 8
          %s2404 = sadd.s32 %s2403, %s2401
          %s2405 = scalar_lea.vmem [#allocation2], %s2404
          %v2406 = vld [vmem:[%s2405] ss:$8 sm:$0x3]
          %s2407 = scalar_lea.vmem [#allocation12], 176
          %v2408 = vld [vmem:[%s2407] sm:$0xff]
          %v2409 = vld [vmem:[%s2407 + $0x8] sm:$0xff]
          %v2411 = vlaneseq
          %v2412 = vshrl.u32 %v2411, 7
          %v2413 = vsub.s32 0, %v2412
          %v2414 = vrot.slane %v2406, %v2413
          %v2415 = vlaneseq
          %v2416 = vshrl.u32 %v2415, 7
          %v2417 = vsub.s32 1, %v2416
          %v2418 = vrot.slane %v2406, %v2417
          %v2421 = vmul.f32 %v2414, %v2408
          %v2422 = vmul.f32 %v2418, %v2409
          %v2423 = vadd.f32 %v2367, %v2421
          %v2424 = vadd.f32 %v2368, %v2422
          %s2425 = sadd.s32 %s2092, 13
          %s2426 = sshra.s32 %s2425, 3
          %s2427 = sand.u32 %s2425, 7
          %s2428 = sshra.s32 %s2425, 3
          %s2429 = sand.u32 %s2425, 7
          %s2430 = smul.u32 %s2426, 2
          %s2431 = smul.u32 %s2430, 8
          %s2432 = sadd.s32 %s2431, %s2429
          %s2433 = scalar_lea.vmem [#allocation2], %s2432
          %v2434 = vld [vmem:[%s2433] ss:$8 sm:$0x3]
          %s2435 = scalar_lea.vmem [#allocation12], 192
          %v2436 = vld [vmem:[%s2435] sm:$0xff]
          %v2437 = vld [vmem:[%s2435 + $0x8] sm:$0xff]
          %v2439 = vlaneseq
          %v2440 = vshrl.u32 %v2439, 7
          %v2441 = vsub.s32 0, %v2440
          %v2442 = vrot.slane %v2434, %v2441
          %v2443 = vlaneseq
          %v2444 = vshrl.u32 %v2443, 7
          %v2445 = vsub.s32 1, %v2444
          %v2446 = vrot.slane %v2434, %v2445
          %v2449 = vmul.f32 %v2442, %v2436
          %v2450 = vmul.f32 %v2446, %v2437
          %v2451 = vadd.f32 %v2395, %v2449
          %v2452 = vadd.f32 %v2396, %v2450
          %s2453 = sadd.s32 %s2092, 14
          %s2454 = sshra.s32 %s2453, 3
          %s2455 = sand.u32 %s2453, 7
          %s2456 = sshra.s32 %s2453, 3
          %s2457 = sand.u32 %s2453, 7
          %s2458 = smul.u32 %s2454, 2
          %s2459 = smul.u32 %s2458, 8
          %s2460 = sadd.s32 %s2459, %s2457
          %s2461 = scalar_lea.vmem [#allocation2], %s2460
          %v2462 = vld [vmem:[%s2461] ss:$8 sm:$0x3]
          %s2463 = scalar_lea.vmem [#allocation12], 208
          %v2464 = vld [vmem:[%s2463] sm:$0xff]
          %v2465 = vld [vmem:[%s2463 + $0x8] sm:$0xff]
          %v2467 = vlaneseq
          %v2468 = vshrl.u32 %v2467, 7
          %v2469 = vsub.s32 0, %v2468
          %v2470 = vrot.slane %v2462, %v2469
          %v2471 = vlaneseq
          %v2472 = vshrl.u32 %v2471, 7
          %v2473 = vsub.s32 1, %v2472
          %v2474 = vrot.slane %v2462, %v2473
          %v2477 = vmul.f32 %v2470, %v2464
          %v2478 = vmul.f32 %v2474, %v2465
          %v2479 = vadd.f32 %v2423, %v2477
          %v2480 = vadd.f32 %v2424, %v2478
          %s2481 = sadd.s32 %s2092, 15
          %s2482 = sshra.s32 %s2481, 3
          %s2483 = sand.u32 %s2481, 7
          %s2484 = sshra.s32 %s2481, 3
          %s2485 = sand.u32 %s2481, 7
          %s2486 = smul.u32 %s2482, 2
          %s2487 = smul.u32 %s2486, 8
          %s2488 = sadd.s32 %s2487, %s2485
          %s2489 = scalar_lea.vmem [#allocation2], %s2488
          %v2490 = vld [vmem:[%s2489] ss:$8 sm:$0x3]
          %s2491 = scalar_lea.vmem [#allocation12], 224
          %v2492 = vld [vmem:[%s2491] sm:$0xff]
          %v2493 = vld [vmem:[%s2491 + $0x8] sm:$0xff]
          %v2495 = vlaneseq
          %v2496 = vshrl.u32 %v2495, 7
          %v2497 = vsub.s32 0, %v2496
          %v2498 = vrot.slane %v2490, %v2497
          %v2499 = vlaneseq
          %v2500 = vshrl.u32 %v2499, 7
          %v2501 = vsub.s32 1, %v2500
          %v2502 = vrot.slane %v2490, %v2501
          %v2505 = vmul.f32 %v2498, %v2492
          %v2506 = vmul.f32 %v2502, %v2493
          %v2507 = vadd.f32 %v2451, %v2505
          %v2508 = vadd.f32 %v2452, %v2506
          %s2509 = sadd.s32 %s2092, 16
          %s2510 = sshra.s32 %s2509, 3
          %s2511 = sand.u32 %s2509, 7
          %s2512 = smul.u32 %s2510, 2
          %s2513 = smul.addr %s2512, 8
          %s2514 = scalar_lea.vmem [#allocation2], %s2513
          %v2515 = vld [vmem:[%s2514] ss:$8 sm:$0x3]
          %s2516 = scalar_lea.vmem [#allocation12], 240
          %v2517 = vld [vmem:[%s2516] sm:$0xff]
          %v2518 = vld [vmem:[%s2516 + $0x8] sm:$0xff]
          %v2520 = vlaneseq
          %v2521 = vshrl.u32 %v2520, 7
          %v2522 = vsub.s32 0, %v2521
          %v2523 = vrot.slane %v2515, %v2522
          %v2524 = vlaneseq
          %v2525 = vshrl.u32 %v2524, 7
          %v2526 = vsub.s32 1, %v2525
          %v2527 = vrot.slane %v2515, %v2526
          %v2530 = vmul.f32 %v2523, %v2517
          %v2531 = vmul.f32 %v2527, %v2518
          %v2532 = vadd.f32 %v2479, %v2530
          %v2533 = vadd.f32 %v2480, %v2531
          %s2534 = sadd.s32 %s2092, 17
          %s2535 = sshra.s32 %s2534, 3
          %s2536 = sand.u32 %s2534, 7
          %s2537 = sshra.s32 %s2534, 3
          %s2538 = sand.u32 %s2534, 7
          %s2539 = smul.u32 %s2535, 2
          %s2540 = smul.u32 %s2539, 8
          %s2541 = sadd.s32 %s2540, %s2538
          %s2542 = scalar_lea.vmem [#allocation2], %s2541
          %v2543 = vld [vmem:[%s2542] ss:$8 sm:$0x3]
          %s2544 = scalar_lea.vmem [#allocation12], 256
          %v2545 = vld [vmem:[%s2544] sm:$0xff]
          %v2546 = vld [vmem:[%s2544 + $0x8] sm:$0xff]
          %v2548 = vlaneseq
          %v2549 = vshrl.u32 %v2548, 7
          %v2550 = vsub.s32 0, %v2549
          %v2551 = vrot.slane %v2543, %v2550
          %v2552 = vlaneseq
          %v2553 = vshrl.u32 %v2552, 7
          %v2554 = vsub.s32 1, %v2553
          %v2555 = vrot.slane %v2543, %v2554
          %v2558 = vmul.f32 %v2551, %v2545
          %v2559 = vmul.f32 %v2555, %v2546
          %v2560 = vadd.f32 %v2507, %v2558
          %v2561 = vadd.f32 %v2508, %v2559
          %s2562 = sadd.s32 %s2092, 18
          %s2563 = sshra.s32 %s2562, 3
          %s2564 = sand.u32 %s2562, 7
          %s2565 = sshra.s32 %s2562, 3
          %s2566 = sand.u32 %s2562, 7
          %s2567 = smul.u32 %s2563, 2
          %s2568 = smul.u32 %s2567, 8
          %s2569 = sadd.s32 %s2568, %s2566
          %s2570 = scalar_lea.vmem [#allocation2], %s2569
          %v2571 = vld [vmem:[%s2570] ss:$8 sm:$0x3]
          %s2572 = scalar_lea.vmem [#allocation12], 272
          %v2573 = vld [vmem:[%s2572] sm:$0xff]
          %v2574 = vld [vmem:[%s2572 + $0x8] sm:$0xff]
          %v2576 = vlaneseq
          %v2577 = vshrl.u32 %v2576, 7
          %v2578 = vsub.s32 0, %v2577
          %v2579 = vrot.slane %v2571, %v2578
          %v2580 = vlaneseq
          %v2581 = vshrl.u32 %v2580, 7
          %v2582 = vsub.s32 1, %v2581
          %v2583 = vrot.slane %v2571, %v2582
          %v2586 = vmul.f32 %v2579, %v2573
          %v2587 = vmul.f32 %v2583, %v2574
          %v2588 = vadd.f32 %v2532, %v2586
          %v2589 = vadd.f32 %v2533, %v2587
          %s2590 = sadd.s32 %s2092, 19
          %s2591 = sshra.s32 %s2590, 3
          %s2592 = sand.u32 %s2590, 7
          %s2593 = sshra.s32 %s2590, 3
          %s2594 = sand.u32 %s2590, 7
          %s2595 = smul.u32 %s2591, 2
          %s2596 = smul.u32 %s2595, 8
          %s2597 = sadd.s32 %s2596, %s2594
          %s2598 = scalar_lea.vmem [#allocation2], %s2597
          %v2599 = vld [vmem:[%s2598] ss:$8 sm:$0x3]
          %s2600 = scalar_lea.vmem [#allocation12], 288
          %v2601 = vld [vmem:[%s2600] sm:$0xff]
          %v2602 = vld [vmem:[%s2600 + $0x8] sm:$0xff]
          %v2604 = vlaneseq
          %v2605 = vshrl.u32 %v2604, 7
          %v2606 = vsub.s32 0, %v2605
          %v2607 = vrot.slane %v2599, %v2606
          %v2608 = vlaneseq
          %v2609 = vshrl.u32 %v2608, 7
          %v2610 = vsub.s32 1, %v2609
          %v2611 = vrot.slane %v2599, %v2610
          %v2614 = vmul.f32 %v2607, %v2601
          %v2615 = vmul.f32 %v2611, %v2602
          %v2616 = vadd.f32 %v2560, %v2614
          %v2617 = vadd.f32 %v2561, %v2615
          %s2618 = sadd.s32 %s2092, 20
          %s2619 = sshra.s32 %s2618, 3
          %s2620 = sand.u32 %s2618, 7
          %s2621 = sshra.s32 %s2618, 3
          %s2622 = sand.u32 %s2618, 7
          %s2623 = smul.u32 %s2619, 2
          %s2624 = smul.u32 %s2623, 8
          %s2625 = sadd.s32 %s2624, %s2622
          %s2626 = scalar_lea.vmem [#allocation2], %s2625
          %v2627 = vld [vmem:[%s2626] ss:$8 sm:$0x3]
          %s2628 = scalar_lea.vmem [#allocation12], 304
          %v2629 = vld [vmem:[%s2628] sm:$0xff]
          %v2630 = vld [vmem:[%s2628 + $0x8] sm:$0xff]
          %v2632 = vlaneseq
          %v2633 = vshrl.u32 %v2632, 7
          %v2634 = vsub.s32 0, %v2633
          %v2635 = vrot.slane %v2627, %v2634
          %v2636 = vlaneseq
          %v2637 = vshrl.u32 %v2636, 7
          %v2638 = vsub.s32 1, %v2637
          %v2639 = vrot.slane %v2627, %v2638
          %v2642 = vmul.f32 %v2635, %v2629
          %v2643 = vmul.f32 %v2639, %v2630
          %v2644 = vadd.f32 %v2588, %v2642
          %v2645 = vadd.f32 %v2589, %v2643
          %s2646 = sadd.s32 %s2092, 21
          %s2647 = sshra.s32 %s2646, 3
          %s2648 = sand.u32 %s2646, 7
          %s2649 = sshra.s32 %s2646, 3
          %s2650 = sand.u32 %s2646, 7
          %s2651 = smul.u32 %s2647, 2
          %s2652 = smul.u32 %s2651, 8
          %s2653 = sadd.s32 %s2652, %s2650
          %s2654 = scalar_lea.vmem [#allocation2], %s2653
          %v2655 = vld [vmem:[%s2654] ss:$8 sm:$0x3]
          %s2656 = scalar_lea.vmem [#allocation12], 320
          %v2657 = vld [vmem:[%s2656] sm:$0xff]
          %v2658 = vld [vmem:[%s2656 + $0x8] sm:$0xff]
          %v2660 = vlaneseq
          %v2661 = vshrl.u32 %v2660, 7
          %v2662 = vsub.s32 0, %v2661
          %v2663 = vrot.slane %v2655, %v2662
          %v2664 = vlaneseq
          %v2665 = vshrl.u32 %v2664, 7
          %v2666 = vsub.s32 1, %v2665
          %v2667 = vrot.slane %v2655, %v2666
          %v2670 = vmul.f32 %v2663, %v2657
          %v2671 = vmul.f32 %v2667, %v2658
          %v2672 = vadd.f32 %v2616, %v2670
          %v2673 = vadd.f32 %v2617, %v2671
          %s2674 = sadd.s32 %s2092, 22
          %s2675 = sshra.s32 %s2674, 3
          %s2676 = sand.u32 %s2674, 7
          %s2677 = sshra.s32 %s2674, 3
          %s2678 = sand.u32 %s2674, 7
          %s2679 = smul.u32 %s2675, 2
          %s2680 = smul.u32 %s2679, 8
          %s2681 = sadd.s32 %s2680, %s2678
          %s2682 = scalar_lea.vmem [#allocation2], %s2681
          %v2683 = vld [vmem:[%s2682] ss:$8 sm:$0x3]
          %s2684 = scalar_lea.vmem [#allocation12], 336
          %v2685 = vld [vmem:[%s2684] sm:$0xff]
          %v2686 = vld [vmem:[%s2684 + $0x8] sm:$0xff]
          %v2688 = vlaneseq
          %v2689 = vshrl.u32 %v2688, 7
          %v2690 = vsub.s32 0, %v2689
          %v2691 = vrot.slane %v2683, %v2690
          %v2692 = vlaneseq
          %v2693 = vshrl.u32 %v2692, 7
          %v2694 = vsub.s32 1, %v2693
          %v2695 = vrot.slane %v2683, %v2694
          %v2698 = vmul.f32 %v2691, %v2685
          %v2699 = vmul.f32 %v2695, %v2686
          %v2700 = vadd.f32 %v2644, %v2698
          %v2701 = vadd.f32 %v2645, %v2699
          %s2702 = sadd.s32 %s2092, 23
          %s2703 = sshra.s32 %s2702, 3
          %s2704 = sand.u32 %s2702, 7
          %s2705 = sshra.s32 %s2702, 3
          %s2706 = sand.u32 %s2702, 7
          %s2707 = smul.u32 %s2703, 2
          %s2708 = smul.u32 %s2707, 8
          %s2709 = sadd.s32 %s2708, %s2706
          %s2710 = scalar_lea.vmem [#allocation2], %s2709
          %v2711 = vld [vmem:[%s2710] ss:$8 sm:$0x3]
          %s2712 = scalar_lea.vmem [#allocation12], 352
          %v2713 = vld [vmem:[%s2712] sm:$0xff]
          %v2714 = vld [vmem:[%s2712 + $0x8] sm:$0xff]
          %v2716 = vlaneseq
          %v2717 = vshrl.u32 %v2716, 7
          %v2718 = vsub.s32 0, %v2717
          %v2719 = vrot.slane %v2711, %v2718
          %v2720 = vlaneseq
          %v2721 = vshrl.u32 %v2720, 7
          %v2722 = vsub.s32 1, %v2721
          %v2723 = vrot.slane %v2711, %v2722
          %v2726 = vmul.f32 %v2719, %v2713
          %v2727 = vmul.f32 %v2723, %v2714
          %v2728 = vadd.f32 %v2672, %v2726
          %v2729 = vadd.f32 %v2673, %v2727
          %s2730 = sadd.s32 %s2092, 24
          %s2731 = sshra.s32 %s2730, 3
          %s2732 = sand.u32 %s2730, 7
          %s2733 = smul.u32 %s2731, 2
          %s2734 = smul.addr %s2733, 8
          %s2735 = scalar_lea.vmem [#allocation2], %s2734
          %v2736 = vld [vmem:[%s2735] ss:$8 sm:$0x3]
          %s2737 = scalar_lea.vmem [#allocation12], 368
          %v2738 = vld [vmem:[%s2737] sm:$0xff]
          %v2739 = vld [vmem:[%s2737 + $0x8] sm:$0xff]
          %v2741 = vlaneseq
          %v2742 = vshrl.u32 %v2741, 7
          %v2743 = vsub.s32 0, %v2742
          %v2744 = vrot.slane %v2736, %v2743
          %v2745 = vlaneseq
          %v2746 = vshrl.u32 %v2745, 7
          %v2747 = vsub.s32 1, %v2746
          %v2748 = vrot.slane %v2736, %v2747
          %v2751 = vmul.f32 %v2744, %v2738
          %v2752 = vmul.f32 %v2748, %v2739
          %v2753 = vadd.f32 %v2700, %v2751
          %v2754 = vadd.f32 %v2701, %v2752
          %s2755 = sadd.s32 %s2092, 25
          %s2756 = sshra.s32 %s2755, 3
          %s2757 = sand.u32 %s2755, 7
          %s2758 = sshra.s32 %s2755, 3
          %s2759 = sand.u32 %s2755, 7
          %s2760 = smul.u32 %s2756, 2
          %s2761 = smul.u32 %s2760, 8
          %s2762 = sadd.s32 %s2761, %s2759
          %s2763 = scalar_lea.vmem [#allocation2], %s2762
          %v2764 = vld [vmem:[%s2763] ss:$8 sm:$0x3]
          %s2765 = scalar_lea.vmem [#allocation12], 384
          %v2766 = vld [vmem:[%s2765] sm:$0xff]
          %v2767 = vld [vmem:[%s2765 + $0x8] sm:$0xff]
          %v2769 = vlaneseq
          %v2770 = vshrl.u32 %v2769, 7
          %v2771 = vsub.s32 0, %v2770
          %v2772 = vrot.slane %v2764, %v2771
          %v2773 = vlaneseq
          %v2774 = vshrl.u32 %v2773, 7
          %v2775 = vsub.s32 1, %v2774
          %v2776 = vrot.slane %v2764, %v2775
          %v2779 = vmul.f32 %v2772, %v2766
          %v2780 = vmul.f32 %v2776, %v2767
          %v2781 = vadd.f32 %v2728, %v2779
          %v2782 = vadd.f32 %v2729, %v2780
          %s2783 = sadd.s32 %s2092, 26
          %s2784 = sshra.s32 %s2783, 3
          %s2785 = sand.u32 %s2783, 7
          %s2786 = sshra.s32 %s2783, 3
          %s2787 = sand.u32 %s2783, 7
          %s2788 = smul.u32 %s2784, 2
          %s2789 = smul.u32 %s2788, 8
          %s2790 = sadd.s32 %s2789, %s2787
          %s2791 = scalar_lea.vmem [#allocation2], %s2790
          %v2792 = vld [vmem:[%s2791] ss:$8 sm:$0x3]
          %s2793 = scalar_lea.vmem [#allocation12], 400
          %v2794 = vld [vmem:[%s2793] sm:$0xff]
          %v2795 = vld [vmem:[%s2793 + $0x8] sm:$0xff]
          %v2797 = vlaneseq
          %v2798 = vshrl.u32 %v2797, 7
          %v2799 = vsub.s32 0, %v2798
          %v2800 = vrot.slane %v2792, %v2799
          %v2801 = vlaneseq
          %v2802 = vshrl.u32 %v2801, 7
          %v2803 = vsub.s32 1, %v2802
          %v2804 = vrot.slane %v2792, %v2803
          %v2807 = vmul.f32 %v2800, %v2794
          %v2808 = vmul.f32 %v2804, %v2795
          %v2809 = vadd.f32 %v2753, %v2807
          %v2810 = vadd.f32 %v2754, %v2808
          %s2811 = sadd.s32 %s2092, 27
          %s2812 = sshra.s32 %s2811, 3
          %s2813 = sand.u32 %s2811, 7
          %s2814 = sshra.s32 %s2811, 3
          %s2815 = sand.u32 %s2811, 7
          %s2816 = smul.u32 %s2812, 2
          %s2817 = smul.u32 %s2816, 8
          %s2818 = sadd.s32 %s2817, %s2815
          %s2819 = scalar_lea.vmem [#allocation2], %s2818
          %v2820 = vld [vmem:[%s2819] ss:$8 sm:$0x3]
          %s2821 = scalar_lea.vmem [#allocation12], 416
          %v2822 = vld [vmem:[%s2821] sm:$0xff]
          %v2823 = vld [vmem:[%s2821 + $0x8] sm:$0xff]
          %v2825 = vlaneseq
          %v2826 = vshrl.u32 %v2825, 7
          %v2827 = vsub.s32 0, %v2826
          %v2828 = vrot.slane %v2820, %v2827
          %v2829 = vlaneseq
          %v2830 = vshrl.u32 %v2829, 7
          %v2831 = vsub.s32 1, %v2830
          %v2832 = vrot.slane %v2820, %v2831
          %v2835 = vmul.f32 %v2828, %v2822
          %v2836 = vmul.f32 %v2832, %v2823
          %v2837 = vadd.f32 %v2781, %v2835
          %v2838 = vadd.f32 %v2782, %v2836
          %s2839 = sadd.s32 %s2092, 28
          %s2840 = sshra.s32 %s2839, 3
          %s2841 = sand.u32 %s2839, 7
          %s2842 = sshra.s32 %s2839, 3
          %s2843 = sand.u32 %s2839, 7
          %s2844 = smul.u32 %s2840, 2
          %s2845 = smul.u32 %s2844, 8
          %s2846 = sadd.s32 %s2845, %s2843
          %s2847 = scalar_lea.vmem [#allocation2], %s2846
          %v2848 = vld [vmem:[%s2847] ss:$8 sm:$0x3]
          %s2849 = scalar_lea.vmem [#allocation12], 432
          %v2850 = vld [vmem:[%s2849] sm:$0xff]
          %v2851 = vld [vmem:[%s2849 + $0x8] sm:$0xff]
          %v2853 = vlaneseq
          %v2854 = vshrl.u32 %v2853, 7
          %v2855 = vsub.s32 0, %v2854
          %v2856 = vrot.slane %v2848, %v2855
          %v2857 = vlaneseq
          %v2858 = vshrl.u32 %v2857, 7
          %v2859 = vsub.s32 1, %v2858
          %v2860 = vrot.slane %v2848, %v2859
          %v2863 = vmul.f32 %v2856, %v2850
          %v2864 = vmul.f32 %v2860, %v2851
          %v2865 = vadd.f32 %v2809, %v2863
          %v2866 = vadd.f32 %v2810, %v2864
          %s2867 = sadd.s32 %s2092, 29
          %s2868 = sshra.s32 %s2867, 3
          %s2869 = sand.u32 %s2867, 7
          %s2870 = sshra.s32 %s2867, 3
          %s2871 = sand.u32 %s2867, 7
          %s2872 = smul.u32 %s2868, 2
          %s2873 = smul.u32 %s2872, 8
          %s2874 = sadd.s32 %s2873, %s2871
          %s2875 = scalar_lea.vmem [#allocation2], %s2874
          %v2876 = vld [vmem:[%s2875] ss:$8 sm:$0x3]
          %s2877 = scalar_lea.vmem [#allocation12], 448
          %v2878 = vld [vmem:[%s2877] sm:$0xff]
          %v2879 = vld [vmem:[%s2877 + $0x8] sm:$0xff]
          %v2881 = vlaneseq
          %v2882 = vshrl.u32 %v2881, 7
          %v2883 = vsub.s32 0, %v2882
          %v2884 = vrot.slane %v2876, %v2883
          %v2885 = vlaneseq
          %v2886 = vshrl.u32 %v2885, 7
          %v2887 = vsub.s32 1, %v2886
          %v2888 = vrot.slane %v2876, %v2887
          %v2891 = vmul.f32 %v2884, %v2878
          %v2892 = vmul.f32 %v2888, %v2879
          %v2893 = vadd.f32 %v2837, %v2891
          %v2894 = vadd.f32 %v2838, %v2892
          %s2895 = sadd.s32 %s2092, 30
          %s2896 = sshra.s32 %s2895, 3
          %s2897 = sand.u32 %s2895, 7
          %s2898 = sshra.s32 %s2895, 3
          %s2899 = sand.u32 %s2895, 7
          %s2900 = smul.u32 %s2896, 2
          %s2901 = smul.u32 %s2900, 8
          %s2902 = sadd.s32 %s2901, %s2899
          %s2903 = scalar_lea.vmem [#allocation2], %s2902
          %v2904 = vld [vmem:[%s2903] ss:$8 sm:$0x3]
          %s2905 = scalar_lea.vmem [#allocation12], 464
          %v2906 = vld [vmem:[%s2905] sm:$0xff]
          %v2907 = vld [vmem:[%s2905 + $0x8] sm:$0xff]
          %v2909 = vlaneseq
          %v2910 = vshrl.u32 %v2909, 7
          %v2911 = vsub.s32 0, %v2910
          %v2912 = vrot.slane %v2904, %v2911
          %v2913 = vlaneseq
          %v2914 = vshrl.u32 %v2913, 7
          %v2915 = vsub.s32 1, %v2914
          %v2916 = vrot.slane %v2904, %v2915
          %v2919 = vmul.f32 %v2912, %v2906
          %v2920 = vmul.f32 %v2916, %v2907
          %v2921 = vadd.f32 %v2865, %v2919
          %v2922 = vadd.f32 %v2866, %v2920
          %s2923 = sadd.s32 %s2092, 31
          %s2924 = sshra.s32 %s2923, 3
          %s2925 = sand.u32 %s2923, 7
          %s2926 = sshra.s32 %s2923, 3
          %s2927 = sand.u32 %s2923, 7
          %s2928 = smul.u32 %s2924, 2
          %s2929 = smul.u32 %s2928, 8
          %s2930 = sadd.s32 %s2929, %s2927
          %s2931 = scalar_lea.vmem [#allocation2], %s2930
          %v2932 = vld [vmem:[%s2931] ss:$8 sm:$0x3]
          %s2933 = scalar_lea.vmem [#allocation12], 480
          %v2934 = vld [vmem:[%s2933] sm:$0xff]
          %v2935 = vld [vmem:[%s2933 + $0x8] sm:$0xff]
          %v2937 = vlaneseq
          %v2938 = vshrl.u32 %v2937, 7
          %v2939 = vsub.s32 0, %v2938
          %v2940 = vrot.slane %v2932, %v2939
          %v2941 = vlaneseq
          %v2942 = vshrl.u32 %v2941, 7
          %v2943 = vsub.s32 1, %v2942
          %v2944 = vrot.slane %v2932, %v2943
          %v2947 = vmul.f32 %v2940, %v2934
          %v2948 = vmul.f32 %v2944, %v2935
          %v2949 = vadd.f32 %v2893, %v2947
          %v2950 = vadd.f32 %v2894, %v2948
          %s2951 = sadd.s32 %s2092, 32
          %s2952 = sshra.s32 %s2951, 3
          %s2953 = sand.u32 %s2951, 7
          %s2954 = smul.u32 %s2952, 2
          %s2955 = smul.addr %s2954, 8
          %s2956 = scalar_lea.vmem [#allocation2], %s2955
          %v2957 = vld [vmem:[%s2956] ss:$8 sm:$0x3]
          %s2958 = scalar_lea.vmem [#allocation12], 496
          %v2959 = vld [vmem:[%s2958] sm:$0xff]
          %v2960 = vld [vmem:[%s2958 + $0x8] sm:$0xff]
          %v2962 = vlaneseq
          %v2963 = vshrl.u32 %v2962, 7
          %v2964 = vsub.s32 0, %v2963
          %v2965 = vrot.slane %v2957, %v2964
          %v2966 = vlaneseq
          %v2967 = vshrl.u32 %v2966, 7
          %v2968 = vsub.s32 1, %v2967
          %v2969 = vrot.slane %v2957, %v2968
          %v2972 = vmul.f32 %v2965, %v2959
          %v2973 = vmul.f32 %v2969, %v2960
          %v2974 = vadd.f32 %v2921, %v2972
          %v2975 = vadd.f32 %v2922, %v2973
          %s2976 = sadd.s32 %s2092, 33
          %s2977 = sshra.s32 %s2976, 3
          %s2978 = sand.u32 %s2976, 7
          %s2979 = sshra.s32 %s2976, 3
          %s2980 = sand.u32 %s2976, 7
          %s2981 = smul.u32 %s2977, 2
          %s2982 = smul.u32 %s2981, 8
          %s2983 = sadd.s32 %s2982, %s2980
          %s2984 = scalar_lea.vmem [#allocation2], %s2983
          %v2985 = vld [vmem:[%s2984] ss:$8 sm:$0x3]
          %s2986 = scalar_lea.vmem [#allocation12], 512
          %v2987 = vld [vmem:[%s2986] sm:$0xff]
          %v2988 = vld [vmem:[%s2986 + $0x8] sm:$0xff]
          %v2990 = vlaneseq
          %v2991 = vshrl.u32 %v2990, 7
          %v2992 = vsub.s32 0, %v2991
          %v2993 = vrot.slane %v2985, %v2992
          %v2994 = vlaneseq
          %v2995 = vshrl.u32 %v2994, 7
          %v2996 = vsub.s32 1, %v2995
          %v2997 = vrot.slane %v2985, %v2996
          %v3000 = vmul.f32 %v2993, %v2987
          %v3001 = vmul.f32 %v2997, %v2988
          %v3002 = vadd.f32 %v2949, %v3000
          %v3003 = vadd.f32 %v2950, %v3001
          %s3004 = sadd.s32 %s2092, 34
          %s3005 = sshra.s32 %s3004, 3
          %s3006 = sand.u32 %s3004, 7
          %s3007 = sshra.s32 %s3004, 3
          %s3008 = sand.u32 %s3004, 7
          %s3009 = smul.u32 %s3005, 2
          %s3010 = smul.u32 %s3009, 8
          %s3011 = sadd.s32 %s3010, %s3008
          %s3012 = scalar_lea.vmem [#allocation2], %s3011
          %v3013 = vld [vmem:[%s3012] ss:$8 sm:$0x3]
          %s3014 = scalar_lea.vmem [#allocation12], 528
          %v3015 = vld [vmem:[%s3014] sm:$0xff]
          %v3016 = vld [vmem:[%s3014 + $0x8] sm:$0xff]
          %v3018 = vlaneseq
          %v3019 = vshrl.u32 %v3018, 7
          %v3020 = vsub.s32 0, %v3019
          %v3021 = vrot.slane %v3013, %v3020
          %v3022 = vlaneseq
          %v3023 = vshrl.u32 %v3022, 7
          %v3024 = vsub.s32 1, %v3023
          %v3025 = vrot.slane %v3013, %v3024
          %v3028 = vmul.f32 %v3021, %v3015
          %v3029 = vmul.f32 %v3025, %v3016
          %v3030 = vadd.f32 %v2974, %v3028
          %v3031 = vadd.f32 %v2975, %v3029
          %s3032 = sadd.s32 %s2092, 35
          %s3033 = sshra.s32 %s3032, 3
          %s3034 = sand.u32 %s3032, 7
          %s3035 = sshra.s32 %s3032, 3
          %s3036 = sand.u32 %s3032, 7
          %s3037 = smul.u32 %s3033, 2
          %s3038 = smul.u32 %s3037, 8
          %s3039 = sadd.s32 %s3038, %s3036
          %s3040 = scalar_lea.vmem [#allocation2], %s3039
          %v3041 = vld [vmem:[%s3040] ss:$8 sm:$0x3]
          %s3042 = scalar_lea.vmem [#allocation12], 544
          %v3043 = vld [vmem:[%s3042] sm:$0xff]
          %v3044 = vld [vmem:[%s3042 + $0x8] sm:$0xff]
          %v3046 = vlaneseq
          %v3047 = vshrl.u32 %v3046, 7
          %v3048 = vsub.s32 0, %v3047
          %v3049 = vrot.slane %v3041, %v3048
          %v3050 = vlaneseq
          %v3051 = vshrl.u32 %v3050, 7
          %v3052 = vsub.s32 1, %v3051
          %v3053 = vrot.slane %v3041, %v3052
          %v3056 = vmul.f32 %v3049, %v3043
          %v3057 = vmul.f32 %v3053, %v3044
          %v3058 = vadd.f32 %v3002, %v3056
          %v3059 = vadd.f32 %v3003, %v3057
          %s3060 = sadd.s32 %s2092, 36
          %s3061 = sshra.s32 %s3060, 3
          %s3062 = sand.u32 %s3060, 7
          %s3063 = sshra.s32 %s3060, 3
          %s3064 = sand.u32 %s3060, 7
          %s3065 = smul.u32 %s3061, 2
          %s3066 = smul.u32 %s3065, 8
          %s3067 = sadd.s32 %s3066, %s3064
          %s3068 = scalar_lea.vmem [#allocation2], %s3067
          %v3069 = vld [vmem:[%s3068] ss:$8 sm:$0x3]
          %s3070 = scalar_lea.vmem [#allocation12], 560
          %v3071 = vld [vmem:[%s3070] sm:$0xff]
          %v3072 = vld [vmem:[%s3070 + $0x8] sm:$0xff]
          %v3074 = vlaneseq
          %v3075 = vshrl.u32 %v3074, 7
          %v3076 = vsub.s32 0, %v3075
          %v3077 = vrot.slane %v3069, %v3076
          %v3078 = vlaneseq
          %v3079 = vshrl.u32 %v3078, 7
          %v3080 = vsub.s32 1, %v3079
          %v3081 = vrot.slane %v3069, %v3080
          %v3084 = vmul.f32 %v3077, %v3071
          %v3085 = vmul.f32 %v3081, %v3072
          %v3086 = vadd.f32 %v3030, %v3084
          %v3087 = vadd.f32 %v3031, %v3085
          %s3088 = sadd.s32 %s2092, 37
          %s3089 = sshra.s32 %s3088, 3
          %s3090 = sand.u32 %s3088, 7
          %s3091 = sshra.s32 %s3088, 3
          %s3092 = sand.u32 %s3088, 7
          %s3093 = smul.u32 %s3089, 2
          %s3094 = smul.u32 %s3093, 8
          %s3095 = sadd.s32 %s3094, %s3092
          %s3096 = scalar_lea.vmem [#allocation2], %s3095
          %v3097 = vld [vmem:[%s3096] ss:$8 sm:$0x3]
          %s3098 = scalar_lea.vmem [#allocation12], 576
          %v3099 = vld [vmem:[%s3098] sm:$0xff]
          %v3100 = vld [vmem:[%s3098 + $0x8] sm:$0xff]
          %v3102 = vlaneseq
          %v3103 = vshrl.u32 %v3102, 7
          %v3104 = vsub.s32 0, %v3103
          %v3105 = vrot.slane %v3097, %v3104
          %v3106 = vlaneseq
          %v3107 = vshrl.u32 %v3106, 7
          %v3108 = vsub.s32 1, %v3107
          %v3109 = vrot.slane %v3097, %v3108
          %v3112 = vmul.f32 %v3105, %v3099
          %v3113 = vmul.f32 %v3109, %v3100
          %v3114 = vadd.f32 %v3058, %v3112
          %v3115 = vadd.f32 %v3059, %v3113
          %s3116 = sadd.s32 %s2092, 38
          %s3117 = sshra.s32 %s3116, 3
          %s3118 = sand.u32 %s3116, 7
          %s3119 = sshra.s32 %s3116, 3
          %s3120 = sand.u32 %s3116, 7
          %s3121 = smul.u32 %s3117, 2
          %s3122 = smul.u32 %s3121, 8
          %s3123 = sadd.s32 %s3122, %s3120
          %s3124 = scalar_lea.vmem [#allocation2], %s3123
          %v3125 = vld [vmem:[%s3124] ss:$8 sm:$0x3]
          %s3126 = scalar_lea.vmem [#allocation12], 592
          %v3127 = vld [vmem:[%s3126] sm:$0xff]
          %v3128 = vld [vmem:[%s3126 + $0x8] sm:$0xff]
          %v3130 = vlaneseq
          %v3131 = vshrl.u32 %v3130, 7
          %v3132 = vsub.s32 0, %v3131
          %v3133 = vrot.slane %v3125, %v3132
          %v3134 = vlaneseq
          %v3135 = vshrl.u32 %v3134, 7
          %v3136 = vsub.s32 1, %v3135
          %v3137 = vrot.slane %v3125, %v3136
          %v3140 = vmul.f32 %v3133, %v3127
          %v3141 = vmul.f32 %v3137, %v3128
          %v3142 = vadd.f32 %v3086, %v3140
          %v3143 = vadd.f32 %v3087, %v3141
          %v3144 = vadd.f32 %v3114, %v3142
          %v3145 = vadd.f32 %v3115, %v3143
          %v3146 = vmul.f32 %v3144, 0.5
          %v3147 = vmul.f32 %v3145, 0.5
          %v3148 = vtanh.pop %v3146
          %v3149 = vtanh.pop %v3147
          %v3150 = vadd.f32 %v3148, 1.0
          %v3151 = vadd.f32 %v3149, 1.0
          %v3152 = vmul.f32 %v3150, 0.5
          %v3153 = vmul.f32 %v3151, 0.5
          %v3154 = vmul.f32 %v3144, %v3152
          %v3155 = vmul.f32 %v3145, %v3153
          %s3156 = sshra.s32 %s2092, 3
          %s3157 = sand.u32 %s2092, 7
          %s3158 = smul.u32 %s3156, 2
          %s3159 = smul.addr %s3158, 8
          %s3160 = scalar_lea.vmem [#allocation3], %s3159
          %3161 = vst [vmem:[%s3160] sm:$0xff] %v3154
          %3162 = vst [vmem:[%s3160 + $0x8] sm:$0xff] %v3155
        $region93: #{tpu_custom_call.1} parent=55 // loop_footer
          %s2091 = sadd.s32 1, %s2087
        $region94: #{tpu_custom_call.1} parent=55 // loop_footer_branch
          %2086 = sbr.rel target = $region90
        $region95: #{tpu_custom_call.1} parent=55 // loop_exit
          _
        %v3163 = vld [vmem:[#allocation3] sm:$0xff]
        %v3164 = vld [vmem:[#allocation3 + $0x8] sm:$0xff]
        %v3165 = vld [vmem:[#allocation3 + $0x10] sm:$0xff]
        %v3166 = vld [vmem:[#allocation3 + $0x18] sm:$0xff]
        %v3167 = vld [vmem:[#allocation3 + $0x20] sm:$0xff]
        %v3168 = vld [vmem:[#allocation3 + $0x28] sm:$0xff]
        %v3169 = vld [vmem:[#allocation3 + $0x30] sm:$0xff]
        %v3170 = vld [vmem:[#allocation3 + $0x38] sm:$0xff]
        %v3171 = vld [vmem:[#allocation3 + $0x40] sm:$0xff]
        %v3172 = vld [vmem:[#allocation3 + $0x48] sm:$0xff]
        %v3173 = vld [vmem:[#allocation3 + $0x50] sm:$0xff]
        %v3174 = vld [vmem:[#allocation3 + $0x58] sm:$0xff]
        %v3175 = vld [vmem:[#allocation3 + $0x60] sm:$0xff]
        %v3176 = vld [vmem:[#allocation3 + $0x68] sm:$0xff]
        %v3177 = vld [vmem:[#allocation3 + $0x70] sm:$0xff]
        %v3178 = vld [vmem:[#allocation3 + $0x78] sm:$0xff]
        %v3179 = vld [vmem:[#allocation3 + $0x80] sm:$0xff]
        %v3180 = vld [vmem:[#allocation3 + $0x88] sm:$0xff]
        %v3181 = vld [vmem:[#allocation3 + $0x90] sm:$0xff]
        %v3182 = vld [vmem:[#allocation3 + $0x98] sm:$0xff]
        %v3183 = vld [vmem:[#allocation3 + $0xa0] sm:$0xff]
        %v3184 = vld [vmem:[#allocation3 + $0xa8] sm:$0xff]
        %v3185 = vld [vmem:[#allocation3 + $0xb0] sm:$0xff]
        %v3186 = vld [vmem:[#allocation3 + $0xb8] sm:$0xff]
        %v3187 = vld [vmem:[#allocation3 + $0xc0] sm:$0xff]
        %v3188 = vld [vmem:[#allocation3 + $0xc8] sm:$0xff]
        %v3189 = vld [vmem:[#allocation3 + $0xd0] sm:$0xff]
        %v3190 = vld [vmem:[#allocation3 + $0xd8] sm:$0xff]
        %v3191 = vld [vmem:[#allocation3 + $0xe0] sm:$0xff]
        %v3192 = vld [vmem:[#allocation3 + $0xe8] sm:$0xff]
        %v3193 = vld [vmem:[#allocation3 + $0xf0] sm:$0xff]
        %v3194 = vld [vmem:[#allocation3 + $0xf8] sm:$0xff]
        %v3195 = vld [vmem:[#allocation3 + $0x100] sm:$0xff]
        %v3196 = vld [vmem:[#allocation3 + $0x108] sm:$0xff]
        %v3197 = vld [vmem:[#allocation3 + $0x110] sm:$0xff]
        %v3198 = vld [vmem:[#allocation3 + $0x118] sm:$0xff]
        %v3199 = vld [vmem:[#allocation3 + $0x120] sm:$0xff]
        %v3200 = vld [vmem:[#allocation3 + $0x128] sm:$0xff]
        %v3201 = vld [vmem:[#allocation3 + $0x130] sm:$0xff]
        %v3202 = vld [vmem:[#allocation3 + $0x138] sm:$0xff]
        %v3203 = vld [vmem:[#allocation3 + $0x140] sm:$0xff]
        %v3204 = vld [vmem:[#allocation3 + $0x148] sm:$0xff]
        %v3205 = vld [vmem:[#allocation3 + $0x150] sm:$0xff]
        %v3206 = vld [vmem:[#allocation3 + $0x158] sm:$0xff]
        %v3207 = vld [vmem:[#allocation3 + $0x160] sm:$0xff]
        %v3208 = vld [vmem:[#allocation3 + $0x168] sm:$0xff]
        %v3209 = vld [vmem:[#allocation3 + $0x170] sm:$0xff]
        %v3210 = vld [vmem:[#allocation3 + $0x178] sm:$0xff]
        %v3211 = vld [vmem:[#allocation3 + $0x180] sm:$0xff]
        %v3212 = vld [vmem:[#allocation3 + $0x188] sm:$0xff]
        %v3213 = vld [vmem:[#allocation3 + $0x190] sm:$0xff]
        %v3214 = vld [vmem:[#allocation3 + $0x198] sm:$0xff]
        %v3215 = vld [vmem:[#allocation3 + $0x1a0] sm:$0xff]
        %v3216 = vld [vmem:[#allocation3 + $0x1a8] sm:$0xff]
        %v3217 = vld [vmem:[#allocation3 + $0x1b0] sm:$0xff]
        %v3218 = vld [vmem:[#allocation3 + $0x1b8] sm:$0xff]
        %v3219 = vld [vmem:[#allocation3 + $0x1c0] sm:$0xff]
        %v3220 = vld [vmem:[#allocation3 + $0x1c8] sm:$0xff]
        %v3221 = vld [vmem:[#allocation3 + $0x1d0] sm:$0xff]
        %v3222 = vld [vmem:[#allocation3 + $0x1d8] sm:$0xff]
        %v3223 = vld [vmem:[#allocation3 + $0x1e0] sm:$0xff]
        %v3224 = vld [vmem:[#allocation3 + $0x1e8] sm:$0xff]
        %v3225 = vld [vmem:[#allocation3 + $0x1f0] sm:$0xff]
        %v3226 = vld [vmem:[#allocation3 + $0x1f8] sm:$0xff]
        %v3227 = vpack.c.bf16 %v3165, %v3163
        %v3228 = vpack.c.bf16 %v3166, %v3164
        %v3229 = vpack.c.bf16 %v3169, %v3167
        %v3230 = vpack.c.bf16 %v3170, %v3168
        %v3231 = vpack.c.bf16 %v3173, %v3171
        %v3232 = vpack.c.bf16 %v3174, %v3172
        %v3233 = vpack.c.bf16 %v3177, %v3175
        %v3234 = vpack.c.bf16 %v3178, %v3176
        %v3235 = vpack.c.bf16 %v3181, %v3179
        %v3236 = vpack.c.bf16 %v3182, %v3180
        %v3237 = vpack.c.bf16 %v3185, %v3183
        %v3238 = vpack.c.bf16 %v3186, %v3184
        %v3239 = vpack.c.bf16 %v3189, %v3187
        %v3240 = vpack.c.bf16 %v3190, %v3188
        %v3241 = vpack.c.bf16 %v3193, %v3191
        %v3242 = vpack.c.bf16 %v3194, %v3192
        %v3243 = vpack.c.bf16 %v3197, %v3195
        %v3244 = vpack.c.bf16 %v3198, %v3196
        %v3245 = vpack.c.bf16 %v3201, %v3199
        %v3246 = vpack.c.bf16 %v3202, %v3200
        %v3247 = vpack.c.bf16 %v3205, %v3203
        %v3248 = vpack.c.bf16 %v3206, %v3204
        %v3249 = vpack.c.bf16 %v3209, %v3207
        %v3250 = vpack.c.bf16 %v3210, %v3208
        %v3251 = vpack.c.bf16 %v3213, %v3211
        %v3252 = vpack.c.bf16 %v3214, %v3212
        %v3253 = vpack.c.bf16 %v3217, %v3215
        %v3254 = vpack.c.bf16 %v3218, %v3216
        %v3255 = vpack.c.bf16 %v3221, %v3219
        %v3256 = vpack.c.bf16 %v3222, %v3220
        %v3257 = vpack.c.bf16 %v3225, %v3223
        %v3258 = vpack.c.bf16 %v3226, %v3224
        %v3259 = vld [vmem:[#allocation13] sm:$0xf]
        %v3260 = vld [vmem:[#allocation13 + $0x4] sm:$0xf]
        %v3261 = vld [vmem:[#allocation13 + $0x8] sm:$0xf]
        %v3262 = vld [vmem:[#allocation13 + $0xc] sm:$0xf]
        %v3263 = vld [vmem:[#allocation13 + $0x10] sm:$0xf]
        %v3264 = vld [vmem:[#allocation13 + $0x14] sm:$0xf]
        %v3265 = vld [vmem:[#allocation13 + $0x18] sm:$0xf]
        %v3266 = vld [vmem:[#allocation13 + $0x1c] sm:$0xf]
        %v3267 = vld [vmem:[#allocation13 + $0x20] sm:$0xf]
        %v3268 = vld [vmem:[#allocation13 + $0x24] sm:$0xf]
        %v3269 = vld [vmem:[#allocation13 + $0x28] sm:$0xf]
        %v3270 = vld [vmem:[#allocation13 + $0x2c] sm:$0xf]
        %v3271 = vld [vmem:[#allocation13 + $0x30] sm:$0xf]
        %v3272 = vld [vmem:[#allocation13 + $0x34] sm:$0xf]
        %v3273 = vld [vmem:[#allocation13 + $0x38] sm:$0xf]
        %v3274 = vld [vmem:[#allocation13 + $0x3c] sm:$0xf]
        %v3275 = vld [vmem:[#allocation13 + $0x40] sm:$0xf]
        %v3276 = vld [vmem:[#allocation13 + $0x44] sm:$0xf]
        %v3277 = vld [vmem:[#allocation13 + $0x48] sm:$0xf]
        %v3278 = vld [vmem:[#allocation13 + $0x4c] sm:$0xf]
        %v3279 = vld [vmem:[#allocation13 + $0x50] sm:$0xf]
        %v3280 = vld [vmem:[#allocation13 + $0x54] sm:$0xf]
        %v3281 = vld [vmem:[#allocation13 + $0x58] sm:$0xf]
        %v3282 = vld [vmem:[#allocation13 + $0x5c] sm:$0xf]
        %v3283 = vld [vmem:[#allocation13 + $0x60] sm:$0xf]
        %v3284 = vld [vmem:[#allocation13 + $0x64] sm:$0xf]
        %v3285 = vld [vmem:[#allocation13 + $0x68] sm:$0xf]
        %v3286 = vld [vmem:[#allocation13 + $0x6c] sm:$0xf]
        %v3287 = vld [vmem:[#allocation13 + $0x70] sm:$0xf]
        %v3288 = vld [vmem:[#allocation13 + $0x74] sm:$0xf]
        %v3289 = vld [vmem:[#allocation13 + $0x78] sm:$0xf]
        %v3290 = vld [vmem:[#allocation13 + $0x7c] sm:$0xf]
        %v3291 = vld [vmem:[%s8] sm:$0x1]
        %v3293 = vlaneseq
        %v3294 = vshrl.u32 %v3293, 7
        %v3295 = vsub.s32 0, %v3294
        %v3296 = vrot.slane %v3291, %v3295
        %v3330 = vunpack.c.l.b16 %v3259
        %v3331 = vunpack.c.l.b16 %v3260
        %v3332 = vunpack.c.l.b16 %v3261
        %v3333 = vunpack.c.l.b16 %v3262
        %v3334 = vunpack.c.l.b16 %v3263
        %v3335 = vunpack.c.l.b16 %v3264
        %v3336 = vunpack.c.l.b16 %v3265
        %v3337 = vunpack.c.l.b16 %v3266
        %v3338 = vunpack.c.l.b16 %v3267
        %v3339 = vunpack.c.l.b16 %v3268
        %v3340 = vunpack.c.l.b16 %v3269
        %v3341 = vunpack.c.l.b16 %v3270
        %v3342 = vunpack.c.l.b16 %v3271
        %v3343 = vunpack.c.l.b16 %v3272
        %v3344 = vunpack.c.l.b16 %v3273
        %v3345 = vunpack.c.l.b16 %v3274
        %v3346 = vunpack.c.l.b16 %v3275
        %v3347 = vunpack.c.l.b16 %v3276
        %v3348 = vunpack.c.l.b16 %v3277
        %v3349 = vunpack.c.l.b16 %v3278
        %v3350 = vunpack.c.l.b16 %v3279
        %v3351 = vunpack.c.l.b16 %v3280
        %v3352 = vunpack.c.l.b16 %v3281
        %v3353 = vunpack.c.l.b16 %v3282
        %v3354 = vunpack.c.l.b16 %v3283
        %v3355 = vunpack.c.l.b16 %v3284
        %v3356 = vunpack.c.l.b16 %v3285
        %v3357 = vunpack.c.l.b16 %v3286
        %v3358 = vunpack.c.l.b16 %v3287
        %v3359 = vunpack.c.l.b16 %v3288
        %v3360 = vunpack.c.l.b16 %v3289
        %v3361 = vunpack.c.l.b16 %v3290
        %v3362 = vpack.c.b16 %v3331, %v3330
        %v3363 = vpack.c.b16 %v3333, %v3332
        %v3364 = vpack.c.b16 %v3335, %v3334
        %v3365 = vpack.c.b16 %v3337, %v3336
        %v3366 = vpack.c.b16 %v3339, %v3338
        %v3367 = vpack.c.b16 %v3341, %v3340
        %v3368 = vpack.c.b16 %v3343, %v3342
        %v3369 = vpack.c.b16 %v3345, %v3344
        %v3370 = vpack.c.b16 %v3347, %v3346
        %v3371 = vpack.c.b16 %v3349, %v3348
        %v3372 = vpack.c.b16 %v3351, %v3350
        %v3373 = vpack.c.b16 %v3353, %v3352
        %v3374 = vpack.c.b16 %v3355, %v3354
        %v3375 = vpack.c.b16 %v3357, %v3356
        %v3376 = vpack.c.b16 %v3359, %v3358
        %v3377 = vpack.c.b16 %v3361, %v3360
        %3394 = vmatprep.subr.bf16.mxu0 0
        %3395 = vmatpush1.bf16.msra.mxu0 %v3362
        %3396 = vmatprep.subr.bf16.mxu0 0
        %3397 = vmatpush1.bf16.msra.mxu0 %v3363
        %3398 = vmatprep.subr.bf16.mxu0 0
        %3399 = vmatpush1.bf16.msra.mxu0 %v3364
        %3400 = vmatprep.subr.bf16.mxu0 0
        %3401 = vmatpush1.bf16.msra.mxu0 %v3365
        %3402 = vmatprep.subr.bf16.mxu0 0
        %3403 = vmatpush1.bf16.msra.mxu0 %v3366
        %3404 = vmatprep.subr.bf16.mxu0 0
        %3405 = vmatpush1.bf16.msra.mxu0 %v3367
        %3406 = vmatprep.subr.bf16.mxu0 0
        %3407 = vmatpush1.bf16.msra.mxu0 %v3368
        %3408 = vmatprep.subr.bf16.mxu0 0
        %3409 = vmatpush1.bf16.msra.mxu0 %v3369
        %3410 = vmatprep.subr.bf16.mxu0 0
        %3411 = vmatpush1.bf16.msra.mxu0 %v3370
        %3412 = vmatprep.subr.bf16.mxu0 0
        %3413 = vmatpush1.bf16.msra.mxu0 %v3371
        %3414 = vmatprep.subr.bf16.mxu0 0
        %3415 = vmatpush1.bf16.msra.mxu0 %v3372
        %3416 = vmatprep.subr.bf16.mxu0 0
        %3417 = vmatpush1.bf16.msra.mxu0 %v3373
        %3418 = vmatprep.subr.bf16.mxu0 0
        %3419 = vmatpush1.bf16.msra.mxu0 %v3374
        %3420 = vmatprep.subr.bf16.mxu0 0
        %3421 = vmatpush1.bf16.msra.mxu0 %v3375
        %3422 = vmatprep.subr.bf16.mxu0 0
        %3423 = vmatpush1.bf16.msra.mxu0 %v3376
        %3424 = vmatprep.subr.bf16.mxu0 0
        %3425 = vmatpush1.bf16.msra.mxu0 %v3377
        %3426 = vmatprep.mubr.bf16.mxu0 %v3228
        %3427 = vmatmul.mubr.bf16.gmra.mrb[0].mxu0 %v3227
        %v3428 = vpop.f32.mrb[0].mxu0
        %v3429 = vadd.f32 %v3296, %v3428
        %v3430 = vpop.f32.mrb[0].mxu0
        %v3431 = vpop.f32.mrb[0].mxu0
        %v3432 = vadd.f32 %v3296, %v3431
        %v3433 = vpop.f32.mrb[0].mxu0
        %3434 = vmatprep.mubr.bf16.mxu0 %v3230
        %3435 = vmatmul.mubr.bf16.gmra.mrb[0].mxu0 %v3229
        %v3436 = vpop.f32.mrb[0].mxu0
        %v3437 = vadd.f32 %v3296, %v3436
        %v3438 = vpop.f32.mrb[0].mxu0
        %v3439 = vpop.f32.mrb[0].mxu0
        %v3440 = vadd.f32 %v3296, %v3439
        %v3441 = vpop.f32.mrb[0].mxu0
        %3442 = vmatprep.mubr.bf16.mxu0 %v3232
        %3443 = vmatmul.mubr.bf16.gmra.mrb[0].mxu0 %v3231
        %v3444 = vpop.f32.mrb[0].mxu0
        %v3445 = vadd.f32 %v3296, %v3444
        %v3446 = vpop.f32.mrb[0].mxu0
        %v3447 = vpop.f32.mrb[0].mxu0
        %v3448 = vadd.f32 %v3296, %v3447
        %v3449 = vpop.f32.mrb[0].mxu0
        %3450 = vmatprep.mubr.bf16.mxu0 %v3234
        %3451 = vmatmul.mubr.bf16.gmra.mrb[0].mxu0 %v3233
        %v3452 = vpop.f32.mrb[0].mxu0
        %v3453 = vadd.f32 %v3296, %v3452
        %v3454 = vpop.f32.mrb[0].mxu0
        %v3455 = vpop.f32.mrb[0].mxu0
        %v3456 = vadd.f32 %v3296, %v3455
        %v3457 = vpop.f32.mrb[0].mxu0
        %3458 = vmatprep.mubr.bf16.mxu0 %v3236
        %3459 = vmatmul.mubr.bf16.gmra.mrb[0].mxu0 %v3235
        %v3460 = vpop.f32.mrb[0].mxu0
        %v3461 = vadd.f32 %v3296, %v3460
        %v3462 = vpop.f32.mrb[0].mxu0
        %v3463 = vpop.f32.mrb[0].mxu0
        %v3464 = vadd.f32 %v3296, %v3463
        %v3465 = vpop.f32.mrb[0].mxu0
        %3466 = vmatprep.mubr.bf16.mxu0 %v3238
        %3467 = vmatmul.mubr.bf16.gmra.mrb[0].mxu0 %v3237
        %v3468 = vpop.f32.mrb[0].mxu0
        %v3469 = vadd.f32 %v3296, %v3468
        %v3470 = vpop.f32.mrb[0].mxu0
        %v3471 = vpop.f32.mrb[0].mxu0
        %v3472 = vadd.f32 %v3296, %v3471
        %v3473 = vpop.f32.mrb[0].mxu0
        %3474 = vmatprep.mubr.bf16.mxu0 %v3240
        %3475 = vmatmul.mubr.bf16.gmra.mrb[0].mxu0 %v3239
        %v3476 = vpop.f32.mrb[0].mxu0
        %v3477 = vadd.f32 %v3296, %v3476
        %v3478 = vpop.f32.mrb[0].mxu0
        %v3479 = vpop.f32.mrb[0].mxu0
        %v3480 = vadd.f32 %v3296, %v3479
        %v3481 = vpop.f32.mrb[0].mxu0
        %3482 = vmatprep.mubr.bf16.mxu0 %v3242
        %3483 = vmatmul.mubr.bf16.gmra.mrb[0].mxu0 %v3241
        %v3484 = vpop.f32.mrb[0].mxu0
        %v3485 = vadd.f32 %v3296, %v3484
        %v3486 = vpop.f32.mrb[0].mxu0
        %v3487 = vpop.f32.mrb[0].mxu0
        %v3488 = vadd.f32 %v3296, %v3487
        %v3489 = vpop.f32.mrb[0].mxu0
        %3490 = vmatprep.mubr.bf16.mxu0 %v3244
        %3491 = vmatmul.mubr.bf16.gmra.mrb[0].mxu0 %v3243
        %v3492 = vpop.f32.mrb[0].mxu0
        %v3493 = vadd.f32 %v3296, %v3492
        %v3494 = vpop.f32.mrb[0].mxu0
        %v3495 = vpop.f32.mrb[0].mxu0
        %v3496 = vadd.f32 %v3296, %v3495
        %v3497 = vpop.f32.mrb[0].mxu0
        %3498 = vmatprep.mubr.bf16.mxu0 %v3246
        %3499 = vmatmul.mubr.bf16.gmra.mrb[0].mxu0 %v3245
        %v3500 = vpop.f32.mrb[0].mxu0
        %v3501 = vadd.f32 %v3296, %v3500
        %v3502 = vpop.f32.mrb[0].mxu0
        %v3503 = vpop.f32.mrb[0].mxu0
        %v3504 = vadd.f32 %v3296, %v3503
        %v3505 = vpop.f32.mrb[0].mxu0
        %3506 = vmatprep.mubr.bf16.mxu0 %v3248
        %3507 = vmatmul.mubr.bf16.gmra.mrb[0].mxu0 %v3247
        %v3508 = vpop.f32.mrb[0].mxu0
        %v3509 = vadd.f32 %v3296, %v3508
        %v3510 = vpop.f32.mrb[0].mxu0
        %v3511 = vpop.f32.mrb[0].mxu0
        %v3512 = vadd.f32 %v3296, %v3511
        %v3513 = vpop.f32.mrb[0].mxu0
        %3514 = vmatprep.mubr.bf16.mxu0 %v3250
        %3515 = vmatmul.mubr.bf16.gmra.mrb[0].mxu0 %v3249
        %v3516 = vpop.f32.mrb[0].mxu0
        %v3517 = vadd.f32 %v3296, %v3516
        %v3518 = vpop.f32.mrb[0].mxu0
        %v3519 = vpop.f32.mrb[0].mxu0
        %v3520 = vadd.f32 %v3296, %v3519
        %v3521 = vpop.f32.mrb[0].mxu0
        %3522 = vmatprep.mubr.bf16.mxu0 %v3252
        %3523 = vmatmul.mubr.bf16.gmra.mrb[0].mxu0 %v3251
        %v3524 = vpop.f32.mrb[0].mxu0
        %v3525 = vadd.f32 %v3296, %v3524
        %v3526 = vpop.f32.mrb[0].mxu0
        %v3527 = vpop.f32.mrb[0].mxu0
        %v3528 = vadd.f32 %v3296, %v3527
        %v3529 = vpop.f32.mrb[0].mxu0
        %3530 = vmatprep.mubr.bf16.mxu0 %v3254
        %3531 = vmatmul.mubr.bf16.gmra.mrb[0].mxu0 %v3253
        %v3532 = vpop.f32.mrb[0].mxu0
        %v3533 = vadd.f32 %v3296, %v3532
        %v3534 = vpop.f32.mrb[0].mxu0
        %v3535 = vpop.f32.mrb[0].mxu0
        %v3536 = vadd.f32 %v3296, %v3535
        %v3537 = vpop.f32.mrb[0].mxu0
        %3538 = vmatprep.mubr.bf16.mxu0 %v3256
        %3539 = vmatmul.mubr.bf16.gmra.mrb[0].mxu0 %v3255
        %v3540 = vpop.f32.mrb[0].mxu0
        %v3541 = vadd.f32 %v3296, %v3540
        %v3542 = vpop.f32.mrb[0].mxu0
        %v3543 = vpop.f32.mrb[0].mxu0
        %v3544 = vadd.f32 %v3296, %v3543
        %v3545 = vpop.f32.mrb[0].mxu0
        %3546 = vmatprep.mubr.bf16.mxu0 %v3258
        %3547 = vmatmul.mubr.bf16.gmra.mrb[0].mxu0 %v3257
        %v3548 = vpop.f32.mrb[0].mxu0
        %v3549 = vadd.f32 %v3296, %v3548
        %v3550 = vpop.f32.mrb[0].mxu0
        %v3551 = vpop.f32.mrb[0].mxu0
        %v3552 = vadd.f32 %v3296, %v3551
        %v3553 = vpop.f32.mrb[0].mxu0
        %3554 = vdwg.mxu0
        %3555 = vst [vmem:[%s521] sm:$0xff] %v3429
        %3556 = vst [vmem:[%s521 + $0x8] sm:$0xff] %v3432
        %3557 = vst [vmem:[%s521 + $0x10] sm:$0xff] %v3437
        %3558 = vst [vmem:[%s521 + $0x18] sm:$0xff] %v3440
        %3559 = vst [vmem:[%s521 + $0x20] sm:$0xff] %v3445
        %3560 = vst [vmem:[%s521 + $0x28] sm:$0xff] %v3448
        %3561 = vst [vmem:[%s521 + $0x30] sm:$0xff] %v3453
        %3562 = vst [vmem:[%s521 + $0x38] sm:$0xff] %v3456
        %3563 = vst [vmem:[%s521 + $0x40] sm:$0xff] %v3461
        %3564 = vst [vmem:[%s521 + $0x48] sm:$0xff] %v3464
        %3565 = vst [vmem:[%s521 + $0x50] sm:$0xff] %v3469
        %3566 = vst [vmem:[%s521 + $0x58] sm:$0xff] %v3472
        %3567 = vst [vmem:[%s521 + $0x60] sm:$0xff] %v3477
        %3568 = vst [vmem:[%s521 + $0x68] sm:$0xff] %v3480
        %3569 = vst [vmem:[%s521 + $0x70] sm:$0xff] %v3485
        %3570 = vst [vmem:[%s521 + $0x78] sm:$0xff] %v3488
        %3571 = vst [vmem:[%s521 + $0x80] sm:$0xff] %v3493
        %3572 = vst [vmem:[%s521 + $0x88] sm:$0xff] %v3496
        %3573 = vst [vmem:[%s521 + $0x90] sm:$0xff] %v3501
        %3574 = vst [vmem:[%s521 + $0x98] sm:$0xff] %v3504
        %3575 = vst [vmem:[%s521 + $0xa0] sm:$0xff] %v3509
        %3576 = vst [vmem:[%s521 + $0xa8] sm:$0xff] %v3512
        %3577 = vst [vmem:[%s521 + $0xb0] sm:$0xff] %v3517
        %3578 = vst [vmem:[%s521 + $0xb8] sm:$0xff] %v3520
        %3579 = vst [vmem:[%s521 + $0xc0] sm:$0xff] %v3525
        %3580 = vst [vmem:[%s521 + $0xc8] sm:$0xff] %v3528
        %3581 = vst [vmem:[%s521 + $0xd0] sm:$0xff] %v3533
        %3582 = vst [vmem:[%s521 + $0xd8] sm:$0xff] %v3536
        %3583 = vst [vmem:[%s521 + $0xe0] sm:$0xff] %v3541
        %3584 = vst [vmem:[%s521 + $0xe8] sm:$0xff] %v3544
        %3585 = vst [vmem:[%s521 + $0xf0] sm:$0xff] %v3549
        %3586 = vst [vmem:[%s521 + $0xf8] sm:$0xff] %v3552
        %s3587 = sand.u32 %s279, 1
        %s3588 = scalar_lea.sflag [#allocation6], %s3587
        %s3589 = sand.u32 %s279, 1
        %s3590 = smul.addr %s3589, 256
        %s3591 = scalar_lea.vmem [#allocation15], %s3590
        // Predicated region
        $region96: #{tpu_custom_call.1} parent=55 // pred_check
          %p3592 = pneg %p289
        $region97: #{tpu_custom_call.1} parent=55 // pred_check_branch
          %3594 = sbr.rel (%p3592) target = $region99
        $region98: #{tpu_custom_call.1} parent=55 // pred_region
          %s3595 = smul.u32 32, %s36
          %s3597 = ssub.s32 4096, 4096
          %3598 = vsyncadd %s3588, %s3597
          %s3599 = smul.addr %s35, 64
          %s3600 = sadd.s32 %s3595, %s3599
          %s3601 = smul.addr %s3600, 128
          %s3602 = scalar_lea.hbm %s9, %s3601
          %s3603 = sshll.u32 %s3591, 4
          %s3604 = int_to_ptr.vmem [resolvable:$true] %s3603
          %3609 = dma.vmem_to_hbm [thread:$0]  %s3604, 4096, %s3602, %s3588, 128, 128, 8
        $region99: #{tpu_custom_call.1} parent=55 // pred_fallthru
          _
      $region56: #{tpu_custom_call.1} parent=5 // pred_fallthru
        _
      %p3610 = scmp.le.s32.totalorder 2, %s26
      // Predicated region
      $region100: #{tpu_custom_call.1} parent=5 // pred_check
        %p3611 = pneg %p3610
      $region101: #{tpu_custom_call.1} parent=5 // pred_check_branch
        %3613 = sbr.rel (%p3611) target = $region103
      $region102: #{tpu_custom_call.1} parent=5 // pred_region
        %s3614 = ssub.s32 %s26, 2
        // Predicated region
        $region104: #{tpu_custom_call.1} parent=102 // pred_check
          %p3615 = pneg %p295
        $region105: #{tpu_custom_call.1} parent=102 // pred_check_branch
          %3617 = sbr.rel (%p3615) target = $region107
        $region106: #{tpu_custom_call.1} parent=102 // pred_region
          %s3618 = sand.u32 %s280, 1
          %s3619 = scalar_lea.sflag [#allocation6], %s3618
          %s3620 = sand.u32 %s280, 1
          %s3621 = smul.addr %s3620, 256
          %s3622 = scalar_lea.vmem [#allocation15], %s3621
          %3623 = dma.done %s3619, 4096
        $region107: #{tpu_custom_call.1} parent=102 // pred_fallthru
          _
      $region103: #{tpu_custom_call.1} parent=5 // pred_fallthru
        _
    $region6: #{tpu_custom_call.1} parent=1 // loop_footer
      %s30 = sadd.s32 1, %s26
    $region7: #{tpu_custom_call.1} parent=1 // loop_footer_branch
      %25 = sbr.rel target = $region3
    $region8: #{tpu_custom_call.1} parent=1 // loop_exit
      _
    %3624 = vsyncpa [#allocation5], 1
    %s3625 = scalar_lea.sflag [#allocation5], 1
    %3626 = vsyncpa %s3625, 1
    %3627 = vsyncpa [#allocation8], 1
    %s3628 = scalar_lea.sflag [#allocation8], 1
    %3629 = vsyncpa %s3628, 1
    %3630 = vsyncpa [#allocation11], 1
    %3631 = vsyncpa [#allocation14], 1
    %3632 = vsyncpa [#allocation6], 1
    %s3633 = scalar_lea.sflag [#allocation6], 1
    %3634 = vsyncpa %s3633, 1

</llo_original>
